<compile_context>
chip_gen: v5e
topology: v5e:2x2
jax: 0.10.0
libtpu: 0.0.40
codegen_flags: <defaults>
</compile_context>

<pallas_src>
import functools

import jax
import jax.numpy as jnp
from jax.experimental import pallas as pl
from jax.experimental.pallas import tpu as pltpu

BN_EPS = 1e-5
LANE = 128
SUB = 8


def _round_up(x, m):
    return (x + m - 1) // m * m


# ---------------------------------------------------------------------------
# Fused kernel: 4 x (conv -> BN[-> ReLU]) entirely in VMEM.
#   Activations: (C, Mq) f32, Mq = N*(H+2)*(W+2) rounded up to 128 (lanes).
#   3x3 conv weights: (Cout, 9*Cin_pad) f32 ; 1x1 conv weights: (Cout, Cin).
#   BN params: (C, 1) f32.
#   mask_row: (1, Mq) f32 / mask_col: (Mq, 1) f32, 1.0 at valid interior cols.
# ---------------------------------------------------------------------------
def _mynet_kernel(x_ref, mrow_ref, mcol_ref, w1_ref, w2_ref, w3_ref, w4_ref,
                  g1_ref, b1_ref, g2_ref, b2_ref, g3_ref, b3_ref,
                  g4_ref, b4_ref, o_ref, *, shifts, ctx, inv_m):
    mq = x_ref.shape[1]
    mask_row = mrow_ref[...]                          # (1, Mq)
    mask_col = mcol_ref[...]                          # (Mq, 1)

    def conv3x3(x, w_ref):
        # x: (Cin, Mq) f32, zero at grid-padding and lane-pad columns.
        cin = x.shape[0]
        zeros = jnp.zeros((cin, ctx), jnp.float32)
        xbig = jnp.concatenate([zeros, x, zeros], axis=1)   # (Cin, Mq + 2*ctx)
        # tap t: shifted[:, q] = x_grid[:, q + s_t]  (all static slices)
        taps = [xbig[:, ctx + s: ctx + s + mq] for s in shifts]
        stacked = jnp.concatenate(taps, axis=0)             # (9*Cin, Mq)
        # single stacked-K matmul on the MXU
        return jnp.dot(w_ref[...], stacked, preferred_element_type=jnp.float32)

    def conv1x1(x, w_ref):
        return jnp.dot(w_ref[...], x, preferred_element_type=jnp.float32)

    def bn(y, g_ref, b_ref, relu):
        # Exact training-mode batch stats over the M = N*H*W valid columns.
        # Masked per-channel sums are matmuls with the (Mq,1) mask column,
        # i.e. they run on the (otherwise idle) MXU.
        mean = jnp.dot(y, mask_col, preferred_element_type=jnp.float32) * inv_m
        d = y - mean                                     # reused for normalize
        var = jnp.dot(d * d, mask_col, preferred_element_type=jnp.float32) * inv_m
        out = d * jax.lax.rsqrt(var + BN_EPS) * g_ref[...] + b_ref[...]
        return jnp.maximum(out, 0.0) if relu else out

    # layer 1: x_ref already has exact zero padding -> no mask multiply needed
    y = bn(conv3x3(x_ref[...], w1_ref), g1_ref, b1_ref, relu=True)
    y = bn(conv1x1(y, w2_ref), g2_ref, b2_ref, relu=True)
    # layer 3: re-impose zero-padding semantics (padding cols hold garbage)
    y = bn(conv3x3(y * mask_row, w3_ref), g3_ref, b3_ref, relu=True)
    y = bn(conv1x1(y, w4_ref), g4_ref, b4_ref, relu=False)
    o_ref[...] = y.astype(o_ref.dtype)


# ---------------------------------------------------------------------------
# Wrapper: NCHW in -> NCHW out (like the PyTorch module).
# ---------------------------------------------------------------------------
def mynet_forward(x_nchw, params):
    n, cin, h, w = x_nchw.shape
    hp, wp = h + 2, w + 2
    m_raw = n * hp * wp
    mq = _round_up(m_raw, LANE)
    cin_p = _round_up(cin, SUB)
    m_valid = n * h * w
    mod2 = params["conv4_w"].shape[1]

    # tap (kh,kw) of the 3x3 kernel -> column shift on the flattened grid
    shifts = tuple((dh - 1) * wp + (dw - 1) for dh in range(3) for dw in range(3))
    ctx = wp + 1                               # zero context >= max |shift|
    assert ctx >= max(abs(s) for s in shifts)  # ties shifts to padding geometry

    # --- kernel-format weights: (Cout, 9*Cin_pad) / (Cout, Cin), f32 --------
    def stacked_weights(w_hwio, ci_pad):
        kh, kw, ci, co = w_hwio.shape
        wt = jnp.transpose(w_hwio, (3, 0, 1, 2))            # (co, kh, kw, ci)
        wt = jnp.pad(wt, ((0, 0), (0, 0), (0, 0), (0, ci_pad - ci)))
        return wt.reshape(co, kh * kw * ci_pad).astype(jnp.float32)

    mod2_in = params["conv3_w"].shape[2]                     # = mod_dim2
    w1 = stacked_weights(params["conv1_w"], cin_p)
    w2 = params["conv2_w"].T.astype(jnp.float32)             # (mod2, mod1)
    w3 = stacked_weights(params["conv3_w"], _round_up(mod2_in, SUB))
    w4 = params["conv4_w"].T.astype(jnp.float32)             # (mod2, mod1)

    # --- activations: channels-first, flattened zero-padded grid, lane-padded
    xq = jnp.pad(x_nchw, ((0, 0), (0, cin_p - cin), (1, 1), (1, 1)))
    xq = jnp.transpose(xq, (1, 0, 2, 3)).reshape(cin_p, m_raw)
    xq = jnp.pad(xq, ((0, 0), (0, mq - m_raw))).astype(jnp.float32)

    q = jnp.arange(m_raw, dtype=jnp.int32)
    gi = (q % (hp * wp)) // wp
    gj = q % wp
    valid = ((gi >= 1) & (gi <= h) & (gj >= 1) & (gj <= w)).astype(jnp.float32)
    mask_row = jnp.pad(valid, (0, mq - m_raw)).reshape(1, mq)
    mask_col = mask_row.reshape(mq, 1)

    bn_args = []
    for layer in ("1", "2", "3", "4"):
        bn_args += [params[f"bn{layer}_g"].reshape(-1, 1).astype(jnp.float32),
                    params[f"bn{layer}_b"].reshape(-1, 1).astype(jnp.float32)]
    args = [xq, mask_row, mask_col, w1, w2, w3, w4] + bn_args

    kernel = functools.partial(_mynet_kernel, shifts=shifts, ctx=ctx,
                               inv_m=1.0 / m_valid)
    out2d = pl.pallas_call(
        kernel,
        out_shape=jax.ShapeDtypeStruct((mod2, mq), jnp.float32),
        in_specs=[pl.BlockSpec(memory_space=pltpu.MemorySpace.VMEM)] * len(args),
        out_specs=pl.BlockSpec(memory_space=pltpu.MemorySpace.VMEM),
    )(*args)

    # drop padding columns, back to NCHW
    out = out2d[:, :m_raw].reshape(mod2, n, hp, wp)[:, :, 1:h + 1, 1:w + 1]
    return jnp.transpose(out, (1, 0, 2, 3))


# ---------------------------------------------------------------------------
# Pure-JAX reference (f32 end-to-end, two-pass BN) for the correctness assert.
# ---------------------------------------------------------------------------
def _im2col_3x3(x_nhwc):
    n, h, w, c = x_nhwc.shape
    xp = jnp.pad(x_nhwc, ((0, 0), (1, 1), (1, 1), (0, 0)))
    cols = [xp[:, dh:dh + h, dw:dw + w, :] for dh in range(3) for dw in range(3)]
    return jnp.concatenate(cols, axis=-1).reshape(n * h * w, 9 * c)


def _ref_bn(y, g, b, relu):
    mean = y.mean(0, keepdims=True)
    var = ((y - mean) ** 2).mean(0, keepdims=True)
    out = (y - mean) * jax.lax.rsqrt(var + BN_EPS) * g + b
    return jnp.maximum(out, 0.0) if relu else out


def mynet_forward_ref(x_nchw, params):
    n, cin, h, w = x_nchw.shape
    x = jnp.transpose(x_nchw, (0, 2, 3, 1))          # NHWC

    def conv3x3(x_nhwc, w_hwio):
        co = w_hwio.shape[3]
        a = _im2col_3x3(x_nhwc)
        return jnp.dot(a, w_hwio.reshape(-1, co), preferred_element_type=jnp.float32)

    def conv1x1(y2d, w_io):
        return jnp.dot(y2d, w_io, preferred_element_type=jnp.float32)

    vec = lambda k: params[k].reshape(1, -1)

    y = _ref_bn(conv3x3(x, params["conv1_w"]), vec("bn1_g"), vec("bn1_b"), True)
    y = _ref_bn(conv1x1(y, params["conv2_w"]), vec("bn2_g"), vec("bn2_b"), True)
    y = _ref_bn(conv3x3(y.reshape(n, h, w, -1), params["conv3_w"]),
                vec("bn3_g"), vec("bn3_b"), True)
    y = _ref_bn(conv1x1(y, params["conv4_w"]), vec("bn4_g"), vec("bn4_b"), False)
    return jnp.transpose(y.reshape(n, h, w, -1), (0, 3, 1, 2))


# ---------------------------------------------------------------------------
# Deterministic synthetic parameters (no checkpoint loading).
# ---------------------------------------------------------------------------
def make_params(key, inp_dim, mod_dim1, mod_dim2):
    ks = jax.random.split(key, 12)
    f32 = jnp.float32

    def bn(kg, kb, c):
        return (1.0 + 0.1 * jax.random.normal(kg, (c,), f32),
                0.1 * jax.random.normal(kb, (c,), f32))

    g1, b1 = bn(ks[4], ks[5], mod_dim1)
    g2, b2 = bn(ks[6], ks[7], mod_dim2)
    g3, b3 = bn(ks[8], ks[9], mod_dim1)
    g4, b4 = bn(ks[10], ks[11], mod_dim2)
    return dict(
        conv1_w=0.1 * jax.random.normal(ks[0], (3, 3, inp_dim, mod_dim1), f32),
        conv2_w=0.1 * jax.random.normal(ks[1], (mod_dim1, mod_dim2), f32),
        conv3_w=0.1 * jax.random.normal(ks[2], (3, 3, mod_dim2, mod_dim1), f32),
        conv4_w=0.1 * jax.random.normal(ks[3], (mod_dim1, mod_dim2), f32),
        # NOTE: conv biases omitted on purpose — training-mode BatchNorm
        # subtracts the batch mean, which cancels any per-channel bias exactly.
        bn1_g=g1, bn1_b=b1, bn2_g=g2, bn2_b=b2,
        bn3_g=g3, bn3_b=b3, bn4_g=g4, bn4_b=b4,
    )


if __name__ == "__main__":
    # Small shapes consistent with MyNet(inp_dim=4, mod_dim1=32, mod_dim2=16)
    N, INP, H, W = 2, 4, 16, 16
    MOD1, MOD2 = 32, 16

    key = jax.random.PRNGKey(0)
    k_x, k_p = jax.random.split(key)
    x = jax.random.normal(k_x, (N, INP, H, W), jnp.float32)   # NCHW like PyTorch
    params = make_params(k_p, INP, MOD1, MOD2)

    fwd = jax.jit(mynet_forward)
    out = jax.block_until_ready(fwd(x, params))
    assert out.shape == (N, MOD2, H, W), out.shape

    ref = jax.block_until_ready(mynet_forward_ref(x, params))
    max_err = float(jnp.max(jnp.abs(out - ref)))
    assert jnp.allclose(out, ref, rtol=1e-2, atol=1e-2), max_err

    print("KERNEL_OK")
</pallas_src>

<mosaic_0001>
module attributes {stable_mosaic.version = 11 : i64} {
  func.func @_mynet_kernel(%arg0: memref<8x768xf32, #tpu.memory_space<vmem>>, %arg1: memref<1x768xf32, #tpu.memory_space<vmem>>, %arg2: memref<768x1xf32, #tpu.memory_space<vmem>>, %arg3: memref<32x72xf32, #tpu.memory_space<vmem>>, %arg4: memref<16x32xf32, #tpu.memory_space<vmem>>, %arg5: memref<32x144xf32, #tpu.memory_space<vmem>>, %arg6: memref<16x32xf32, #tpu.memory_space<vmem>>, %arg7: memref<32x1xf32, #tpu.memory_space<vmem>>, %arg8: memref<32x1xf32, #tpu.memory_space<vmem>>, %arg9: memref<16x1xf32, #tpu.memory_space<vmem>>, %arg10: memref<16x1xf32, #tpu.memory_space<vmem>>, %arg11: memref<32x1xf32, #tpu.memory_space<vmem>>, %arg12: memref<32x1xf32, #tpu.memory_space<vmem>>, %arg13: memref<16x1xf32, #tpu.memory_space<vmem>>, %arg14: memref<16x1xf32, #tpu.memory_space<vmem>>, %arg15: memref<16x768xf32, #tpu.memory_space<vmem>>) attributes {dimension_semantics = [], scalar_prefetch = 0 : i64, scratch_operands = 0 : i64, tpu.core_type = #tpu.core_type<tc>} {
    %c0 = arith.constant 0 : index
    %c0_0 = arith.constant 0 : index
    %0 = vector.load %arg1[%c0, %c0_0] : memref<1x768xf32, #tpu.memory_space<vmem>>, vector<1x768xf32>
    %c0_1 = arith.constant 0 : index
    %c0_2 = arith.constant 0 : index
    %1 = vector.load %arg2[%c0_1, %c0_2] : memref<768x1xf32, #tpu.memory_space<vmem>>, vector<768x1xf32>
    %c0_3 = arith.constant 0 : index
    %c0_4 = arith.constant 0 : index
    %2 = vector.load %arg0[%c0_3, %c0_4] : memref<8x768xf32, #tpu.memory_space<vmem>>, vector<8x768xf32>
    %cst = arith.constant 0.000000e+00 : f32
    %3 = vector.broadcast %cst : f32 to vector<8x19xf32>
    %4 = tpu.concatenate %3, %2, %3 in 1 : vector<8x19xf32>, vector<8x768xf32>, vector<8x19xf32> -> vector<8x806xf32>
    %5 = vector.extract_strided_slice %4 {offsets = [0, 0], sizes = [8, 768], strides = [1, 1]} : vector<8x806xf32> to vector<8x768xf32>
    %6 = vector.extract_strided_slice %4 {offsets = [0, 1], sizes = [8, 768], strides = [1, 1]} : vector<8x806xf32> to vector<8x768xf32>
    %7 = vector.extract_strided_slice %4 {offsets = [0, 2], sizes = [8, 768], strides = [1, 1]} : vector<8x806xf32> to vector<8x768xf32>
    %8 = vector.extract_strided_slice %4 {offsets = [0, 18], sizes = [8, 768], strides = [1, 1]} : vector<8x806xf32> to vector<8x768xf32>
    %9 = vector.extract_strided_slice %4 {offsets = [0, 19], sizes = [8, 768], strides = [1, 1]} : vector<8x806xf32> to vector<8x768xf32>
    %10 = vector.extract_strided_slice %4 {offsets = [0, 20], sizes = [8, 768], strides = [1, 1]} : vector<8x806xf32> to vector<8x768xf32>
    %11 = vector.extract_strided_slice %4 {offsets = [0, 36], sizes = [8, 768], strides = [1, 1]} : vector<8x806xf32> to vector<8x768xf32>
    %12 = vector.extract_strided_slice %4 {offsets = [0, 37], sizes = [8, 768], strides = [1, 1]} : vector<8x806xf32> to vector<8x768xf32>
    %13 = vector.extract_strided_slice %4 {offsets = [0, 38], sizes = [8, 768], strides = [1, 1]} : vector<8x806xf32> to vector<8x768xf32>
    %14 = tpu.concatenate %5, %6, %7, %8, %9, %10, %11, %12, %13 in 0 : vector<8x768xf32>, vector<8x768xf32>, vector<8x768xf32>, vector<8x768xf32>, vector<8x768xf32>, vector<8x768xf32>, vector<8x768xf32>, vector<8x768xf32>, vector<8x768xf32> -> vector<72x768xf32>
    %c0_5 = arith.constant 0 : index
    %c0_6 = arith.constant 0 : index
    %15 = vector.load %arg3[%c0_5, %c0_6] : memref<32x72xf32, #tpu.memory_space<vmem>>, vector<32x72xf32>
    %cst_7 = arith.constant dense<0.000000e+00> : vector<32x768xf32>
    %16 = tpu.matmul %15, %14, %cst_7 {dimension_numbers = #tpu.dot_dimension_numbers<[1], [0], [0], [1], [0, 0, 1, 1], [], []>} : vector<32x72xf32>, vector<72x768xf32>, vector<32x768xf32> -> vector<32x768xf32>
    %cst_8 = arith.constant dense<0.000000e+00> : vector<32x1xf32>
    %17 = tpu.matmul %16, %1, %cst_8 {dimension_numbers = #tpu.dot_dimension_numbers<[1], [0], [0], [1], [0, 0, 1, 1], [], []>} : vector<32x768xf32>, vector<768x1xf32>, vector<32x1xf32> -> vector<32x1xf32>
    %cst_9 = arith.constant 0.001953125 : f32
    %18 = vector.broadcast %cst_9 : f32 to vector<32x1xf32>
    %19 = arith.mulf %17, %18 : vector<32x1xf32>
    %20 = vector.broadcast %19 : vector<32x1xf32> to vector<32x768xf32>
    %21 = arith.subf %16, %20 : vector<32x768xf32>
    %22 = arith.mulf %21, %21 : vector<32x768xf32>
    %cst_10 = arith.constant dense<0.000000e+00> : vector<32x1xf32>
    %23 = tpu.matmul %22, %1, %cst_10 {dimension_numbers = #tpu.dot_dimension_numbers<[1], [0], [0], [1], [0, 0, 1, 1], [], []>} : vector<32x768xf32>, vector<768x1xf32>, vector<32x1xf32> -> vector<32x1xf32>
    %cst_11 = arith.constant 0.001953125 : f32
    %24 = vector.broadcast %cst_11 : f32 to vector<32x1xf32>
    %25 = arith.mulf %23, %24 : vector<32x1xf32>
    %cst_12 = arith.constant 9.99999974E-6 : f32
    %26 = vector.broadcast %cst_12 : f32 to vector<32x1xf32>
    %27 = arith.addf %25, %26 : vector<32x1xf32>
    %28 = math.rsqrt %27 : vector<32x1xf32>
    %29 = vector.broadcast %28 : vector<32x1xf32> to vector<32x768xf32>
    %30 = arith.mulf %21, %29 : vector<32x768xf32>
    %c0_13 = arith.constant 0 : index
    %c0_14 = arith.constant 0 : index
    %31 = vector.load %arg7[%c0_13, %c0_14] : memref<32x1xf32, #tpu.memory_space<vmem>>, vector<32x1xf32>
    %32 = vector.broadcast %31 : vector<32x1xf32> to vector<32x768xf32>
    %33 = arith.mulf %30, %32 : vector<32x768xf32>
    %c0_15 = arith.constant 0 : index
    %c0_16 = arith.constant 0 : index
    %34 = vector.load %arg8[%c0_15, %c0_16] : memref<32x1xf32, #tpu.memory_space<vmem>>, vector<32x1xf32>
    %35 = vector.broadcast %34 : vector<32x1xf32> to vector<32x768xf32>
    %36 = arith.addf %33, %35 : vector<32x768xf32>
    %cst_17 = arith.constant 0.000000e+00 : f32
    %37 = vector.broadcast %cst_17 : f32 to vector<32x768xf32>
    %38 = arith.maximumf %36, %37 : vector<32x768xf32>
    %c0_18 = arith.constant 0 : index
    %c0_19 = arith.constant 0 : index
    %39 = vector.load %arg4[%c0_18, %c0_19] : memref<16x32xf32, #tpu.memory_space<vmem>>, vector<16x32xf32>
    %cst_20 = arith.constant dense<0.000000e+00> : vector<16x768xf32>
    %40 = tpu.matmul %39, %38, %cst_20 {dimension_numbers = #tpu.dot_dimension_numbers<[1], [0], [0], [1], [0, 0, 1, 1], [], []>} : vector<16x32xf32>, vector<32x768xf32>, vector<16x768xf32> -> vector<16x768xf32>
    %cst_21 = arith.constant dense<0.000000e+00> : vector<16x1xf32>
    %41 = tpu.matmul %40, %1, %cst_21 {dimension_numbers = #tpu.dot_dimension_numbers<[1], [0], [0], [1], [0, 0, 1, 1], [], []>} : vector<16x768xf32>, vector<768x1xf32>, vector<16x1xf32> -> vector<16x1xf32>
    %cst_22 = arith.constant 0.001953125 : f32
    %42 = vector.broadcast %cst_22 : f32 to vector<16x1xf32>
    %43 = arith.mulf %41, %42 : vector<16x1xf32>
    %44 = vector.broadcast %43 : vector<16x1xf32> to vector<16x768xf32>
    %45 = arith.subf %40, %44 : vector<16x768xf32>
    %46 = arith.mulf %45, %45 : vector<16x768xf32>
    %cst_23 = arith.constant dense<0.000000e+00> : vector<16x1xf32>
    %47 = tpu.matmul %46, %1, %cst_23 {dimension_numbers = #tpu.dot_dimension_numbers<[1], [0], [0], [1], [0, 0, 1, 1], [], []>} : vector<16x768xf32>, vector<768x1xf32>, vector<16x1xf32> -> vector<16x1xf32>
    %cst_24 = arith.constant 0.001953125 : f32
    %48 = vector.broadcast %cst_24 : f32 to vector<16x1xf32>
    %49 = arith.mulf %47, %48 : vector<16x1xf32>
    %cst_25 = arith.constant 9.99999974E-6 : f32
    %50 = vector.broadcast %cst_25 : f32 to vector<16x1xf32>
    %51 = arith.addf %49, %50 : vector<16x1xf32>
    %52 = math.rsqrt %51 : vector<16x1xf32>
    %53 = vector.broadcast %52 : vector<16x1xf32> to vector<16x768xf32>
    %54 = arith.mulf %45, %53 : vector<16x768xf32>
    %c0_26 = arith.constant 0 : index
    %c0_27 = arith.constant 0 : index
    %55 = vector.load %arg9[%c0_26, %c0_27] : memref<16x1xf32, #tpu.memory_space<vmem>>, vector<16x1xf32>
    %56 = vector.broadcast %55 : vector<16x1xf32> to vector<16x768xf32>
    %57 = arith.mulf %54, %56 : vector<16x768xf32>
    %c0_28 = arith.constant 0 : index
    %c0_29 = arith.constant 0 : index
    %58 = vector.load %arg10[%c0_28, %c0_29] : memref<16x1xf32, #tpu.memory_space<vmem>>, vector<16x1xf32>
    %59 = vector.broadcast %58 : vector<16x1xf32> to vector<16x768xf32>
    %60 = arith.addf %57, %59 : vector<16x768xf32>
    %cst_30 = arith.constant 0.000000e+00 : f32
    %61 = vector.broadcast %cst_30 : f32 to vector<16x768xf32>
    %62 = arith.maximumf %60, %61 : vector<16x768xf32>
    %63 = vector.broadcast %0 : vector<1x768xf32> to vector<16x768xf32>
    %64 = arith.mulf %62, %63 : vector<16x768xf32>
    %cst_31 = arith.constant 0.000000e+00 : f32
    %65 = vector.broadcast %cst_31 : f32 to vector<16x19xf32>
    %66 = tpu.concatenate %65, %64, %65 in 1 : vector<16x19xf32>, vector<16x768xf32>, vector<16x19xf32> -> vector<16x806xf32>
    %67 = vector.extract_strided_slice %66 {offsets = [0, 0], sizes = [16, 768], strides = [1, 1]} : vector<16x806xf32> to vector<16x768xf32>
    %68 = vector.extract_strided_slice %66 {offsets = [0, 1], sizes = [16, 768], strides = [1, 1]} : vector<16x806xf32> to vector<16x768xf32>
    %69 = vector.extract_strided_slice %66 {offsets = [0, 2], sizes = [16, 768], strides = [1, 1]} : vector<16x806xf32> to vector<16x768xf32>
    %70 = vector.extract_strided_slice %66 {offsets = [0, 18], sizes = [16, 768], strides = [1, 1]} : vector<16x806xf32> to vector<16x768xf32>
    %71 = vector.extract_strided_slice %66 {offsets = [0, 19], sizes = [16, 768], strides = [1, 1]} : vector<16x806xf32> to vector<16x768xf32>
    %72 = vector.extract_strided_slice %66 {offsets = [0, 20], sizes = [16, 768], strides = [1, 1]} : vector<16x806xf32> to vector<16x768xf32>
    %73 = vector.extract_strided_slice %66 {offsets = [0, 36], sizes = [16, 768], strides = [1, 1]} : vector<16x806xf32> to vector<16x768xf32>
    %74 = vector.extract_strided_slice %66 {offsets = [0, 37], sizes = [16, 768], strides = [1, 1]} : vector<16x806xf32> to vector<16x768xf32>
    %75 = vector.extract_strided_slice %66 {offsets = [0, 38], sizes = [16, 768], strides = [1, 1]} : vector<16x806xf32> to vector<16x768xf32>
    %76 = tpu.concatenate %67, %68, %69, %70, %71, %72, %73, %74, %75 in 0 : vector<16x768xf32>, vector<16x768xf32>, vector<16x768xf32>, vector<16x768xf32>, vector<16x768xf32>, vector<16x768xf32>, vector<16x768xf32>, vector<16x768xf32>, vector<16x768xf32> -> vector<144x768xf32>
    %c0_32 = arith.constant 0 : index
    %c0_33 = arith.constant 0 : index
    %77 = vector.load %arg5[%c0_32, %c0_33] : memref<32x144xf32, #tpu.memory_space<vmem>>, vector<32x144xf32>
    %cst_34 = arith.constant dense<0.000000e+00> : vector<32x768xf32>
    %78 = tpu.matmul %77, %76, %cst_34 {dimension_numbers = #tpu.dot_dimension_numbers<[1], [0], [0], [1], [0, 0, 1, 1], [], []>} : vector<32x144xf32>, vector<144x768xf32>, vector<32x768xf32> -> vector<32x768xf32>
    %cst_35 = arith.constant dense<0.000000e+00> : vector<32x1xf32>
    %79 = tpu.matmul %78, %1, %cst_35 {dimension_numbers = #tpu.dot_dimension_numbers<[1], [0], [0], [1], [0, 0, 1, 1], [], []>} : vector<32x768xf32>, vector<768x1xf32>, vector<32x1xf32> -> vector<32x1xf32>
    %cst_36 = arith.constant 0.001953125 : f32
    %80 = vector.broadcast %cst_36 : f32 to vector<32x1xf32>
    %81 = arith.mulf %79, %80 : vector<32x1xf32>
    %82 = vector.broadcast %81 : vector<32x1xf32> to vector<32x768xf32>
    %83 = arith.subf %78, %82 : vector<32x768xf32>
    %84 = arith.mulf %83, %83 : vector<32x768xf32>
    %cst_37 = arith.constant dense<0.000000e+00> : vector<32x1xf32>
    %85 = tpu.matmul %84, %1, %cst_37 {dimension_numbers = #tpu.dot_dimension_numbers<[1], [0], [0], [1], [0, 0, 1, 1], [], []>} : vector<32x768xf32>, vector<768x1xf32>, vector<32x1xf32> -> vector<32x1xf32>
    %cst_38 = arith.constant 0.001953125 : f32
    %86 = vector.broadcast %cst_38 : f32 to vector<32x1xf32>
    %87 = arith.mulf %85, %86 : vector<32x1xf32>
    %cst_39 = arith.constant 9.99999974E-6 : f32
    %88 = vector.broadcast %cst_39 : f32 to vector<32x1xf32>
    %89 = arith.addf %87, %88 : vector<32x1xf32>
    %90 = math.rsqrt %89 : vector<32x1xf32>
    %91 = vector.broadcast %90 : vector<32x1xf32> to vector<32x768xf32>
    %92 = arith.mulf %83, %91 : vector<32x768xf32>
    %c0_40 = arith.constant 0 : index
    %c0_41 = arith.constant 0 : index
    %93 = vector.load %arg11[%c0_40, %c0_41] : memref<32x1xf32, #tpu.memory_space<vmem>>, vector<32x1xf32>
    %94 = vector.broadcast %93 : vector<32x1xf32> to vector<32x768xf32>
    %95 = arith.mulf %92, %94 : vector<32x768xf32>
    %c0_42 = arith.constant 0 : index
    %c0_43 = arith.constant 0 : index
    %96 = vector.load %arg12[%c0_42, %c0_43] : memref<32x1xf32, #tpu.memory_space<vmem>>, vector<32x1xf32>
    %97 = vector.broadcast %96 : vector<32x1xf32> to vector<32x768xf32>
    %98 = arith.addf %95, %97 : vector<32x768xf32>
    %cst_44 = arith.constant 0.000000e+00 : f32
    %99 = vector.broadcast %cst_44 : f32 to vector<32x768xf32>
    %100 = arith.maximumf %98, %99 : vector<32x768xf32>
    %c0_45 = arith.constant 0 : index
    %c0_46 = arith.constant 0 : index
    %101 = vector.load %arg6[%c0_45, %c0_46] : memref<16x32xf32, #tpu.memory_space<vmem>>, vector<16x32xf32>
    %cst_47 = arith.constant dense<0.000000e+00> : vector<16x768xf32>
    %102 = tpu.matmul %101, %100, %cst_47 {dimension_numbers = #tpu.dot_dimension_numbers<[1], [0], [0], [1], [0, 0, 1, 1], [], []>} : vector<16x32xf32>, vector<32x768xf32>, vector<16x768xf32> -> vector<16x768xf32>
    %cst_48 = arith.constant dense<0.000000e+00> : vector<16x1xf32>
    %103 = tpu.matmul %102, %1, %cst_48 {dimension_numbers = #tpu.dot_dimension_numbers<[1], [0], [0], [1], [0, 0, 1, 1], [], []>} : vector<16x768xf32>, vector<768x1xf32>, vector<16x1xf32> -> vector<16x1xf32>
    %cst_49 = arith.constant 0.001953125 : f32
    %104 = vector.broadcast %cst_49 : f32 to vector<16x1xf32>
    %105 = arith.mulf %103, %104 : vector<16x1xf32>
    %106 = vector.broadcast %105 : vector<16x1xf32> to vector<16x768xf32>
    %107 = arith.subf %102, %106 : vector<16x768xf32>
    %108 = arith.mulf %107, %107 : vector<16x768xf32>
    %cst_50 = arith.constant dense<0.000000e+00> : vector<16x1xf32>
    %109 = tpu.matmul %108, %1, %cst_50 {dimension_numbers = #tpu.dot_dimension_numbers<[1], [0], [0], [1], [0, 0, 1, 1], [], []>} : vector<16x768xf32>, vector<768x1xf32>, vector<16x1xf32> -> vector<16x1xf32>
    %cst_51 = arith.constant 0.001953125 : f32
    %110 = vector.broadcast %cst_51 : f32 to vector<16x1xf32>
    %111 = arith.mulf %109, %110 : vector<16x1xf32>
    %cst_52 = arith.constant 9.99999974E-6 : f32
    %112 = vector.broadcast %cst_52 : f32 to vector<16x1xf32>
    %113 = arith.addf %111, %112 : vector<16x1xf32>
    %114 = math.rsqrt %113 : vector<16x1xf32>
    %115 = vector.broadcast %114 : vector<16x1xf32> to vector<16x768xf32>
    %116 = arith.mulf %107, %115 : vector<16x768xf32>
    %c0_53 = arith.constant 0 : index
    %c0_54 = arith.constant 0 : index
    %117 = vector.load %arg13[%c0_53, %c0_54] : memref<16x1xf32, #tpu.memory_space<vmem>>, vector<16x1xf32>
    %118 = vector.broadcast %117 : vector<16x1xf32> to vector<16x768xf32>
    %119 = arith.mulf %116, %118 : vector<16x768xf32>
    %c0_55 = arith.constant 0 : index
    %c0_56 = arith.constant 0 : index
    %120 = vector.load %arg14[%c0_55, %c0_56] : memref<16x1xf32, #tpu.memory_space<vmem>>, vector<16x1xf32>
    %121 = vector.broadcast %120 : vector<16x1xf32> to vector<16x768xf32>
    %122 = arith.addf %119, %121 : vector<16x768xf32>
    %c0_57 = arith.constant 0 : index
    %c0_58 = arith.constant 0 : index
    %123 = vector.load %arg15[%c0_57, %c0_58] : memref<16x768xf32, #tpu.memory_space<vmem>>, vector<16x768xf32>
    tpu.vector_store %arg15[%c0_57, %c0_58], %122 {strides = array<i32>} : memref<16x768xf32, #tpu.memory_space<vmem>>, vector<16x768xf32>,
    return
  }
}

</mosaic_0001>

<llo_original>
// kernel: mynet_forward.1
$region0: #{mynet_forward.1}
  #allocation0 [shape = 'u32[]', space=smem, size = 0x4, offset = 0x4, fixed_abs, tag = 'smem constant byte address 0x4 - core index']
  #allocation1 [shape = 'u32[72,128]{1,0:T(1,128)}', space=vmem, size = 0x9000, scoped, tag = 'internal scratch']
  %s0 = inlined_call_operand.vmem [shape: f32[8,768], index: 0, kind: input, shape index: {}]
  %s1 = inlined_call_operand.vmem [shape: f32[1,768], index: 1, kind: input, shape index: {}]
  %s2 = inlined_call_operand.vmem [shape: f32[768,1], index: 2, kind: input, shape index: {}]
  %s3 = inlined_call_operand.vmem [shape: f32[32,72], index: 3, kind: input, shape index: {}]
  %s4 = inlined_call_operand.vmem [shape: f32[16,32], index: 4, kind: input, shape index: {}]
  %s5 = inlined_call_operand.vmem [shape: f32[32,144], index: 5, kind: input, shape index: {}]
  %s6 = inlined_call_operand.vmem [shape: f32[16,32], index: 6, kind: input, shape index: {}]
  %s7 = inlined_call_operand.vmem [shape: f32[32,1], index: 7, kind: input, shape index: {}]
  %s8 = inlined_call_operand.vmem [shape: f32[32,1], index: 8, kind: input, shape index: {}]
  %s9 = inlined_call_operand.vmem [shape: f32[16,1], index: 9, kind: input, shape index: {}]
  %s10 = inlined_call_operand.vmem [shape: f32[16,1], index: 10, kind: input, shape index: {}]
  %s11 = inlined_call_operand.vmem [shape: f32[32,1], index: 11, kind: input, shape index: {}]
  %s12 = inlined_call_operand.vmem [shape: f32[32,1], index: 12, kind: input, shape index: {}]
  %s13 = inlined_call_operand.vmem [shape: f32[16,1], index: 13, kind: input, shape index: {}]
  %s14 = inlined_call_operand.vmem [shape: f32[16,1], index: 14, kind: input, shape index: {}]
  %s15 = inlined_call_operand.vmem [shape: f32[16,768], index: 15, kind: output, shape index: {}]
  %s16 = sld [smem:[#allocation0]]
  $region70: #{mynet_forward.1} parent=0
    _
  %s18 = ssub.s32 1, %s16
  %s19 = scalar_select 0, %s18, %s16
  // Predicated region
  $region2: #{mynet_forward.1} parent=0 // pred_check
    _
  $region3: #{mynet_forward.1} parent=0 // pred_check_branch
    %21 = sbr.rel (0) target = $region5
  $region4: #{mynet_forward.1} parent=0 // pred_region
    _
  $region5: #{mynet_forward.1} parent=0 // pred_fallthru
    _
  // Predicated region
  $region6: #{mynet_forward.1} parent=0 // pred_check
    _
  $region7: #{mynet_forward.1} parent=0 // pred_check_branch
    %23 = sbr.rel (0) target = $region9
  $region8: #{mynet_forward.1} parent=0 // pred_region
    _
  $region9: #{mynet_forward.1} parent=0 // pred_fallthru
    _
  // Predicated region
  $region10: #{mynet_forward.1} parent=0 // pred_check
    _
  $region11: #{mynet_forward.1} parent=0 // pred_check_branch
    %25 = sbr.rel (0) target = $region13
  $region12: #{mynet_forward.1} parent=0 // pred_region
    _
  $region13: #{mynet_forward.1} parent=0 // pred_fallthru
    _
  // Predicated region
  $region14: #{mynet_forward.1} parent=0 // pred_check
    _
  $region15: #{mynet_forward.1} parent=0 // pred_check_branch
    %27 = sbr.rel (0) target = $region17
  $region16: #{mynet_forward.1} parent=0 // pred_region
    _
  $region17: #{mynet_forward.1} parent=0 // pred_fallthru
    _
  // Predicated region
  $region18: #{mynet_forward.1} parent=0 // pred_check
    _
  $region19: #{mynet_forward.1} parent=0 // pred_check_branch
    %29 = sbr.rel (0) target = $region21
  $region20: #{mynet_forward.1} parent=0 // pred_region
    _
  $region21: #{mynet_forward.1} parent=0 // pred_fallthru
    _
  // Predicated region
  $region22: #{mynet_forward.1} parent=0 // pred_check
    _
  $region23: #{mynet_forward.1} parent=0 // pred_check_branch
    %31 = sbr.rel (0) target = $region25
  $region24: #{mynet_forward.1} parent=0 // pred_region
    _
  $region25: #{mynet_forward.1} parent=0 // pred_fallthru
    _
  // Predicated region
  $region26: #{mynet_forward.1} parent=0 // pred_check
    _
  $region27: #{mynet_forward.1} parent=0 // pred_check_branch
    %33 = sbr.rel (0) target = $region29
  $region28: #{mynet_forward.1} parent=0 // pred_region
    _
  $region29: #{mynet_forward.1} parent=0 // pred_fallthru
    _
  // Predicated region
  $region30: #{mynet_forward.1} parent=0 // pred_check
    _
  $region31: #{mynet_forward.1} parent=0 // pred_check_branch
    %35 = sbr.rel (0) target = $region33
  $region32: #{mynet_forward.1} parent=0 // pred_region
    _
  $region33: #{mynet_forward.1} parent=0 // pred_fallthru
    _
  // Predicated region
  $region34: #{mynet_forward.1} parent=0 // pred_check
    _
  $region35: #{mynet_forward.1} parent=0 // pred_check_branch
    %37 = sbr.rel (0) target = $region37
  $region36: #{mynet_forward.1} parent=0 // pred_region
    _
  $region37: #{mynet_forward.1} parent=0 // pred_fallthru
    _
  // Predicated region
  $region38: #{mynet_forward.1} parent=0 // pred_check
    _
  $region39: #{mynet_forward.1} parent=0 // pred_check_branch
    %39 = sbr.rel (0) target = $region41
  $region40: #{mynet_forward.1} parent=0 // pred_region
    _
  $region41: #{mynet_forward.1} parent=0 // pred_fallthru
    _
  // Predicated region
  $region42: #{mynet_forward.1} parent=0 // pred_check
    _
  $region43: #{mynet_forward.1} parent=0 // pred_check_branch
    %41 = sbr.rel (0) target = $region45
  $region44: #{mynet_forward.1} parent=0 // pred_region
    _
  $region45: #{mynet_forward.1} parent=0 // pred_fallthru
    _
  // Predicated region
  $region46: #{mynet_forward.1} parent=0 // pred_check
    _
  $region47: #{mynet_forward.1} parent=0 // pred_check_branch
    %43 = sbr.rel (0) target = $region49
  $region48: #{mynet_forward.1} parent=0 // pred_region
    _
  $region49: #{mynet_forward.1} parent=0 // pred_fallthru
    _
  // Predicated region
  $region50: #{mynet_forward.1} parent=0 // pred_check
    _
  $region51: #{mynet_forward.1} parent=0 // pred_check_branch
    %45 = sbr.rel (0) target = $region53
  $region52: #{mynet_forward.1} parent=0 // pred_region
    _
  $region53: #{mynet_forward.1} parent=0 // pred_fallthru
    _
  // Predicated region
  $region54: #{mynet_forward.1} parent=0 // pred_check
    _
  $region55: #{mynet_forward.1} parent=0 // pred_check_branch
    %47 = sbr.rel (0) target = $region57
  $region56: #{mynet_forward.1} parent=0 // pred_region
    _
  $region57: #{mynet_forward.1} parent=0 // pred_fallthru
    _
  // Predicated region
  $region58: #{mynet_forward.1} parent=0 // pred_check
    _
  $region59: #{mynet_forward.1} parent=0 // pred_check_branch
    %49 = sbr.rel (0) target = $region61
  $region60: #{mynet_forward.1} parent=0 // pred_region
    _
  $region61: #{mynet_forward.1} parent=0 // pred_fallthru
    _
  %v50 = vld [vmem:[%s1] sm:$0x3f]
  %v51 = vld [vmem:[%s2] sm:$0xff]
  %v52 = vld [vmem:[%s2 + $0x8] sm:$0xff]
  %v53 = vld [vmem:[%s2 + $0x10] sm:$0xff]
  %v54 = vld [vmem:[%s2 + $0x18] sm:$0xff]
  %v55 = vld [vmem:[%s2 + $0x20] sm:$0xff]
  %v56 = vld [vmem:[%s2 + $0x28] sm:$0xff]
  %v57 = vld [vmem:[%s2 + $0x30] sm:$0xff]
  %v58 = vld [vmem:[%s2 + $0x38] sm:$0xff]
  %v59 = vld [vmem:[%s2 + $0x40] sm:$0xff]
  %v60 = vld [vmem:[%s2 + $0x48] sm:$0xff]
  %v61 = vld [vmem:[%s2 + $0x50] sm:$0xff]
  %v62 = vld [vmem:[%s2 + $0x58] sm:$0xff]
  %v63 = vld [vmem:[%s2 + $0x60] sm:$0xff]
  %v64 = vld [vmem:[%s2 + $0x68] sm:$0xff]
  %v65 = vld [vmem:[%s2 + $0x70] sm:$0xff]
  %v66 = vld [vmem:[%s2 + $0x78] sm:$0xff]
  %v67 = vld [vmem:[%s2 + $0x80] sm:$0xff]
  %v68 = vld [vmem:[%s2 + $0x88] sm:$0xff]
  %v69 = vld [vmem:[%s2 + $0x90] sm:$0xff]
  %v70 = vld [vmem:[%s2 + $0x98] sm:$0xff]
  %v71 = vld [vmem:[%s2 + $0xa0] sm:$0xff]
  %v72 = vld [vmem:[%s2 + $0xa8] sm:$0xff]
  %v73 = vld [vmem:[%s2 + $0xb0] sm:$0xff]
  %v74 = vld [vmem:[%s2 + $0xb8] sm:$0xff]
  %v75 = vld [vmem:[%s2 + $0xc0] sm:$0xff]
  %v76 = vld [vmem:[%s2 + $0xc8] sm:$0xff]
  %v77 = vld [vmem:[%s2 + $0xd0] sm:$0xff]
  %v78 = vld [vmem:[%s2 + $0xd8] sm:$0xff]
  %v79 = vld [vmem:[%s2 + $0xe0] sm:$0xff]
  %v80 = vld [vmem:[%s2 + $0xe8] sm:$0xff]
  %v81 = vld [vmem:[%s2 + $0xf0] sm:$0xff]
  %v82 = vld [vmem:[%s2 + $0xf8] sm:$0xff]
  %v83 = vld [vmem:[%s2 + $0x100] sm:$0xff]
  %v84 = vld [vmem:[%s2 + $0x108] sm:$0xff]
  %v85 = vld [vmem:[%s2 + $0x110] sm:$0xff]
  %v86 = vld [vmem:[%s2 + $0x118] sm:$0xff]
  %v87 = vld [vmem:[%s2 + $0x120] sm:$0xff]
  %v88 = vld [vmem:[%s2 + $0x128] sm:$0xff]
  %v89 = vld [vmem:[%s2 + $0x130] sm:$0xff]
  %v90 = vld [vmem:[%s2 + $0x138] sm:$0xff]
  %v91 = vld [vmem:[%s2 + $0x140] sm:$0xff]
  %v92 = vld [vmem:[%s2 + $0x148] sm:$0xff]
  %v93 = vld [vmem:[%s2 + $0x150] sm:$0xff]
  %v94 = vld [vmem:[%s2 + $0x158] sm:$0xff]
  %v95 = vld [vmem:[%s2 + $0x160] sm:$0xff]
  %v96 = vld [vmem:[%s2 + $0x168] sm:$0xff]
  %v97 = vld [vmem:[%s2 + $0x170] sm:$0xff]
  %v98 = vld [vmem:[%s2 + $0x178] sm:$0xff]
  %v99 = vld [vmem:[%s2 + $0x180] sm:$0xff]
  %v100 = vld [vmem:[%s2 + $0x188] sm:$0xff]
  %v101 = vld [vmem:[%s2 + $0x190] sm:$0xff]
  %v102 = vld [vmem:[%s2 + $0x198] sm:$0xff]
  %v103 = vld [vmem:[%s2 + $0x1a0] sm:$0xff]
  %v104 = vld [vmem:[%s2 + $0x1a8] sm:$0xff]
  %v105 = vld [vmem:[%s2 + $0x1b0] sm:$0xff]
  %v106 = vld [vmem:[%s2 + $0x1b8] sm:$0xff]
  %v107 = vld [vmem:[%s2 + $0x1c0] sm:$0xff]
  %v108 = vld [vmem:[%s2 + $0x1c8] sm:$0xff]
  %v109 = vld [vmem:[%s2 + $0x1d0] sm:$0xff]
  %v110 = vld [vmem:[%s2 + $0x1d8] sm:$0xff]
  %v111 = vld [vmem:[%s2 + $0x1e0] sm:$0xff]
  %v112 = vld [vmem:[%s2 + $0x1e8] sm:$0xff]
  %v113 = vld [vmem:[%s2 + $0x1f0] sm:$0xff]
  %v114 = vld [vmem:[%s2 + $0x1f8] sm:$0xff]
  %v115 = vld [vmem:[%s2 + $0x200] sm:$0xff]
  %v116 = vld [vmem:[%s2 + $0x208] sm:$0xff]
  %v117 = vld [vmem:[%s2 + $0x210] sm:$0xff]
  %v118 = vld [vmem:[%s2 + $0x218] sm:$0xff]
  %v119 = vld [vmem:[%s2 + $0x220] sm:$0xff]
  %v120 = vld [vmem:[%s2 + $0x228] sm:$0xff]
  %v121 = vld [vmem:[%s2 + $0x230] sm:$0xff]
  %v122 = vld [vmem:[%s2 + $0x238] sm:$0xff]
  %v123 = vld [vmem:[%s2 + $0x240] sm:$0xff]
  %v124 = vld [vmem:[%s2 + $0x248] sm:$0xff]
  %v125 = vld [vmem:[%s2 + $0x250] sm:$0xff]
  %v126 = vld [vmem:[%s2 + $0x258] sm:$0xff]
  %v127 = vld [vmem:[%s2 + $0x260] sm:$0xff]
  %v128 = vld [vmem:[%s2 + $0x268] sm:$0xff]
  %v129 = vld [vmem:[%s2 + $0x270] sm:$0xff]
  %v130 = vld [vmem:[%s2 + $0x278] sm:$0xff]
  %v131 = vld [vmem:[%s2 + $0x280] sm:$0xff]
  %v132 = vld [vmem:[%s2 + $0x288] sm:$0xff]
  %v133 = vld [vmem:[%s2 + $0x290] sm:$0xff]
  %v134 = vld [vmem:[%s2 + $0x298] sm:$0xff]
  %v135 = vld [vmem:[%s2 + $0x2a0] sm:$0xff]
  %v136 = vld [vmem:[%s2 + $0x2a8] sm:$0xff]
  %v137 = vld [vmem:[%s2 + $0x2b0] sm:$0xff]
  %v138 = vld [vmem:[%s2 + $0x2b8] sm:$0xff]
  %v139 = vld [vmem:[%s2 + $0x2c0] sm:$0xff]
  %v140 = vld [vmem:[%s2 + $0x2c8] sm:$0xff]
  %v141 = vld [vmem:[%s2 + $0x2d0] sm:$0xff]
  %v142 = vld [vmem:[%s2 + $0x2d8] sm:$0xff]
  %v143 = vld [vmem:[%s2 + $0x2e0] sm:$0xff]
  %v144 = vld [vmem:[%s2 + $0x2e8] sm:$0xff]
  %v145 = vld [vmem:[%s2 + $0x2f0] sm:$0xff]
  %v146 = vld [vmem:[%s2 + $0x2f8] sm:$0xff]
  %v147 = vld [vmem:[%s0] sm:$0xff]
  %v148 = vld [vmem:[%s0 + $0x8] sm:$0xff]
  %v149 = vld [vmem:[%s0 + $0x10] sm:$0xff]
  %v150 = vld [vmem:[%s0 + $0x18] sm:$0xff]
  %v151 = vld [vmem:[%s0 + $0x20] sm:$0xff]
  %v152 = vld [vmem:[%s0 + $0x28] sm:$0xff]
  %159 = vrot.lane.b32.xlu0 %v147, 19
  %v160 = vpop.permute.xlu0 %159
  %161 = vrot.lane.b32.xlu0 %v148, 19
  %v162 = vpop.permute.xlu0 %161
  %163 = vrot.lane.b32.xlu0 %v149, 19
  %v164 = vpop.permute.xlu0 %163
  %165 = vrot.lane.b32.xlu0 %v150, 19
  %v166 = vpop.permute.xlu0 %165
  %167 = vrot.lane.b32.xlu0 %v151, 19
  %v168 = vpop.permute.xlu0 %167
  %169 = vrot.lane.b32.xlu0 %v152, 19
  %v170 = vpop.permute.xlu0 %169
  %vm171 = vcmask 154624
  %v172 = vsel %vm171, %v160, %v162
  %v173 = vsel %vm171, %v162, %v164
  %v174 = vsel %vm171, %v164, %v166
  %v175 = vsel %vm171, %v166, %v168
  %v176 = vsel %vm171, %v168, %v170
  %v184 = vsel %vm171, 0.0, %v160
  %v185 = vsel %vm171, %v170, 0.0
  %188 = vrot.lane.b32.xlu0 %v184, 127
  %v189 = vpop.permute.xlu0 %188
  %190 = vrot.lane.b32.xlu0 %v172, 127
  %v191 = vpop.permute.xlu0 %190
  %192 = vrot.lane.b32.xlu0 %v173, 127
  %v193 = vpop.permute.xlu0 %192
  %194 = vrot.lane.b32.xlu0 %v174, 127
  %v195 = vpop.permute.xlu0 %194
  %196 = vrot.lane.b32.xlu0 %v175, 127
  %v197 = vpop.permute.xlu0 %196
  %198 = vrot.lane.b32.xlu0 %v176, 127
  %v199 = vpop.permute.xlu0 %198
  %200 = vrot.lane.b32.xlu0 %v185, 127
  %v201 = vpop.permute.xlu0 %200
  %vm202 = vcmask 1039360
  %v203 = vsel %vm202, %v189, %v191
  %v204 = vsel %vm202, %v191, %v193
  %v205 = vsel %vm202, %v193, %v195
  %v206 = vsel %vm202, %v195, %v197
  %v207 = vsel %vm202, %v197, %v199
  %v208 = vsel %vm202, %v199, %v201
  %215 = vrot.lane.b32.xlu0 %v184, 126
  %v216 = vpop.permute.xlu0 %215
  %217 = vrot.lane.b32.xlu0 %v172, 126
  %v218 = vpop.permute.xlu0 %217
  %219 = vrot.lane.b32.xlu0 %v173, 126
  %v220 = vpop.permute.xlu0 %219
  %221 = vrot.lane.b32.xlu0 %v174, 126
  %v222 = vpop.permute.xlu0 %221
  %223 = vrot.lane.b32.xlu0 %v175, 126
  %v224 = vpop.permute.xlu0 %223
  %225 = vrot.lane.b32.xlu0 %v176, 126
  %v226 = vpop.permute.xlu0 %225
  %227 = vrot.lane.b32.xlu0 %v185, 126
  %v228 = vpop.permute.xlu0 %227
  %vm229 = vcmask 1031168
  %v230 = vsel %vm229, %v216, %v218
  %v231 = vsel %vm229, %v218, %v220
  %v232 = vsel %vm229, %v220, %v222
  %v233 = vsel %vm229, %v222, %v224
  %v234 = vsel %vm229, %v224, %v226
  %v235 = vsel %vm229, %v226, %v228
  %242 = vrot.lane.b32.xlu0 %v184, 110
  %v243 = vpop.permute.xlu0 %242
  %244 = vrot.lane.b32.xlu0 %v172, 110
  %v245 = vpop.permute.xlu0 %244
  %246 = vrot.lane.b32.xlu0 %v173, 110
  %v247 = vpop.permute.xlu0 %246
  %248 = vrot.lane.b32.xlu0 %v174, 110
  %v249 = vpop.permute.xlu0 %248
  %250 = vrot.lane.b32.xlu0 %v175, 110
  %v251 = vpop.permute.xlu0 %250
  %252 = vrot.lane.b32.xlu0 %v176, 110
  %v253 = vpop.permute.xlu0 %252
  %254 = vrot.lane.b32.xlu0 %v185, 110
  %v255 = vpop.permute.xlu0 %254
  %vm256 = vcmask 900096
  %v257 = vsel %vm256, %v243, %v245
  %v258 = vsel %vm256, %v245, %v247
  %v259 = vsel %vm256, %v247, %v249
  %v260 = vsel %vm256, %v249, %v251
  %v261 = vsel %vm256, %v251, %v253
  %v262 = vsel %vm256, %v253, %v255
  %269 = vrot.lane.b32.xlu0 %v184, 109
  %v270 = vpop.permute.xlu0 %269
  %271 = vrot.lane.b32.xlu0 %v172, 109
  %v272 = vpop.permute.xlu0 %271
  %273 = vrot.lane.b32.xlu0 %v173, 109
  %v274 = vpop.permute.xlu0 %273
  %275 = vrot.lane.b32.xlu0 %v174, 109
  %v276 = vpop.permute.xlu0 %275
  %277 = vrot.lane.b32.xlu0 %v175, 109
  %v278 = vpop.permute.xlu0 %277
  %279 = vrot.lane.b32.xlu0 %v176, 109
  %v280 = vpop.permute.xlu0 %279
  %281 = vrot.lane.b32.xlu0 %v185, 109
  %v282 = vpop.permute.xlu0 %281
  %vm283 = vcmask 891904
  %v284 = vsel %vm283, %v270, %v272
  %v285 = vsel %vm283, %v272, %v274
  %v286 = vsel %vm283, %v274, %v276
  %v287 = vsel %vm283, %v276, %v278
  %v288 = vsel %vm283, %v278, %v280
  %v289 = vsel %vm283, %v280, %v282
  %296 = vrot.lane.b32.xlu0 %v184, 108
  %v297 = vpop.permute.xlu0 %296
  %298 = vrot.lane.b32.xlu0 %v172, 108
  %v299 = vpop.permute.xlu0 %298
  %300 = vrot.lane.b32.xlu0 %v173, 108
  %v301 = vpop.permute.xlu0 %300
  %302 = vrot.lane.b32.xlu0 %v174, 108
  %v303 = vpop.permute.xlu0 %302
  %304 = vrot.lane.b32.xlu0 %v175, 108
  %v305 = vpop.permute.xlu0 %304
  %306 = vrot.lane.b32.xlu0 %v176, 108
  %v307 = vpop.permute.xlu0 %306
  %308 = vrot.lane.b32.xlu0 %v185, 108
  %v309 = vpop.permute.xlu0 %308
  %vm310 = vcmask 883712
  %v311 = vsel %vm310, %v297, %v299
  %v312 = vsel %vm310, %v299, %v301
  %v313 = vsel %vm310, %v301, %v303
  %v314 = vsel %vm310, %v303, %v305
  %v315 = vsel %vm310, %v305, %v307
  %v316 = vsel %vm310, %v307, %v309
  %323 = vrot.lane.b32.xlu0 %v184, 92
  %v324 = vpop.permute.xlu0 %323
  %325 = vrot.lane.b32.xlu0 %v172, 92
  %v326 = vpop.permute.xlu0 %325
  %327 = vrot.lane.b32.xlu0 %v173, 92
  %v328 = vpop.permute.xlu0 %327
  %329 = vrot.lane.b32.xlu0 %v174, 92
  %v330 = vpop.permute.xlu0 %329
  %331 = vrot.lane.b32.xlu0 %v175, 92
  %v332 = vpop.permute.xlu0 %331
  %333 = vrot.lane.b32.xlu0 %v176, 92
  %v334 = vpop.permute.xlu0 %333
  %335 = vrot.lane.b32.xlu0 %v185, 92
  %v336 = vpop.permute.xlu0 %335
  %vm337 = vcmask 752640
  %v338 = vsel %vm337, %v324, %v326
  %v339 = vsel %vm337, %v326, %v328
  %v340 = vsel %vm337, %v328, %v330
  %v341 = vsel %vm337, %v330, %v332
  %v342 = vsel %vm337, %v332, %v334
  %v343 = vsel %vm337, %v334, %v336
  %350 = vrot.lane.b32.xlu0 %v184, 91
  %v351 = vpop.permute.xlu0 %350
  %352 = vrot.lane.b32.xlu0 %v172, 91
  %v353 = vpop.permute.xlu0 %352
  %354 = vrot.lane.b32.xlu0 %v173, 91
  %v355 = vpop.permute.xlu0 %354
  %356 = vrot.lane.b32.xlu0 %v174, 91
  %v357 = vpop.permute.xlu0 %356
  %358 = vrot.lane.b32.xlu0 %v175, 91
  %v359 = vpop.permute.xlu0 %358
  %360 = vrot.lane.b32.xlu0 %v176, 91
  %v361 = vpop.permute.xlu0 %360
  %362 = vrot.lane.b32.xlu0 %v185, 91
  %v363 = vpop.permute.xlu0 %362
  %vm364 = vcmask 744448
  %v365 = vsel %vm364, %v351, %v353
  %v366 = vsel %vm364, %v353, %v355
  %v367 = vsel %vm364, %v355, %v357
  %v368 = vsel %vm364, %v357, %v359
  %v369 = vsel %vm364, %v359, %v361
  %v370 = vsel %vm364, %v361, %v363
  %377 = vrot.lane.b32.xlu0 %v184, 90
  %v378 = vpop.permute.xlu0 %377
  %379 = vrot.lane.b32.xlu0 %v172, 90
  %v380 = vpop.permute.xlu0 %379
  %381 = vrot.lane.b32.xlu0 %v173, 90
  %v382 = vpop.permute.xlu0 %381
  %383 = vrot.lane.b32.xlu0 %v174, 90
  %v384 = vpop.permute.xlu0 %383
  %385 = vrot.lane.b32.xlu0 %v175, 90
  %v386 = vpop.permute.xlu0 %385
  %387 = vrot.lane.b32.xlu0 %v176, 90
  %v388 = vpop.permute.xlu0 %387
  %389 = vrot.lane.b32.xlu0 %v185, 90
  %v390 = vpop.permute.xlu0 %389
  %vm391 = vcmask 736256
  %v392 = vsel %vm391, %v378, %v380
  %v393 = vsel %vm391, %v380, %v382
  %v394 = vsel %vm391, %v382, %v384
  %v395 = vsel %vm391, %v384, %v386
  %v396 = vsel %vm391, %v386, %v388
  %v397 = vsel %vm391, %v388, %v390
  %v404 = vld [vmem:[%s3] sm:$0xff]
  %v405 = vld [vmem:[%s3 + $0x8] sm:$0xff]
  %v406 = vld [vmem:[%s3 + $0x10] sm:$0xff]
  %v407 = vld [vmem:[%s3 + $0x18] sm:$0xff]
  %vm408 = vcmask 588800
  %v410 = vsel %vm408, %v404, 0
  %v413 = vsel %vm408, %v405, 0
  %v416 = vsel %vm408, %v406, 0
  %v419 = vsel %vm408, %v407, 0
  %421 = vmatpush.msra.mxu0 0.0
  %422 = vmatpush.msra.mxu0 0.0
  %423 = vmatpush.msra.mxu0 0.0
  %424 = vmatpush.msra.mxu0 0.0
  %425 = vmatpush.msra.mxu0 0.0
  %426 = vmatpush.msra.mxu0 0.0
  %427 = vmatpush.msra.mxu0 0.0
  %428 = vmatpush.msra.mxu0 %v392
  %429 = vmatpush.msra.mxu0 %v365
  %430 = vmatpush.msra.mxu0 %v338
  %431 = vmatpush.msra.mxu0 %v311
  %432 = vmatpush.msra.mxu0 %v284
  %433 = vmatpush.msra.mxu0 %v257
  %434 = vmatpush.msra.mxu0 %v230
  %435 = vmatpush.msra.mxu0 %v203
  %436 = vmatpush.msra.mxu0 %v184
  %437 = vmatmul.f32.gmra.mxu0 %v410
  %v438 = vpop.f32.mrf.mxu0
  %v439 = vadd.f32 0.0, %v438
  %440 = vmatmul.f32.gmra.mxu0 %v413
  %v441 = vpop.f32.mrf.mxu0
  %v442 = vadd.f32 0.0, %v441
  %443 = vmatmul.f32.gmra.mxu0 %v416
  %v444 = vpop.f32.mrf.mxu0
  %v445 = vadd.f32 0.0, %v444
  %446 = vmatmul.f32.gmra.mxu0 %v419
  %v447 = vpop.f32.mrf.mxu0
  %v448 = vadd.f32 0.0, %v447
  %449 = vdwg.mxu0
  %450 = vmatpush.msra.mxu0 0.0
  %451 = vmatpush.msra.mxu0 0.0
  %452 = vmatpush.msra.mxu0 0.0
  %453 = vmatpush.msra.mxu0 0.0
  %454 = vmatpush.msra.mxu0 0.0
  %455 = vmatpush.msra.mxu0 0.0
  %456 = vmatpush.msra.mxu0 0.0
  %457 = vmatpush.msra.mxu0 %v393
  %458 = vmatpush.msra.mxu0 %v366
  %459 = vmatpush.msra.mxu0 %v339
  %460 = vmatpush.msra.mxu0 %v312
  %461 = vmatpush.msra.mxu0 %v285
  %462 = vmatpush.msra.mxu0 %v258
  %463 = vmatpush.msra.mxu0 %v231
  %464 = vmatpush.msra.mxu0 %v204
  %465 = vmatpush.msra.mxu0 %v172
  %466 = vmatmul.f32.gmra.mxu0 %v410
  %v467 = vpop.f32.mrf.mxu0
  %v468 = vadd.f32 0.0, %v467
  %469 = vmatmul.f32.gmra.mxu0 %v413
  %v470 = vpop.f32.mrf.mxu0
  %v471 = vadd.f32 0.0, %v470
  %472 = vmatmul.f32.gmra.mxu0 %v416
  %v473 = vpop.f32.mrf.mxu0
  %v474 = vadd.f32 0.0, %v473
  %475 = vmatmul.f32.gmra.mxu0 %v419
  %v476 = vpop.f32.mrf.mxu0
  %v477 = vadd.f32 0.0, %v476
  %478 = vdwg.mxu0
  %479 = vmatpush.msra.mxu0 0.0
  %480 = vmatpush.msra.mxu0 0.0
  %481 = vmatpush.msra.mxu0 0.0
  %482 = vmatpush.msra.mxu0 0.0
  %483 = vmatpush.msra.mxu0 0.0
  %484 = vmatpush.msra.mxu0 0.0
  %485 = vmatpush.msra.mxu0 0.0
  %486 = vmatpush.msra.mxu0 %v394
  %487 = vmatpush.msra.mxu0 %v367
  %488 = vmatpush.msra.mxu0 %v340
  %489 = vmatpush.msra.mxu0 %v313
  %490 = vmatpush.msra.mxu0 %v286
  %491 = vmatpush.msra.mxu0 %v259
  %492 = vmatpush.msra.mxu0 %v232
  %493 = vmatpush.msra.mxu0 %v205
  %494 = vmatpush.msra.mxu0 %v173
  %495 = vmatmul.f32.gmra.mxu0 %v410
  %v496 = vpop.f32.mrf.mxu0
  %v497 = vadd.f32 0.0, %v496
  %498 = vmatmul.f32.gmra.mxu0 %v413
  %v499 = vpop.f32.mrf.mxu0
  %v500 = vadd.f32 0.0, %v499
  %501 = vmatmul.f32.gmra.mxu0 %v416
  %v502 = vpop.f32.mrf.mxu0
  %v503 = vadd.f32 0.0, %v502
  %504 = vmatmul.f32.gmra.mxu0 %v419
  %v505 = vpop.f32.mrf.mxu0
  %v506 = vadd.f32 0.0, %v505
  %507 = vdwg.mxu0
  %508 = vmatpush.msra.mxu0 0.0
  %509 = vmatpush.msra.mxu0 0.0
  %510 = vmatpush.msra.mxu0 0.0
  %511 = vmatpush.msra.mxu0 0.0
  %512 = vmatpush.msra.mxu0 0.0
  %513 = vmatpush.msra.mxu0 0.0
  %514 = vmatpush.msra.mxu0 0.0
  %515 = vmatpush.msra.mxu0 %v395
  %516 = vmatpush.msra.mxu0 %v368
  %517 = vmatpush.msra.mxu0 %v341
  %518 = vmatpush.msra.mxu0 %v314
  %519 = vmatpush.msra.mxu0 %v287
  %520 = vmatpush.msra.mxu0 %v260
  %521 = vmatpush.msra.mxu0 %v233
  %522 = vmatpush.msra.mxu0 %v206
  %523 = vmatpush.msra.mxu0 %v174
  %524 = vmatmul.f32.gmra.mxu0 %v410
  %v525 = vpop.f32.mrf.mxu0
  %v526 = vadd.f32 0.0, %v525
  %527 = vmatmul.f32.gmra.mxu0 %v413
  %v528 = vpop.f32.mrf.mxu0
  %v529 = vadd.f32 0.0, %v528
  %530 = vmatmul.f32.gmra.mxu0 %v416
  %v531 = vpop.f32.mrf.mxu0
  %v532 = vadd.f32 0.0, %v531
  %533 = vmatmul.f32.gmra.mxu0 %v419
  %v534 = vpop.f32.mrf.mxu0
  %v535 = vadd.f32 0.0, %v534
  %536 = vdwg.mxu0
  %537 = vmatpush.msra.mxu0 0.0
  %538 = vmatpush.msra.mxu0 0.0
  %539 = vmatpush.msra.mxu0 0.0
  %540 = vmatpush.msra.mxu0 0.0
  %541 = vmatpush.msra.mxu0 0.0
  %542 = vmatpush.msra.mxu0 0.0
  %543 = vmatpush.msra.mxu0 0.0
  %544 = vmatpush.msra.mxu0 %v396
  %545 = vmatpush.msra.mxu0 %v369
  %546 = vmatpush.msra.mxu0 %v342
  %547 = vmatpush.msra.mxu0 %v315
  %548 = vmatpush.msra.mxu0 %v288
  %549 = vmatpush.msra.mxu0 %v261
  %550 = vmatpush.msra.mxu0 %v234
  %551 = vmatpush.msra.mxu0 %v207
  %552 = vmatpush.msra.mxu0 %v175
  %553 = vmatmul.f32.gmra.mxu0 %v410
  %v554 = vpop.f32.mrf.mxu0
  %v555 = vadd.f32 0.0, %v554
  %556 = vmatmul.f32.gmra.mxu0 %v413
  %v557 = vpop.f32.mrf.mxu0
  %v558 = vadd.f32 0.0, %v557
  %559 = vmatmul.f32.gmra.mxu0 %v416
  %v560 = vpop.f32.mrf.mxu0
  %v561 = vadd.f32 0.0, %v560
  %562 = vmatmul.f32.gmra.mxu0 %v419
  %v563 = vpop.f32.mrf.mxu0
  %v564 = vadd.f32 0.0, %v563
  %565 = vdwg.mxu0
  %566 = vmatpush.msra.mxu0 0.0
  %567 = vmatpush.msra.mxu0 0.0
  %568 = vmatpush.msra.mxu0 0.0
  %569 = vmatpush.msra.mxu0 0.0
  %570 = vmatpush.msra.mxu0 0.0
  %571 = vmatpush.msra.mxu0 0.0
  %572 = vmatpush.msra.mxu0 0.0
  %573 = vmatpush.msra.mxu0 %v397
  %574 = vmatpush.msra.mxu0 %v370
  %575 = vmatpush.msra.mxu0 %v343
  %576 = vmatpush.msra.mxu0 %v316
  %577 = vmatpush.msra.mxu0 %v289
  %578 = vmatpush.msra.mxu0 %v262
  %579 = vmatpush.msra.mxu0 %v235
  %580 = vmatpush.msra.mxu0 %v208
  %581 = vmatpush.msra.mxu0 %v176
  %582 = vmatmul.f32.gmra.mxu0 %v410
  %v583 = vpop.f32.mrf.mxu0
  %v584 = vadd.f32 0.0, %v583
  %585 = vmatmul.f32.gmra.mxu0 %v413
  %v586 = vpop.f32.mrf.mxu0
  %v587 = vadd.f32 0.0, %v586
  %588 = vmatmul.f32.gmra.mxu0 %v416
  %v589 = vpop.f32.mrf.mxu0
  %v590 = vadd.f32 0.0, %v589
  %591 = vmatmul.f32.gmra.mxu0 %v419
  %v592 = vpop.f32.mrf.mxu0
  %v593 = vadd.f32 0.0, %v592
  %594 = vdwg.mxu0
  %595 = vmatpush.msra.mxu0 %v66
  %596 = vmatpush.msra.mxu0 %v65
  %597 = vmatpush.msra.mxu0 %v64
  %598 = vmatpush.msra.mxu0 %v63
  %599 = vmatpush.msra.mxu0 %v62
  %600 = vmatpush.msra.mxu0 %v61
  %601 = vmatpush.msra.mxu0 %v60
  %602 = vmatpush.msra.mxu0 %v59
  %603 = vmatpush.msra.mxu0 %v58
  %604 = vmatpush.msra.mxu0 %v57
  %605 = vmatpush.msra.mxu0 %v56
  %606 = vmatpush.msra.mxu0 %v55
  %607 = vmatpush.msra.mxu0 %v54
  %608 = vmatpush.msra.mxu0 %v53
  %609 = vmatpush.msra.mxu0 %v52
  %610 = vmatpush.msra.mxu0 %v51
  %611 = vmatmul.f32.gmra.mxu0 %v439
  %v612 = vpop.f32.mrf.mxu0
  %v613 = vadd.f32 0.0, %v612
  %614 = vmatmul.f32.gmra.mxu0 %v442
  %v615 = vpop.f32.mrf.mxu0
  %v616 = vadd.f32 0.0, %v615
  %617 = vmatmul.f32.gmra.mxu0 %v445
  %v618 = vpop.f32.mrf.mxu0
  %v619 = vadd.f32 0.0, %v618
  %620 = vmatmul.f32.gmra.mxu0 %v448
  %v621 = vpop.f32.mrf.mxu0
  %v622 = vadd.f32 0.0, %v621
  %623 = vdwg.mxu0
  %624 = vmatpush.msra.mxu0 %v82
  %625 = vmatpush.msra.mxu0 %v81
  %626 = vmatpush.msra.mxu0 %v80
  %627 = vmatpush.msra.mxu0 %v79
  %628 = vmatpush.msra.mxu0 %v78
  %629 = vmatpush.msra.mxu0 %v77
  %630 = vmatpush.msra.mxu0 %v76
  %631 = vmatpush.msra.mxu0 %v75
  %632 = vmatpush.msra.mxu0 %v74
  %633 = vmatpush.msra.mxu0 %v73
  %634 = vmatpush.msra.mxu0 %v72
  %635 = vmatpush.msra.mxu0 %v71
  %636 = vmatpush.msra.mxu0 %v70
  %637 = vmatpush.msra.mxu0 %v69
  %638 = vmatpush.msra.mxu0 %v68
  %639 = vmatpush.msra.mxu0 %v67
  %640 = vmatmul.f32.gmra.mxu0 %v468
  %v641 = vpop.f32.mrf.mxu0
  %v642 = vadd.f32 %v613, %v641
  %643 = vmatmul.f32.gmra.mxu0 %v471
  %v644 = vpop.f32.mrf.mxu0
  %v645 = vadd.f32 %v616, %v644
  %646 = vmatmul.f32.gmra.mxu0 %v474
  %v647 = vpop.f32.mrf.mxu0
  %v648 = vadd.f32 %v619, %v647
  %649 = vmatmul.f32.gmra.mxu0 %v477
  %v650 = vpop.f32.mrf.mxu0
  %v651 = vadd.f32 %v622, %v650
  %652 = vdwg.mxu0
  %653 = vmatpush.msra.mxu0 %v98
  %654 = vmatpush.msra.mxu0 %v97
  %655 = vmatpush.msra.mxu0 %v96
  %656 = vmatpush.msra.mxu0 %v95
  %657 = vmatpush.msra.mxu0 %v94
  %658 = vmatpush.msra.mxu0 %v93
  %659 = vmatpush.msra.mxu0 %v92
  %660 = vmatpush.msra.mxu0 %v91
  %661 = vmatpush.msra.mxu0 %v90
  %662 = vmatpush.msra.mxu0 %v89
  %663 = vmatpush.msra.mxu0 %v88
  %664 = vmatpush.msra.mxu0 %v87
  %665 = vmatpush.msra.mxu0 %v86
  %666 = vmatpush.msra.mxu0 %v85
  %667 = vmatpush.msra.mxu0 %v84
  %668 = vmatpush.msra.mxu0 %v83
  %669 = vmatmul.f32.gmra.mxu0 %v497
  %v670 = vpop.f32.mrf.mxu0
  %v671 = vadd.f32 %v642, %v670
  %672 = vmatmul.f32.gmra.mxu0 %v500
  %v673 = vpop.f32.mrf.mxu0
  %v674 = vadd.f32 %v645, %v673
  %675 = vmatmul.f32.gmra.mxu0 %v503
  %v676 = vpop.f32.mrf.mxu0
  %v677 = vadd.f32 %v648, %v676
  %678 = vmatmul.f32.gmra.mxu0 %v506
  %v679 = vpop.f32.mrf.mxu0
  %v680 = vadd.f32 %v651, %v679
  %681 = vdwg.mxu0
  %682 = vmatpush.msra.mxu0 %v114
  %683 = vmatpush.msra.mxu0 %v113
  %684 = vmatpush.msra.mxu0 %v112
  %685 = vmatpush.msra.mxu0 %v111
  %686 = vmatpush.msra.mxu0 %v110
  %687 = vmatpush.msra.mxu0 %v109
  %688 = vmatpush.msra.mxu0 %v108
  %689 = vmatpush.msra.mxu0 %v107
  %690 = vmatpush.msra.mxu0 %v106
  %691 = vmatpush.msra.mxu0 %v105
  %692 = vmatpush.msra.mxu0 %v104
  %693 = vmatpush.msra.mxu0 %v103
  %694 = vmatpush.msra.mxu0 %v102
  %695 = vmatpush.msra.mxu0 %v101
  %696 = vmatpush.msra.mxu0 %v100
  %697 = vmatpush.msra.mxu0 %v99
  %698 = vmatmul.f32.gmra.mxu0 %v526
  %v699 = vpop.f32.mrf.mxu0
  %v700 = vadd.f32 %v671, %v699
  %701 = vmatmul.f32.gmra.mxu0 %v529
  %v702 = vpop.f32.mrf.mxu0
  %v703 = vadd.f32 %v674, %v702
  %704 = vmatmul.f32.gmra.mxu0 %v532
  %v705 = vpop.f32.mrf.mxu0
  %v706 = vadd.f32 %v677, %v705
  %707 = vmatmul.f32.gmra.mxu0 %v535
  %v708 = vpop.f32.mrf.mxu0
  %v709 = vadd.f32 %v680, %v708
  %710 = vdwg.mxu0
  %711 = vmatpush.msra.mxu0 %v130
  %712 = vmatpush.msra.mxu0 %v129
  %713 = vmatpush.msra.mxu0 %v128
  %714 = vmatpush.msra.mxu0 %v127
  %715 = vmatpush.msra.mxu0 %v126
  %716 = vmatpush.msra.mxu0 %v125
  %717 = vmatpush.msra.mxu0 %v124
  %718 = vmatpush.msra.mxu0 %v123
  %719 = vmatpush.msra.mxu0 %v122
  %720 = vmatpush.msra.mxu0 %v121
  %721 = vmatpush.msra.mxu0 %v120
  %722 = vmatpush.msra.mxu0 %v119
  %723 = vmatpush.msra.mxu0 %v118
  %724 = vmatpush.msra.mxu0 %v117
  %725 = vmatpush.msra.mxu0 %v116
  %726 = vmatpush.msra.mxu0 %v115
  %727 = vmatmul.f32.gmra.mxu0 %v555
  %v728 = vpop.f32.mrf.mxu0
  %v729 = vadd.f32 %v700, %v728
  %730 = vmatmul.f32.gmra.mxu0 %v558
  %v731 = vpop.f32.mrf.mxu0
  %v732 = vadd.f32 %v703, %v731
  %733 = vmatmul.f32.gmra.mxu0 %v561
  %v734 = vpop.f32.mrf.mxu0
  %v735 = vadd.f32 %v706, %v734
  %736 = vmatmul.f32.gmra.mxu0 %v564
  %v737 = vpop.f32.mrf.mxu0
  %v738 = vadd.f32 %v709, %v737
  %739 = vdwg.mxu0
  %740 = vmatpush.msra.mxu0 %v146
  %741 = vmatpush.msra.mxu0 %v145
  %742 = vmatpush.msra.mxu0 %v144
  %743 = vmatpush.msra.mxu0 %v143
  %744 = vmatpush.msra.mxu0 %v142
  %745 = vmatpush.msra.mxu0 %v141
  %746 = vmatpush.msra.mxu0 %v140
  %747 = vmatpush.msra.mxu0 %v139
  %748 = vmatpush.msra.mxu0 %v138
  %749 = vmatpush.msra.mxu0 %v137
  %750 = vmatpush.msra.mxu0 %v136
  %751 = vmatpush.msra.mxu0 %v135
  %752 = vmatpush.msra.mxu0 %v134
  %753 = vmatpush.msra.mxu0 %v133
  %754 = vmatpush.msra.mxu0 %v132
  %755 = vmatpush.msra.mxu0 %v131
  %756 = vmatmul.f32.gmra.mxu0 %v584
  %v757 = vpop.f32.mrf.mxu0
  %v758 = vadd.f32 %v729, %v757
  %759 = vmatmul.f32.gmra.mxu0 %v587
  %v760 = vpop.f32.mrf.mxu0
  %v761 = vadd.f32 %v732, %v760
  %762 = vmatmul.f32.gmra.mxu0 %v590
  %v763 = vpop.f32.mrf.mxu0
  %v764 = vadd.f32 %v735, %v763
  %765 = vmatmul.f32.gmra.mxu0 %v593
  %v766 = vpop.f32.mrf.mxu0
  %v767 = vadd.f32 %v738, %v766
  %768 = vdwg.mxu0
  %v769 = vmul.f32 %v758, 0.001953125
  %v770 = vmul.f32 %v761, 0.001953125
  %v771 = vmul.f32 %v764, 0.001953125
  %v772 = vmul.f32 %v767, 0.001953125
  %774 = vset.pattern.permute.xlu0 0
  %775 = vperm.xlu0 %774, %v769
  %v776 = vpop.permute.xlu0 %775
  %779 = vset.pattern.permute.xlu0 0
  %780 = vperm.xlu0 %779, %v770
  %v781 = vpop.permute.xlu0 %780
  %784 = vset.pattern.permute.xlu0 0
  %785 = vperm.xlu0 %784, %v771
  %v786 = vpop.permute.xlu0 %785
  %789 = vset.pattern.permute.xlu0 0
  %790 = vperm.xlu0 %789, %v772
  %v791 = vpop.permute.xlu0 %790
  %v793 = vsub.f32 %v439, %v776
  %v794 = vsub.f32 %v468, %v776
  %v795 = vsub.f32 %v497, %v776
  %v796 = vsub.f32 %v526, %v776
  %v797 = vsub.f32 %v555, %v776
  %v798 = vsub.f32 %v584, %v776
  %v799 = vsub.f32 %v442, %v781
  %v800 = vsub.f32 %v471, %v781
  %v801 = vsub.f32 %v500, %v781
  %v802 = vsub.f32 %v529, %v781
  %v803 = vsub.f32 %v558, %v781
  %v804 = vsub.f32 %v587, %v781
  %v805 = vsub.f32 %v445, %v786
  %v806 = vsub.f32 %v474, %v786
  %v807 = vsub.f32 %v503, %v786
  %v808 = vsub.f32 %v532, %v786
  %v809 = vsub.f32 %v561, %v786
  %v810 = vsub.f32 %v590, %v786
  %v811 = vsub.f32 %v448, %v791
  %v812 = vsub.f32 %v477, %v791
  %v813 = vsub.f32 %v506, %v791
  %v814 = vsub.f32 %v535, %v791
  %v815 = vsub.f32 %v564, %v791
  %v816 = vsub.f32 %v593, %v791
  %v817 = vmul.f32 %v793, %v793
  %v818 = vmul.f32 %v794, %v794
  %v819 = vmul.f32 %v795, %v795
  %v820 = vmul.f32 %v796, %v796
  %v821 = vmul.f32 %v797, %v797
  %v822 = vmul.f32 %v798, %v798
  %v823 = vmul.f32 %v799, %v799
  %v824 = vmul.f32 %v800, %v800
  %v825 = vmul.f32 %v801, %v801
  %v826 = vmul.f32 %v802, %v802
  %v827 = vmul.f32 %v803, %v803
  %v828 = vmul.f32 %v804, %v804
  %v829 = vmul.f32 %v805, %v805
  %v830 = vmul.f32 %v806, %v806
  %v831 = vmul.f32 %v807, %v807
  %v832 = vmul.f32 %v808, %v808
  %v833 = vmul.f32 %v809, %v809
  %v834 = vmul.f32 %v810, %v810
  %v835 = vmul.f32 %v811, %v811
  %v836 = vmul.f32 %v812, %v812
  %v837 = vmul.f32 %v813, %v813
  %v838 = vmul.f32 %v814, %v814
  %v839 = vmul.f32 %v815, %v815
  %v840 = vmul.f32 %v816, %v816
  %841 = vmatpush.msra.mxu0 %v66
  %842 = vmatpush.msra.mxu0 %v65
  %843 = vmatpush.msra.mxu0 %v64
  %844 = vmatpush.msra.mxu0 %v63
  %845 = vmatpush.msra.mxu0 %v62
  %846 = vmatpush.msra.mxu0 %v61
  %847 = vmatpush.msra.mxu0 %v60
  %848 = vmatpush.msra.mxu0 %v59
  %849 = vmatpush.msra.mxu0 %v58
  %850 = vmatpush.msra.mxu0 %v57
  %851 = vmatpush.msra.mxu0 %v56
  %852 = vmatpush.msra.mxu0 %v55
  %853 = vmatpush.msra.mxu0 %v54
  %854 = vmatpush.msra.mxu0 %v53
  %855 = vmatpush.msra.mxu0 %v52
  %856 = vmatpush.msra.mxu0 %v51
  %857 = vmatmul.f32.gmra.mxu0 %v817
  %v858 = vpop.f32.mrf.mxu0
  %v859 = vadd.f32 0.0, %v858
  %860 = vmatmul.f32.gmra.mxu0 %v823
  %v861 = vpop.f32.mrf.mxu0
  %v862 = vadd.f32 0.0, %v861
  %863 = vmatmul.f32.gmra.mxu0 %v829
  %v864 = vpop.f32.mrf.mxu0
  %v865 = vadd.f32 0.0, %v864
  %866 = vmatmul.f32.gmra.mxu0 %v835
  %v867 = vpop.f32.mrf.mxu0
  %v868 = vadd.f32 0.0, %v867
  %869 = vdwg.mxu0
  %870 = vmatpush.msra.mxu0 %v82
  %871 = vmatpush.msra.mxu0 %v81
  %872 = vmatpush.msra.mxu0 %v80
  %873 = vmatpush.msra.mxu0 %v79
  %874 = vmatpush.msra.mxu0 %v78
  %875 = vmatpush.msra.mxu0 %v77
  %876 = vmatpush.msra.mxu0 %v76
  %877 = vmatpush.msra.mxu0 %v75
  %878 = vmatpush.msra.mxu0 %v74
  %879 = vmatpush.msra.mxu0 %v73
  %880 = vmatpush.msra.mxu0 %v72
  %881 = vmatpush.msra.mxu0 %v71
  %882 = vmatpush.msra.mxu0 %v70
  %883 = vmatpush.msra.mxu0 %v69
  %884 = vmatpush.msra.mxu0 %v68
  %885 = vmatpush.msra.mxu0 %v67
  %886 = vmatmul.f32.gmra.mxu0 %v818
  %v887 = vpop.f32.mrf.mxu0
  %v888 = vadd.f32 %v859, %v887
  %889 = vmatmul.f32.gmra.mxu0 %v824
  %v890 = vpop.f32.mrf.mxu0
  %v891 = vadd.f32 %v862, %v890
  %892 = vmatmul.f32.gmra.mxu0 %v830
  %v893 = vpop.f32.mrf.mxu0
  %v894 = vadd.f32 %v865, %v893
  %895 = vmatmul.f32.gmra.mxu0 %v836
  %v896 = vpop.f32.mrf.mxu0
  %v897 = vadd.f32 %v868, %v896
  %898 = vdwg.mxu0
  %899 = vmatpush.msra.mxu0 %v98
  %900 = vmatpush.msra.mxu0 %v97
  %901 = vmatpush.msra.mxu0 %v96
  %902 = vmatpush.msra.mxu0 %v95
  %903 = vmatpush.msra.mxu0 %v94
  %904 = vmatpush.msra.mxu0 %v93
  %905 = vmatpush.msra.mxu0 %v92
  %906 = vmatpush.msra.mxu0 %v91
  %907 = vmatpush.msra.mxu0 %v90
  %908 = vmatpush.msra.mxu0 %v89
  %909 = vmatpush.msra.mxu0 %v88
  %910 = vmatpush.msra.mxu0 %v87
  %911 = vmatpush.msra.mxu0 %v86
  %912 = vmatpush.msra.mxu0 %v85
  %913 = vmatpush.msra.mxu0 %v84
  %914 = vmatpush.msra.mxu0 %v83
  %915 = vmatmul.f32.gmra.mxu0 %v819
  %v916 = vpop.f32.mrf.mxu0
  %v917 = vadd.f32 %v888, %v916
  %918 = vmatmul.f32.gmra.mxu0 %v825
  %v919 = vpop.f32.mrf.mxu0
  %v920 = vadd.f32 %v891, %v919
  %921 = vmatmul.f32.gmra.mxu0 %v831
  %v922 = vpop.f32.mrf.mxu0
  %v923 = vadd.f32 %v894, %v922
  %924 = vmatmul.f32.gmra.mxu0 %v837
  %v925 = vpop.f32.mrf.mxu0
  %v926 = vadd.f32 %v897, %v925
  %927 = vdwg.mxu0
  %928 = vmatpush.msra.mxu0 %v114
  %929 = vmatpush.msra.mxu0 %v113
  %930 = vmatpush.msra.mxu0 %v112
  %931 = vmatpush.msra.mxu0 %v111
  %932 = vmatpush.msra.mxu0 %v110
  %933 = vmatpush.msra.mxu0 %v109
  %934 = vmatpush.msra.mxu0 %v108
  %935 = vmatpush.msra.mxu0 %v107
  %936 = vmatpush.msra.mxu0 %v106
  %937 = vmatpush.msra.mxu0 %v105
  %938 = vmatpush.msra.mxu0 %v104
  %939 = vmatpush.msra.mxu0 %v103
  %940 = vmatpush.msra.mxu0 %v102
  %941 = vmatpush.msra.mxu0 %v101
  %942 = vmatpush.msra.mxu0 %v100
  %943 = vmatpush.msra.mxu0 %v99
  %944 = vmatmul.f32.gmra.mxu0 %v820
  %v945 = vpop.f32.mrf.mxu0
  %v946 = vadd.f32 %v917, %v945
  %947 = vmatmul.f32.gmra.mxu0 %v826
  %v948 = vpop.f32.mrf.mxu0
  %v949 = vadd.f32 %v920, %v948
  %950 = vmatmul.f32.gmra.mxu0 %v832
  %v951 = vpop.f32.mrf.mxu0
  %v952 = vadd.f32 %v923, %v951
  %953 = vmatmul.f32.gmra.mxu0 %v838
  %v954 = vpop.f32.mrf.mxu0
  %v955 = vadd.f32 %v926, %v954
  %956 = vdwg.mxu0
  %957 = vmatpush.msra.mxu0 %v130
  %958 = vmatpush.msra.mxu0 %v129
  %959 = vmatpush.msra.mxu0 %v128
  %960 = vmatpush.msra.mxu0 %v127
  %961 = vmatpush.msra.mxu0 %v126
  %962 = vmatpush.msra.mxu0 %v125
  %963 = vmatpush.msra.mxu0 %v124
  %964 = vmatpush.msra.mxu0 %v123
  %965 = vmatpush.msra.mxu0 %v122
  %966 = vmatpush.msra.mxu0 %v121
  %967 = vmatpush.msra.mxu0 %v120
  %968 = vmatpush.msra.mxu0 %v119
  %969 = vmatpush.msra.mxu0 %v118
  %970 = vmatpush.msra.mxu0 %v117
  %971 = vmatpush.msra.mxu0 %v116
  %972 = vmatpush.msra.mxu0 %v115
  %973 = vmatmul.f32.gmra.mxu0 %v821
  %v974 = vpop.f32.mrf.mxu0
  %v975 = vadd.f32 %v946, %v974
  %976 = vmatmul.f32.gmra.mxu0 %v827
  %v977 = vpop.f32.mrf.mxu0
  %v978 = vadd.f32 %v949, %v977
  %979 = vmatmul.f32.gmra.mxu0 %v833
  %v980 = vpop.f32.mrf.mxu0
  %v981 = vadd.f32 %v952, %v980
  %982 = vmatmul.f32.gmra.mxu0 %v839
  %v983 = vpop.f32.mrf.mxu0
  %v984 = vadd.f32 %v955, %v983
  %985 = vdwg.mxu0
  %986 = vmatpush.msra.mxu0 %v146
  %987 = vmatpush.msra.mxu0 %v145
  %988 = vmatpush.msra.mxu0 %v144
  %989 = vmatpush.msra.mxu0 %v143
  %990 = vmatpush.msra.mxu0 %v142
  %991 = vmatpush.msra.mxu0 %v141
  %992 = vmatpush.msra.mxu0 %v140
  %993 = vmatpush.msra.mxu0 %v139
  %994 = vmatpush.msra.mxu0 %v138
  %995 = vmatpush.msra.mxu0 %v137
  %996 = vmatpush.msra.mxu0 %v136
  %997 = vmatpush.msra.mxu0 %v135
  %998 = vmatpush.msra.mxu0 %v134
  %999 = vmatpush.msra.mxu0 %v133
  %1000 = vmatpush.msra.mxu0 %v132
  %1001 = vmatpush.msra.mxu0 %v131
  %1002 = vmatmul.f32.gmra.mxu0 %v822
  %v1003 = vpop.f32.mrf.mxu0
  %v1004 = vadd.f32 %v975, %v1003
  %1005 = vmatmul.f32.gmra.mxu0 %v828
  %v1006 = vpop.f32.mrf.mxu0
  %v1007 = vadd.f32 %v978, %v1006
  %1008 = vmatmul.f32.gmra.mxu0 %v834
  %v1009 = vpop.f32.mrf.mxu0
  %v1010 = vadd.f32 %v981, %v1009
  %1011 = vmatmul.f32.gmra.mxu0 %v840
  %v1012 = vpop.f32.mrf.mxu0
  %v1013 = vadd.f32 %v984, %v1012
  %1014 = vdwg.mxu0
  %v1015 = vmul.f32 %v1004, 0.001953125
  %v1016 = vmul.f32 %v1007, 0.001953125
  %v1017 = vmul.f32 %v1010, 0.001953125
  %v1018 = vmul.f32 %v1013, 0.001953125
  %v1019 = vadd.f32 %v1015, 1e-05
  %v1020 = vadd.f32 %v1016, 1e-05
  %v1021 = vadd.f32 %v1017, 1e-05
  %v1022 = vadd.f32 %v1018, 1e-05
  %v1023 = vrsqrt.pop %v1019
  %v1024 = vmul.f32 %v1023, %v1019
  %v1025 = vmul.f32 %v1024, %v1023
  %v1026 = vmul.f32 0.5, %v1025
  %v1027 = vsub.f32 1.5, %v1026
  %v1028 = vmul.f32 %v1023, %v1027
  %vm1029 = vweird.f32 %v1019
  %vm1030 = vweird.f32 %v1023
  %vm1031 = vmor %vm1029, %vm1030
  %v1032 = vsel %vm1031, %v1023, %v1028
  %v1033 = vrsqrt.pop %v1020
  %v1034 = vmul.f32 %v1033, %v1020
  %v1035 = vmul.f32 %v1034, %v1033
  %v1036 = vmul.f32 0.5, %v1035
  %v1037 = vsub.f32 1.5, %v1036
  %v1038 = vmul.f32 %v1033, %v1037
  %vm1039 = vweird.f32 %v1020
  %vm1040 = vweird.f32 %v1033
  %vm1041 = vmor %vm1039, %vm1040
  %v1042 = vsel %vm1041, %v1033, %v1038
  %v1043 = vrsqrt.pop %v1021
  %v1044 = vmul.f32 %v1043, %v1021
  %v1045 = vmul.f32 %v1044, %v1043
  %v1046 = vmul.f32 0.5, %v1045
  %v1047 = vsub.f32 1.5, %v1046
  %v1048 = vmul.f32 %v1043, %v1047
  %vm1049 = vweird.f32 %v1021
  %vm1050 = vweird.f32 %v1043
  %vm1051 = vmor %vm1049, %vm1050
  %v1052 = vsel %vm1051, %v1043, %v1048
  %v1053 = vrsqrt.pop %v1022
  %v1054 = vmul.f32 %v1053, %v1022
  %v1055 = vmul.f32 %v1054, %v1053
  %v1056 = vmul.f32 0.5, %v1055
  %v1057 = vsub.f32 1.5, %v1056
  %v1058 = vmul.f32 %v1053, %v1057
  %vm1059 = vweird.f32 %v1022
  %vm1060 = vweird.f32 %v1053
  %vm1061 = vmor %vm1059, %vm1060
  %v1062 = vsel %vm1061, %v1053, %v1058
  %1064 = vset.pattern.permute.xlu0 0
  %1065 = vperm.xlu0 %1064, %v1032
  %v1066 = vpop.permute.xlu0 %1065
  %1069 = vset.pattern.permute.xlu0 0
  %1070 = vperm.xlu0 %1069, %v1042
  %v1071 = vpop.permute.xlu0 %1070
  %1074 = vset.pattern.permute.xlu0 0
  %1075 = vperm.xlu0 %1074, %v1052
  %v1076 = vpop.permute.xlu0 %1075
  %1079 = vset.pattern.permute.xlu0 0
  %1080 = vperm.xlu0 %1079, %v1062
  %v1081 = vpop.permute.xlu0 %1080
  %v1083 = vmul.f32 %v793, %v1066
  %v1084 = vmul.f32 %v794, %v1066
  %v1085 = vmul.f32 %v795, %v1066
  %v1086 = vmul.f32 %v796, %v1066
  %v1087 = vmul.f32 %v797, %v1066
  %v1088 = vmul.f32 %v798, %v1066
  %v1089 = vmul.f32 %v799, %v1071
  %v1090 = vmul.f32 %v800, %v1071
  %v1091 = vmul.f32 %v801, %v1071
  %v1092 = vmul.f32 %v802, %v1071
  %v1093 = vmul.f32 %v803, %v1071
  %v1094 = vmul.f32 %v804, %v1071
  %v1095 = vmul.f32 %v805, %v1076
  %v1096 = vmul.f32 %v806, %v1076
  %v1097 = vmul.f32 %v807, %v1076
  %v1098 = vmul.f32 %v808, %v1076
  %v1099 = vmul.f32 %v809, %v1076
  %v1100 = vmul.f32 %v810, %v1076
  %v1101 = vmul.f32 %v811, %v1081
  %v1102 = vmul.f32 %v812, %v1081
  %v1103 = vmul.f32 %v813, %v1081
  %v1104 = vmul.f32 %v814, %v1081
  %v1105 = vmul.f32 %v815, %v1081
  %v1106 = vmul.f32 %v816, %v1081
  %v1107 = vld [vmem:[%s7] sm:$0xff]
  %v1108 = vld [vmem:[%s7 + $0x8] sm:$0xff]
  %v1109 = vld [vmem:[%s7 + $0x10] sm:$0xff]
  %v1110 = vld [vmem:[%s7 + $0x18] sm:$0xff]
  %1112 = vset.pattern.permute.xlu0 0
  %1113 = vperm.xlu0 %1112, %v1107
  %v1114 = vpop.permute.xlu0 %1113
  %1117 = vset.pattern.permute.xlu0 0
  %1118 = vperm.xlu0 %1117, %v1108
  %v1119 = vpop.permute.xlu0 %1118
  %1122 = vset.pattern.permute.xlu0 0
  %1123 = vperm.xlu0 %1122, %v1109
  %v1124 = vpop.permute.xlu0 %1123
  %1127 = vset.pattern.permute.xlu0 0
  %1128 = vperm.xlu0 %1127, %v1110
  %v1129 = vpop.permute.xlu0 %1128
  %v1131 = vmul.f32 %v1083, %v1114
  %v1132 = vmul.f32 %v1084, %v1114
  %v1133 = vmul.f32 %v1085, %v1114
  %v1134 = vmul.f32 %v1086, %v1114
  %v1135 = vmul.f32 %v1087, %v1114
  %v1136 = vmul.f32 %v1088, %v1114
  %v1137 = vmul.f32 %v1089, %v1119
  %v1138 = vmul.f32 %v1090, %v1119
  %v1139 = vmul.f32 %v1091, %v1119
  %v1140 = vmul.f32 %v1092, %v1119
  %v1141 = vmul.f32 %v1093, %v1119
  %v1142 = vmul.f32 %v1094, %v1119
  %v1143 = vmul.f32 %v1095, %v1124
  %v1144 = vmul.f32 %v1096, %v1124
  %v1145 = vmul.f32 %v1097, %v1124
  %v1146 = vmul.f32 %v1098, %v1124
  %v1147 = vmul.f32 %v1099, %v1124
  %v1148 = vmul.f32 %v1100, %v1124
  %v1149 = vmul.f32 %v1101, %v1129
  %v1150 = vmul.f32 %v1102, %v1129
  %v1151 = vmul.f32 %v1103, %v1129
  %v1152 = vmul.f32 %v1104, %v1129
  %v1153 = vmul.f32 %v1105, %v1129
  %v1154 = vmul.f32 %v1106, %v1129
  %v1155 = vld [vmem:[%s8] sm:$0xff]
  %v1156 = vld [vmem:[%s8 + $0x8] sm:$0xff]
  %v1157 = vld [vmem:[%s8 + $0x10] sm:$0xff]
  %v1158 = vld [vmem:[%s8 + $0x18] sm:$0xff]
  %1160 = vset.pattern.permute.xlu0 0
  %1161 = vperm.xlu0 %1160, %v1155
  %v1162 = vpop.permute.xlu0 %1161
  %1165 = vset.pattern.permute.xlu0 0
  %1166 = vperm.xlu0 %1165, %v1156
  %v1167 = vpop.permute.xlu0 %1166
  %1170 = vset.pattern.permute.xlu0 0
  %1171 = vperm.xlu0 %1170, %v1157
  %v1172 = vpop.permute.xlu0 %1171
  %1175 = vset.pattern.permute.xlu0 0
  %1176 = vperm.xlu0 %1175, %v1158
  %v1177 = vpop.permute.xlu0 %1176
  %v1179 = vadd.f32 %v1131, %v1162
  %v1180 = vadd.f32 %v1132, %v1162
  %v1181 = vadd.f32 %v1133, %v1162
  %v1182 = vadd.f32 %v1134, %v1162
  %v1183 = vadd.f32 %v1135, %v1162
  %v1184 = vadd.f32 %v1136, %v1162
  %v1185 = vadd.f32 %v1137, %v1167
  %v1186 = vadd.f32 %v1138, %v1167
  %v1187 = vadd.f32 %v1139, %v1167
  %v1188 = vadd.f32 %v1140, %v1167
  %v1189 = vadd.f32 %v1141, %v1167
  %v1190 = vadd.f32 %v1142, %v1167
  %v1191 = vadd.f32 %v1143, %v1172
  %v1192 = vadd.f32 %v1144, %v1172
  %v1193 = vadd.f32 %v1145, %v1172
  %v1194 = vadd.f32 %v1146, %v1172
  %v1195 = vadd.f32 %v1147, %v1172
  %v1196 = vadd.f32 %v1148, %v1172
  %v1197 = vadd.f32 %v1149, %v1177
  %v1198 = vadd.f32 %v1150, %v1177
  %v1199 = vadd.f32 %v1151, %v1177
  %v1200 = vadd.f32 %v1152, %v1177
  %v1201 = vadd.f32 %v1153, %v1177
  %v1202 = vadd.f32 %v1154, %v1177
  %v1203 = vmax.f32 %v1179, 0.0
  %v1204 = vmax.f32 %v1180, 0.0
  %v1205 = vmax.f32 %v1181, 0.0
  %v1206 = vmax.f32 %v1182, 0.0
  %v1207 = vmax.f32 %v1183, 0.0
  %v1208 = vmax.f32 %v1184, 0.0
  %v1209 = vmax.f32 %v1185, 0.0
  %v1210 = vmax.f32 %v1186, 0.0
  %v1211 = vmax.f32 %v1187, 0.0
  %v1212 = vmax.f32 %v1188, 0.0
  %v1213 = vmax.f32 %v1189, 0.0
  %v1214 = vmax.f32 %v1190, 0.0
  %v1215 = vmax.f32 %v1191, 0.0
  %v1216 = vmax.f32 %v1192, 0.0
  %v1217 = vmax.f32 %v1193, 0.0
  %v1218 = vmax.f32 %v1194, 0.0
  %v1219 = vmax.f32 %v1195, 0.0
  %v1220 = vmax.f32 %v1196, 0.0
  %v1221 = vmax.f32 %v1197, 0.0
  %v1222 = vmax.f32 %v1198, 0.0
  %v1223 = vmax.f32 %v1199, 0.0
  %v1224 = vmax.f32 %v1200, 0.0
  %v1225 = vmax.f32 %v1201, 0.0
  %v1226 = vmax.f32 %v1202, 0.0
  %v1227 = vld [vmem:[%s4] sm:$0xff]
  %v1228 = vld [vmem:[%s4 + $0x8] sm:$0xff]
  %vm1229 = vcmask 261120
  %v1231 = vsel %vm1229, %v1227, 0
  %v1234 = vsel %vm1229, %v1228, 0
  %1236 = vmatpush.msra.mxu0 0.0
  %1237 = vmatpush.msra.mxu0 0.0
  %1238 = vmatpush.msra.mxu0 0.0
  %1239 = vmatpush.msra.mxu0 0.0
  %1240 = vmatpush.msra.mxu0 0.0
  %1241 = vmatpush.msra.mxu0 0.0
  %1242 = vmatpush.msra.mxu0 0.0
  %1243 = vmatpush.msra.mxu0 0.0
  %1244 = vmatpush.msra.mxu0 0.0
  %1245 = vmatpush.msra.mxu0 0.0
  %1246 = vmatpush.msra.mxu0 0.0
  %1247 = vmatpush.msra.mxu0 0.0
  %1248 = vmatpush.msra.mxu0 %v1221
  %1249 = vmatpush.msra.mxu0 %v1215
  %1250 = vmatpush.msra.mxu0 %v1209
  %1251 = vmatpush.msra.mxu0 %v1203
  %1252 = vmatmul.f32.gmra.mxu0 %v1231
  %v1253 = vpop.f32.mrf.mxu0
  %v1254 = vadd.f32 0.0, %v1253
  %1255 = vmatmul.f32.gmra.mxu0 %v1234
  %v1256 = vpop.f32.mrf.mxu0
  %v1257 = vadd.f32 0.0, %v1256
  %1258 = vdwg.mxu0
  %1259 = vmatpush.msra.mxu0 0.0
  %1260 = vmatpush.msra.mxu0 0.0
  %1261 = vmatpush.msra.mxu0 0.0
  %1262 = vmatpush.msra.mxu0 0.0
  %1263 = vmatpush.msra.mxu0 0.0
  %1264 = vmatpush.msra.mxu0 0.0
  %1265 = vmatpush.msra.mxu0 0.0
  %1266 = vmatpush.msra.mxu0 0.0
  %1267 = vmatpush.msra.mxu0 0.0
  %1268 = vmatpush.msra.mxu0 0.0
  %1269 = vmatpush.msra.mxu0 0.0
  %1270 = vmatpush.msra.mxu0 0.0
  %1271 = vmatpush.msra.mxu0 %v1222
  %1272 = vmatpush.msra.mxu0 %v1216
  %1273 = vmatpush.msra.mxu0 %v1210
  %1274 = vmatpush.msra.mxu0 %v1204
  %1275 = vmatmul.f32.gmra.mxu0 %v1231
  %v1276 = vpop.f32.mrf.mxu0
  %v1277 = vadd.f32 0.0, %v1276
  %1278 = vmatmul.f32.gmra.mxu0 %v1234
  %v1279 = vpop.f32.mrf.mxu0
  %v1280 = vadd.f32 0.0, %v1279
  %1281 = vdwg.mxu0
  %1282 = vmatpush.msra.mxu0 0.0
  %1283 = vmatpush.msra.mxu0 0.0
  %1284 = vmatpush.msra.mxu0 0.0
  %1285 = vmatpush.msra.mxu0 0.0
  %1286 = vmatpush.msra.mxu0 0.0
  %1287 = vmatpush.msra.mxu0 0.0
  %1288 = vmatpush.msra.mxu0 0.0
  %1289 = vmatpush.msra.mxu0 0.0
  %1290 = vmatpush.msra.mxu0 0.0
  %1291 = vmatpush.msra.mxu0 0.0
  %1292 = vmatpush.msra.mxu0 0.0
  %1293 = vmatpush.msra.mxu0 0.0
  %1294 = vmatpush.msra.mxu0 %v1223
  %1295 = vmatpush.msra.mxu0 %v1217
  %1296 = vmatpush.msra.mxu0 %v1211
  %1297 = vmatpush.msra.mxu0 %v1205
  %1298 = vmatmul.f32.gmra.mxu0 %v1231
  %v1299 = vpop.f32.mrf.mxu0
  %v1300 = vadd.f32 0.0, %v1299
  %1301 = vmatmul.f32.gmra.mxu0 %v1234
  %v1302 = vpop.f32.mrf.mxu0
  %v1303 = vadd.f32 0.0, %v1302
  %1304 = vdwg.mxu0
  %1305 = vmatpush.msra.mxu0 0.0
  %1306 = vmatpush.msra.mxu0 0.0
  %1307 = vmatpush.msra.mxu0 0.0
  %1308 = vmatpush.msra.mxu0 0.0
  %1309 = vmatpush.msra.mxu0 0.0
  %1310 = vmatpush.msra.mxu0 0.0
  %1311 = vmatpush.msra.mxu0 0.0
  %1312 = vmatpush.msra.mxu0 0.0
  %1313 = vmatpush.msra.mxu0 0.0
  %1314 = vmatpush.msra.mxu0 0.0
  %1315 = vmatpush.msra.mxu0 0.0
  %1316 = vmatpush.msra.mxu0 0.0
  %1317 = vmatpush.msra.mxu0 %v1224
  %1318 = vmatpush.msra.mxu0 %v1218
  %1319 = vmatpush.msra.mxu0 %v1212
  %1320 = vmatpush.msra.mxu0 %v1206
  %1321 = vmatmul.f32.gmra.mxu0 %v1231
  %v1322 = vpop.f32.mrf.mxu0
  %v1323 = vadd.f32 0.0, %v1322
  %1324 = vmatmul.f32.gmra.mxu0 %v1234
  %v1325 = vpop.f32.mrf.mxu0
  %v1326 = vadd.f32 0.0, %v1325
  %1327 = vdwg.mxu0
  %1328 = vmatpush.msra.mxu0 0.0
  %1329 = vmatpush.msra.mxu0 0.0
  %1330 = vmatpush.msra.mxu0 0.0
  %1331 = vmatpush.msra.mxu0 0.0
  %1332 = vmatpush.msra.mxu0 0.0
  %1333 = vmatpush.msra.mxu0 0.0
  %1334 = vmatpush.msra.mxu0 0.0
  %1335 = vmatpush.msra.mxu0 0.0
  %1336 = vmatpush.msra.mxu0 0.0
  %1337 = vmatpush.msra.mxu0 0.0
  %1338 = vmatpush.msra.mxu0 0.0
  %1339 = vmatpush.msra.mxu0 0.0
  %1340 = vmatpush.msra.mxu0 %v1225
  %1341 = vmatpush.msra.mxu0 %v1219
  %1342 = vmatpush.msra.mxu0 %v1213
  %1343 = vmatpush.msra.mxu0 %v1207
  %1344 = vmatmul.f32.gmra.mxu0 %v1231
  %v1345 = vpop.f32.mrf.mxu0
  %v1346 = vadd.f32 0.0, %v1345
  %1347 = vmatmul.f32.gmra.mxu0 %v1234
  %v1348 = vpop.f32.mrf.mxu0
  %v1349 = vadd.f32 0.0, %v1348
  %1350 = vdwg.mxu0
  %1351 = vmatpush.msra.mxu0 0.0
  %1352 = vmatpush.msra.mxu0 0.0
  %1353 = vmatpush.msra.mxu0 0.0
  %1354 = vmatpush.msra.mxu0 0.0
  %1355 = vmatpush.msra.mxu0 0.0
  %1356 = vmatpush.msra.mxu0 0.0
  %1357 = vmatpush.msra.mxu0 0.0
  %1358 = vmatpush.msra.mxu0 0.0
  %1359 = vmatpush.msra.mxu0 0.0
  %1360 = vmatpush.msra.mxu0 0.0
  %1361 = vmatpush.msra.mxu0 0.0
  %1362 = vmatpush.msra.mxu0 0.0
  %1363 = vmatpush.msra.mxu0 %v1226
  %1364 = vmatpush.msra.mxu0 %v1220
  %1365 = vmatpush.msra.mxu0 %v1214
  %1366 = vmatpush.msra.mxu0 %v1208
  %1367 = vmatmul.f32.gmra.mxu0 %v1231
  %v1368 = vpop.f32.mrf.mxu0
  %v1369 = vadd.f32 0.0, %v1368
  %1370 = vmatmul.f32.gmra.mxu0 %v1234
  %v1371 = vpop.f32.mrf.mxu0
  %v1372 = vadd.f32 0.0, %v1371
  %1373 = vdwg.mxu0
  %1374 = vmatpush.msra.mxu0 %v66
  %1375 = vmatpush.msra.mxu0 %v65
  %1376 = vmatpush.msra.mxu0 %v64
  %1377 = vmatpush.msra.mxu0 %v63
  %1378 = vmatpush.msra.mxu0 %v62
  %1379 = vmatpush.msra.mxu0 %v61
  %1380 = vmatpush.msra.mxu0 %v60
  %1381 = vmatpush.msra.mxu0 %v59
  %1382 = vmatpush.msra.mxu0 %v58
  %1383 = vmatpush.msra.mxu0 %v57
  %1384 = vmatpush.msra.mxu0 %v56
  %1385 = vmatpush.msra.mxu0 %v55
  %1386 = vmatpush.msra.mxu0 %v54
  %1387 = vmatpush.msra.mxu0 %v53
  %1388 = vmatpush.msra.mxu0 %v52
  %1389 = vmatpush.msra.mxu0 %v51
  %1390 = vmatmul.f32.gmra.mxu0 %v1254
  %v1391 = vpop.f32.mrf.mxu0
  %v1392 = vadd.f32 0.0, %v1391
  %1393 = vmatmul.f32.gmra.mxu0 %v1257
  %v1394 = vpop.f32.mrf.mxu0
  %v1395 = vadd.f32 0.0, %v1394
  %1396 = vdwg.mxu0
  %1397 = vmatpush.msra.mxu0 %v82
  %1398 = vmatpush.msra.mxu0 %v81
  %1399 = vmatpush.msra.mxu0 %v80
  %1400 = vmatpush.msra.mxu0 %v79
  %1401 = vmatpush.msra.mxu0 %v78
  %1402 = vmatpush.msra.mxu0 %v77
  %1403 = vmatpush.msra.mxu0 %v76
  %1404 = vmatpush.msra.mxu0 %v75
  %1405 = vmatpush.msra.mxu0 %v74
  %1406 = vmatpush.msra.mxu0 %v73
  %1407 = vmatpush.msra.mxu0 %v72
  %1408 = vmatpush.msra.mxu0 %v71
  %1409 = vmatpush.msra.mxu0 %v70
  %1410 = vmatpush.msra.mxu0 %v69
  %1411 = vmatpush.msra.mxu0 %v68
  %1412 = vmatpush.msra.mxu0 %v67
  %1413 = vmatmul.f32.gmra.mxu0 %v1277
  %v1414 = vpop.f32.mrf.mxu0
  %v1415 = vadd.f32 %v1392, %v1414
  %1416 = vmatmul.f32.gmra.mxu0 %v1280
  %v1417 = vpop.f32.mrf.mxu0
  %v1418 = vadd.f32 %v1395, %v1417
  %1419 = vdwg.mxu0
  %1420 = vmatpush.msra.mxu0 %v98
  %1421 = vmatpush.msra.mxu0 %v97
  %1422 = vmatpush.msra.mxu0 %v96
  %1423 = vmatpush.msra.mxu0 %v95
  %1424 = vmatpush.msra.mxu0 %v94
  %1425 = vmatpush.msra.mxu0 %v93
  %1426 = vmatpush.msra.mxu0 %v92
  %1427 = vmatpush.msra.mxu0 %v91
  %1428 = vmatpush.msra.mxu0 %v90
  %1429 = vmatpush.msra.mxu0 %v89
  %1430 = vmatpush.msra.mxu0 %v88
  %1431 = vmatpush.msra.mxu0 %v87
  %1432 = vmatpush.msra.mxu0 %v86
  %1433 = vmatpush.msra.mxu0 %v85
  %1434 = vmatpush.msra.mxu0 %v84
  %1435 = vmatpush.msra.mxu0 %v83
  %1436 = vmatmul.f32.gmra.mxu0 %v1300
  %v1437 = vpop.f32.mrf.mxu0
  %v1438 = vadd.f32 %v1415, %v1437
  %1439 = vmatmul.f32.gmra.mxu0 %v1303
  %v1440 = vpop.f32.mrf.mxu0
  %v1441 = vadd.f32 %v1418, %v1440
  %1442 = vdwg.mxu0
  %1443 = vmatpush.msra.mxu0 %v114
  %1444 = vmatpush.msra.mxu0 %v113
  %1445 = vmatpush.msra.mxu0 %v112
  %1446 = vmatpush.msra.mxu0 %v111
  %1447 = vmatpush.msra.mxu0 %v110
  %1448 = vmatpush.msra.mxu0 %v109
  %1449 = vmatpush.msra.mxu0 %v108
  %1450 = vmatpush.msra.mxu0 %v107
  %1451 = vmatpush.msra.mxu0 %v106
  %1452 = vmatpush.msra.mxu0 %v105
  %1453 = vmatpush.msra.mxu0 %v104
  %1454 = vmatpush.msra.mxu0 %v103
  %1455 = vmatpush.msra.mxu0 %v102
  %1456 = vmatpush.msra.mxu0 %v101
  %1457 = vmatpush.msra.mxu0 %v100
  %1458 = vmatpush.msra.mxu0 %v99
  %1459 = vmatmul.f32.gmra.mxu0 %v1323
  %v1460 = vpop.f32.mrf.mxu0
  %v1461 = vadd.f32 %v1438, %v1460
  %1462 = vmatmul.f32.gmra.mxu0 %v1326
  %v1463 = vpop.f32.mrf.mxu0
  %v1464 = vadd.f32 %v1441, %v1463
  %1465 = vdwg.mxu0
  %1466 = vmatpush.msra.mxu0 %v130
  %1467 = vmatpush.msra.mxu0 %v129
  %1468 = vmatpush.msra.mxu0 %v128
  %1469 = vmatpush.msra.mxu0 %v127
  %1470 = vmatpush.msra.mxu0 %v126
  %1471 = vmatpush.msra.mxu0 %v125
  %1472 = vmatpush.msra.mxu0 %v124
  %1473 = vmatpush.msra.mxu0 %v123
  %1474 = vmatpush.msra.mxu0 %v122
  %1475 = vmatpush.msra.mxu0 %v121
  %1476 = vmatpush.msra.mxu0 %v120
  %1477 = vmatpush.msra.mxu0 %v119
  %1478 = vmatpush.msra.mxu0 %v118
  %1479 = vmatpush.msra.mxu0 %v117
  %1480 = vmatpush.msra.mxu0 %v116
  %1481 = vmatpush.msra.mxu0 %v115
  %1482 = vmatmul.f32.gmra.mxu0 %v1346
  %v1483 = vpop.f32.mrf.mxu0
  %v1484 = vadd.f32 %v1461, %v1483
  %1485 = vmatmul.f32.gmra.mxu0 %v1349
  %v1486 = vpop.f32.mrf.mxu0
  %v1487 = vadd.f32 %v1464, %v1486
  %1488 = vdwg.mxu0
  %1489 = vmatpush.msra.mxu0 %v146
  %1490 = vmatpush.msra.mxu0 %v145
  %1491 = vmatpush.msra.mxu0 %v144
  %1492 = vmatpush.msra.mxu0 %v143
  %1493 = vmatpush.msra.mxu0 %v142
  %1494 = vmatpush.msra.mxu0 %v141
  %1495 = vmatpush.msra.mxu0 %v140
  %1496 = vmatpush.msra.mxu0 %v139
  %1497 = vmatpush.msra.mxu0 %v138
  %1498 = vmatpush.msra.mxu0 %v137
  %1499 = vmatpush.msra.mxu0 %v136
  %1500 = vmatpush.msra.mxu0 %v135
  %1501 = vmatpush.msra.mxu0 %v134
  %1502 = vmatpush.msra.mxu0 %v133
  %1503 = vmatpush.msra.mxu0 %v132
  %1504 = vmatpush.msra.mxu0 %v131
  %1505 = vmatmul.f32.gmra.mxu0 %v1369
  %v1506 = vpop.f32.mrf.mxu0
  %v1507 = vadd.f32 %v1484, %v1506
  %1508 = vmatmul.f32.gmra.mxu0 %v1372
  %v1509 = vpop.f32.mrf.mxu0
  %v1510 = vadd.f32 %v1487, %v1509
  %1511 = vdwg.mxu0
  %v1512 = vmul.f32 %v1507, 0.001953125
  %v1513 = vmul.f32 %v1510, 0.001953125
  %1515 = vset.pattern.permute.xlu0 0
  %1516 = vperm.xlu0 %1515, %v1512
  %v1517 = vpop.permute.xlu0 %1516
  %1520 = vset.pattern.permute.xlu0 0
  %1521 = vperm.xlu0 %1520, %v1513
  %v1522 = vpop.permute.xlu0 %1521
  %v1524 = vsub.f32 %v1254, %v1517
  %v1525 = vsub.f32 %v1277, %v1517
  %v1526 = vsub.f32 %v1300, %v1517
  %v1527 = vsub.f32 %v1323, %v1517
  %v1528 = vsub.f32 %v1346, %v1517
  %v1529 = vsub.f32 %v1369, %v1517
  %v1530 = vsub.f32 %v1257, %v1522
  %v1531 = vsub.f32 %v1280, %v1522
  %v1532 = vsub.f32 %v1303, %v1522
  %v1533 = vsub.f32 %v1326, %v1522
  %v1534 = vsub.f32 %v1349, %v1522
  %v1535 = vsub.f32 %v1372, %v1522
  %v1536 = vmul.f32 %v1524, %v1524
  %v1537 = vmul.f32 %v1525, %v1525
  %v1538 = vmul.f32 %v1526, %v1526
  %v1539 = vmul.f32 %v1527, %v1527
  %v1540 = vmul.f32 %v1528, %v1528
  %v1541 = vmul.f32 %v1529, %v1529
  %v1542 = vmul.f32 %v1530, %v1530
  %v1543 = vmul.f32 %v1531, %v1531
  %v1544 = vmul.f32 %v1532, %v1532
  %v1545 = vmul.f32 %v1533, %v1533
  %v1546 = vmul.f32 %v1534, %v1534
  %v1547 = vmul.f32 %v1535, %v1535
  %1548 = vmatpush.msra.mxu0 %v66
  %1549 = vmatpush.msra.mxu0 %v65
  %1550 = vmatpush.msra.mxu0 %v64
  %1551 = vmatpush.msra.mxu0 %v63
  %1552 = vmatpush.msra.mxu0 %v62
  %1553 = vmatpush.msra.mxu0 %v61
  %1554 = vmatpush.msra.mxu0 %v60
  %1555 = vmatpush.msra.mxu0 %v59
  %1556 = vmatpush.msra.mxu0 %v58
  %1557 = vmatpush.msra.mxu0 %v57
  %1558 = vmatpush.msra.mxu0 %v56
  %1559 = vmatpush.msra.mxu0 %v55
  %1560 = vmatpush.msra.mxu0 %v54
  %1561 = vmatpush.msra.mxu0 %v53
  %1562 = vmatpush.msra.mxu0 %v52
  %1563 = vmatpush.msra.mxu0 %v51
  %1564 = vmatmul.f32.gmra.mxu0 %v1536
  %v1565 = vpop.f32.mrf.mxu0
  %v1566 = vadd.f32 0.0, %v1565
  %1567 = vmatmul.f32.gmra.mxu0 %v1542
  %v1568 = vpop.f32.mrf.mxu0
  %v1569 = vadd.f32 0.0, %v1568
  %1570 = vdwg.mxu0
  %1571 = vmatpush.msra.mxu0 %v82
  %1572 = vmatpush.msra.mxu0 %v81
  %1573 = vmatpush.msra.mxu0 %v80
  %1574 = vmatpush.msra.mxu0 %v79
  %1575 = vmatpush.msra.mxu0 %v78
  %1576 = vmatpush.msra.mxu0 %v77
  %1577 = vmatpush.msra.mxu0 %v76
  %1578 = vmatpush.msra.mxu0 %v75
  %1579 = vmatpush.msra.mxu0 %v74
  %1580 = vmatpush.msra.mxu0 %v73
  %1581 = vmatpush.msra.mxu0 %v72
  %1582 = vmatpush.msra.mxu0 %v71
  %1583 = vmatpush.msra.mxu0 %v70
  %1584 = vmatpush.msra.mxu0 %v69
  %1585 = vmatpush.msra.mxu0 %v68
  %1586 = vmatpush.msra.mxu0 %v67
  %1587 = vmatmul.f32.gmra.mxu0 %v1537
  %v1588 = vpop.f32.mrf.mxu0
  %v1589 = vadd.f32 %v1566, %v1588
  %1590 = vmatmul.f32.gmra.mxu0 %v1543
  %v1591 = vpop.f32.mrf.mxu0
  %v1592 = vadd.f32 %v1569, %v1591
  %1593 = vdwg.mxu0
  %1594 = vmatpush.msra.mxu0 %v98
  %1595 = vmatpush.msra.mxu0 %v97
  %1596 = vmatpush.msra.mxu0 %v96
  %1597 = vmatpush.msra.mxu0 %v95
  %1598 = vmatpush.msra.mxu0 %v94
  %1599 = vmatpush.msra.mxu0 %v93
  %1600 = vmatpush.msra.mxu0 %v92
  %1601 = vmatpush.msra.mxu0 %v91
  %1602 = vmatpush.msra.mxu0 %v90
  %1603 = vmatpush.msra.mxu0 %v89
  %1604 = vmatpush.msra.mxu0 %v88
  %1605 = vmatpush.msra.mxu0 %v87
  %1606 = vmatpush.msra.mxu0 %v86
  %1607 = vmatpush.msra.mxu0 %v85
  %1608 = vmatpush.msra.mxu0 %v84
  %1609 = vmatpush.msra.mxu0 %v83
  %1610 = vmatmul.f32.gmra.mxu0 %v1538
  %v1611 = vpop.f32.mrf.mxu0
  %v1612 = vadd.f32 %v1589, %v1611
  %1613 = vmatmul.f32.gmra.mxu0 %v1544
  %v1614 = vpop.f32.mrf.mxu0
  %v1615 = vadd.f32 %v1592, %v1614
  %1616 = vdwg.mxu0
  %1617 = vmatpush.msra.mxu0 %v114
  %1618 = vmatpush.msra.mxu0 %v113
  %1619 = vmatpush.msra.mxu0 %v112
  %1620 = vmatpush.msra.mxu0 %v111
  %1621 = vmatpush.msra.mxu0 %v110
  %1622 = vmatpush.msra.mxu0 %v109
  %1623 = vmatpush.msra.mxu0 %v108
  %1624 = vmatpush.msra.mxu0 %v107
  %1625 = vmatpush.msra.mxu0 %v106
  %1626 = vmatpush.msra.mxu0 %v105
  %1627 = vmatpush.msra.mxu0 %v104
  %1628 = vmatpush.msra.mxu0 %v103
  %1629 = vmatpush.msra.mxu0 %v102
  %1630 = vmatpush.msra.mxu0 %v101
  %1631 = vmatpush.msra.mxu0 %v100
  %1632 = vmatpush.msra.mxu0 %v99
  %1633 = vmatmul.f32.gmra.mxu0 %v1539
  %v1634 = vpop.f32.mrf.mxu0
  %v1635 = vadd.f32 %v1612, %v1634
  %1636 = vmatmul.f32.gmra.mxu0 %v1545
  %v1637 = vpop.f32.mrf.mxu0
  %v1638 = vadd.f32 %v1615, %v1637
  %1639 = vdwg.mxu0
  %1640 = vmatpush.msra.mxu0 %v130
  %1641 = vmatpush.msra.mxu0 %v129
  %1642 = vmatpush.msra.mxu0 %v128
  %1643 = vmatpush.msra.mxu0 %v127
  %1644 = vmatpush.msra.mxu0 %v126
  %1645 = vmatpush.msra.mxu0 %v125
  %1646 = vmatpush.msra.mxu0 %v124
  %1647 = vmatpush.msra.mxu0 %v123
  %1648 = vmatpush.msra.mxu0 %v122
  %1649 = vmatpush.msra.mxu0 %v121
  %1650 = vmatpush.msra.mxu0 %v120
  %1651 = vmatpush.msra.mxu0 %v119
  %1652 = vmatpush.msra.mxu0 %v118
  %1653 = vmatpush.msra.mxu0 %v117
  %1654 = vmatpush.msra.mxu0 %v116
  %1655 = vmatpush.msra.mxu0 %v115
  %1656 = vmatmul.f32.gmra.mxu0 %v1540
  %v1657 = vpop.f32.mrf.mxu0
  %v1658 = vadd.f32 %v1635, %v1657
  %1659 = vmatmul.f32.gmra.mxu0 %v1546
  %v1660 = vpop.f32.mrf.mxu0
  %v1661 = vadd.f32 %v1638, %v1660
  %1662 = vdwg.mxu0
  %1663 = vmatpush.msra.mxu0 %v146
  %1664 = vmatpush.msra.mxu0 %v145
  %1665 = vmatpush.msra.mxu0 %v144
  %1666 = vmatpush.msra.mxu0 %v143
  %1667 = vmatpush.msra.mxu0 %v142
  %1668 = vmatpush.msra.mxu0 %v141
  %1669 = vmatpush.msra.mxu0 %v140
  %1670 = vmatpush.msra.mxu0 %v139
  %1671 = vmatpush.msra.mxu0 %v138
  %1672 = vmatpush.msra.mxu0 %v137
  %1673 = vmatpush.msra.mxu0 %v136
  %1674 = vmatpush.msra.mxu0 %v135
  %1675 = vmatpush.msra.mxu0 %v134
  %1676 = vmatpush.msra.mxu0 %v133
  %1677 = vmatpush.msra.mxu0 %v132
  %1678 = vmatpush.msra.mxu0 %v131
  %1679 = vmatmul.f32.gmra.mxu0 %v1541
  %v1680 = vpop.f32.mrf.mxu0
  %v1681 = vadd.f32 %v1658, %v1680
  %1682 = vmatmul.f32.gmra.mxu0 %v1547
  %v1683 = vpop.f32.mrf.mxu0
  %v1684 = vadd.f32 %v1661, %v1683
  %1685 = vdwg.mxu0
  %v1686 = vmul.f32 %v1681, 0.001953125
  %v1687 = vmul.f32 %v1684, 0.001953125
  %v1688 = vadd.f32 %v1686, 1e-05
  %v1689 = vadd.f32 %v1687, 1e-05
  %v1690 = vrsqrt.pop %v1688
  %v1691 = vmul.f32 %v1690, %v1688
  %v1692 = vmul.f32 %v1691, %v1690
  %v1693 = vmul.f32 0.5, %v1692
  %v1694 = vsub.f32 1.5, %v1693
  %v1695 = vmul.f32 %v1690, %v1694
  %vm1696 = vweird.f32 %v1688
  %vm1697 = vweird.f32 %v1690
  %vm1698 = vmor %vm1696, %vm1697
  %v1699 = vsel %vm1698, %v1690, %v1695
  %v1700 = vrsqrt.pop %v1689
  %v1701 = vmul.f32 %v1700, %v1689
  %v1702 = vmul.f32 %v1701, %v1700
  %v1703 = vmul.f32 0.5, %v1702
  %v1704 = vsub.f32 1.5, %v1703
  %v1705 = vmul.f32 %v1700, %v1704
  %vm1706 = vweird.f32 %v1689
  %vm1707 = vweird.f32 %v1700
  %vm1708 = vmor %vm1706, %vm1707
  %v1709 = vsel %vm1708, %v1700, %v1705
  %1711 = vset.pattern.permute.xlu0 0
  %1712 = vperm.xlu0 %1711, %v1699
  %v1713 = vpop.permute.xlu0 %1712
  %1716 = vset.pattern.permute.xlu0 0
  %1717 = vperm.xlu0 %1716, %v1709
  %v1718 = vpop.permute.xlu0 %1717
  %v1720 = vmul.f32 %v1524, %v1713
  %v1721 = vmul.f32 %v1525, %v1713
  %v1722 = vmul.f32 %v1526, %v1713
  %v1723 = vmul.f32 %v1527, %v1713
  %v1724 = vmul.f32 %v1528, %v1713
  %v1725 = vmul.f32 %v1529, %v1713
  %v1726 = vmul.f32 %v1530, %v1718
  %v1727 = vmul.f32 %v1531, %v1718
  %v1728 = vmul.f32 %v1532, %v1718
  %v1729 = vmul.f32 %v1533, %v1718
  %v1730 = vmul.f32 %v1534, %v1718
  %v1731 = vmul.f32 %v1535, %v1718
  %v1732 = vld [vmem:[%s9] sm:$0xff]
  %v1733 = vld [vmem:[%s9 + $0x8] sm:$0xff]
  %1735 = vset.pattern.permute.xlu0 0
  %1736 = vperm.xlu0 %1735, %v1732
  %v1737 = vpop.permute.xlu0 %1736
  %1740 = vset.pattern.permute.xlu0 0
  %1741 = vperm.xlu0 %1740, %v1733
  %v1742 = vpop.permute.xlu0 %1741
  %v1744 = vmul.f32 %v1720, %v1737
  %v1745 = vmul.f32 %v1721, %v1737
  %v1746 = vmul.f32 %v1722, %v1737
  %v1747 = vmul.f32 %v1723, %v1737
  %v1748 = vmul.f32 %v1724, %v1737
  %v1749 = vmul.f32 %v1725, %v1737
  %v1750 = vmul.f32 %v1726, %v1742
  %v1751 = vmul.f32 %v1727, %v1742
  %v1752 = vmul.f32 %v1728, %v1742
  %v1753 = vmul.f32 %v1729, %v1742
  %v1754 = vmul.f32 %v1730, %v1742
  %v1755 = vmul.f32 %v1731, %v1742
  %v1756 = vld [vmem:[%s10] sm:$0xff]
  %v1757 = vld [vmem:[%s10 + $0x8] sm:$0xff]
  %1759 = vset.pattern.permute.xlu0 0
  %1760 = vperm.xlu0 %1759, %v1756
  %v1761 = vpop.permute.xlu0 %1760
  %1764 = vset.pattern.permute.xlu0 0
  %1765 = vperm.xlu0 %1764, %v1757
  %v1766 = vpop.permute.xlu0 %1765
  %v1768 = vadd.f32 %v1744, %v1761
  %v1769 = vadd.f32 %v1745, %v1761
  %v1770 = vadd.f32 %v1746, %v1761
  %v1771 = vadd.f32 %v1747, %v1761
  %v1772 = vadd.f32 %v1748, %v1761
  %v1773 = vadd.f32 %v1749, %v1761
  %v1774 = vadd.f32 %v1750, %v1766
  %v1775 = vadd.f32 %v1751, %v1766
  %v1776 = vadd.f32 %v1752, %v1766
  %v1777 = vadd.f32 %v1753, %v1766
  %v1778 = vadd.f32 %v1754, %v1766
  %v1779 = vadd.f32 %v1755, %v1766
  %v1780 = vmax.f32 %v1768, 0.0
  %v1781 = vmax.f32 %v1769, 0.0
  %v1782 = vmax.f32 %v1770, 0.0
  %v1783 = vmax.f32 %v1771, 0.0
  %v1784 = vmax.f32 %v1772, 0.0
  %v1785 = vmax.f32 %v1773, 0.0
  %v1786 = vmax.f32 %v1774, 0.0
  %v1787 = vmax.f32 %v1775, 0.0
  %v1788 = vmax.f32 %v1776, 0.0
  %v1789 = vmax.f32 %v1777, 0.0
  %v1790 = vmax.f32 %v1778, 0.0
  %v1791 = vmax.f32 %v1779, 0.0
  %v1793 = vperm.slane %v50, 0
  %v1794 = vperm.slane %v50, 1
  %v1795 = vperm.slane %v50, 2
  %v1796 = vperm.slane %v50, 3
  %v1797 = vperm.slane %v50, 4
  %v1798 = vperm.slane %v50, 5
  %v1805 = vmul.f32 %v1780, %v1793
  %v1806 = vmul.f32 %v1781, %v1794
  %v1807 = vmul.f32 %v1782, %v1795
  %v1808 = vmul.f32 %v1783, %v1796
  %v1809 = vmul.f32 %v1784, %v1797
  %v1810 = vmul.f32 %v1785, %v1798
  %v1811 = vmul.f32 %v1786, %v1793
  %v1812 = vmul.f32 %v1787, %v1794
  %v1813 = vmul.f32 %v1788, %v1795
  %v1814 = vmul.f32 %v1789, %v1796
  %v1815 = vmul.f32 %v1790, %v1797
  %v1816 = vmul.f32 %v1791, %v1798
  %1829 = vrot.lane.b32.xlu0 %v1805, 19
  %v1830 = vpop.permute.xlu0 %1829
  %1831 = vrot.lane.b32.xlu0 %v1806, 19
  %v1832 = vpop.permute.xlu0 %1831
  %1833 = vrot.lane.b32.xlu0 %v1807, 19
  %v1834 = vpop.permute.xlu0 %1833
  %1835 = vrot.lane.b32.xlu0 %v1808, 19
  %v1836 = vpop.permute.xlu0 %1835
  %1837 = vrot.lane.b32.xlu0 %v1809, 19
  %v1838 = vpop.permute.xlu0 %1837
  %1839 = vrot.lane.b32.xlu0 %v1810, 19
  %v1840 = vpop.permute.xlu0 %1839
  %1841 = vrot.lane.b32.xlu0 %v1811, 19
  %v1842 = vpop.permute.xlu0 %1841
  %1843 = vrot.lane.b32.xlu0 %v1812, 19
  %v1844 = vpop.permute.xlu0 %1843
  %1845 = vrot.lane.b32.xlu0 %v1813, 19
  %v1846 = vpop.permute.xlu0 %1845
  %1847 = vrot.lane.b32.xlu0 %v1814, 19
  %v1848 = vpop.permute.xlu0 %1847
  %1849 = vrot.lane.b32.xlu0 %v1815, 19
  %v1850 = vpop.permute.xlu0 %1849
  %1851 = vrot.lane.b32.xlu0 %v1816, 19
  %v1852 = vpop.permute.xlu0 %1851
  %v1853 = vsel %vm171, %v1830, %v1832
  %v1854 = vsel %vm171, %v1832, %v1834
  %v1855 = vsel %vm171, %v1834, %v1836
  %v1856 = vsel %vm171, %v1836, %v1838
  %v1857 = vsel %vm171, %v1838, %v1840
  %v1858 = vsel %vm171, %v1842, %v1844
  %v1859 = vsel %vm171, %v1844, %v1846
  %v1860 = vsel %vm171, %v1846, %v1848
  %v1861 = vsel %vm171, %v1848, %v1850
  %v1862 = vsel %vm171, %v1850, %v1852
  %v1877 = vsel %vm171, 0.0, %v1830
  %v1878 = vsel %vm171, 0.0, %v1842
  %v1879 = vsel %vm171, %v1840, 0.0
  %v1880 = vsel %vm171, %v1852, 0.0
  %1885 = vrot.lane.b32.xlu0 %v1877, 127
  %v1886 = vpop.permute.xlu0 %1885
  %1887 = vrot.lane.b32.xlu0 %v1853, 127
  %v1888 = vpop.permute.xlu0 %1887
  %1889 = vrot.lane.b32.xlu0 %v1854, 127
  %v1890 = vpop.permute.xlu0 %1889
  %1891 = vrot.lane.b32.xlu0 %v1855, 127
  %v1892 = vpop.permute.xlu0 %1891
  %1893 = vrot.lane.b32.xlu0 %v1856, 127
  %v1894 = vpop.permute.xlu0 %1893
  %1895 = vrot.lane.b32.xlu0 %v1857, 127
  %v1896 = vpop.permute.xlu0 %1895
  %1897 = vrot.lane.b32.xlu0 %v1879, 127
  %v1898 = vpop.permute.xlu0 %1897
  %1899 = vrot.lane.b32.xlu0 %v1878, 127
  %v1900 = vpop.permute.xlu0 %1899
  %1901 = vrot.lane.b32.xlu0 %v1858, 127
  %v1902 = vpop.permute.xlu0 %1901
  %1903 = vrot.lane.b32.xlu0 %v1859, 127
  %v1904 = vpop.permute.xlu0 %1903
  %1905 = vrot.lane.b32.xlu0 %v1860, 127
  %v1906 = vpop.permute.xlu0 %1905
  %1907 = vrot.lane.b32.xlu0 %v1861, 127
  %v1908 = vpop.permute.xlu0 %1907
  %1909 = vrot.lane.b32.xlu0 %v1862, 127
  %v1910 = vpop.permute.xlu0 %1909
  %1911 = vrot.lane.b32.xlu0 %v1880, 127
  %v1912 = vpop.permute.xlu0 %1911
  %v1913 = vsel %vm202, %v1886, %v1888
  %v1914 = vsel %vm202, %v1888, %v1890
  %v1915 = vsel %vm202, %v1890, %v1892
  %v1916 = vsel %vm202, %v1892, %v1894
  %v1917 = vsel %vm202, %v1894, %v1896
  %v1918 = vsel %vm202, %v1896, %v1898
  %v1919 = vsel %vm202, %v1900, %v1902
  %v1920 = vsel %vm202, %v1902, %v1904
  %v1921 = vsel %vm202, %v1904, %v1906
  %v1922 = vsel %vm202, %v1906, %v1908
  %v1923 = vsel %vm202, %v1908, %v1910
  %v1924 = vsel %vm202, %v1910, %v1912
  %1937 = vrot.lane.b32.xlu0 %v1877, 126
  %v1938 = vpop.permute.xlu0 %1937
  %1939 = vrot.lane.b32.xlu0 %v1853, 126
  %v1940 = vpop.permute.xlu0 %1939
  %1941 = vrot.lane.b32.xlu0 %v1854, 126
  %v1942 = vpop.permute.xlu0 %1941
  %1943 = vrot.lane.b32.xlu0 %v1855, 126
  %v1944 = vpop.permute.xlu0 %1943
  %1945 = vrot.lane.b32.xlu0 %v1856, 126
  %v1946 = vpop.permute.xlu0 %1945
  %1947 = vrot.lane.b32.xlu0 %v1857, 126
  %v1948 = vpop.permute.xlu0 %1947
  %1949 = vrot.lane.b32.xlu0 %v1879, 126
  %v1950 = vpop.permute.xlu0 %1949
  %1951 = vrot.lane.b32.xlu0 %v1878, 126
  %v1952 = vpop.permute.xlu0 %1951
  %1953 = vrot.lane.b32.xlu0 %v1858, 126
  %v1954 = vpop.permute.xlu0 %1953
  %1955 = vrot.lane.b32.xlu0 %v1859, 126
  %v1956 = vpop.permute.xlu0 %1955
  %1957 = vrot.lane.b32.xlu0 %v1860, 126
  %v1958 = vpop.permute.xlu0 %1957
  %1959 = vrot.lane.b32.xlu0 %v1861, 126
  %v1960 = vpop.permute.xlu0 %1959
  %1961 = vrot.lane.b32.xlu0 %v1862, 126
  %v1962 = vpop.permute.xlu0 %1961
  %1963 = vrot.lane.b32.xlu0 %v1880, 126
  %v1964 = vpop.permute.xlu0 %1963
  %v1965 = vsel %vm229, %v1938, %v1940
  %v1966 = vsel %vm229, %v1940, %v1942
  %v1967 = vsel %vm229, %v1942, %v1944
  %v1968 = vsel %vm229, %v1944, %v1946
  %v1969 = vsel %vm229, %v1946, %v1948
  %v1970 = vsel %vm229, %v1948, %v1950
  %v1971 = vsel %vm229, %v1952, %v1954
  %v1972 = vsel %vm229, %v1954, %v1956
  %v1973 = vsel %vm229, %v1956, %v1958
  %v1974 = vsel %vm229, %v1958, %v1960
  %v1975 = vsel %vm229, %v1960, %v1962
  %v1976 = vsel %vm229, %v1962, %v1964
  %1989 = vrot.lane.b32.xlu0 %v1877, 110
  %v1990 = vpop.permute.xlu0 %1989
  %1991 = vrot.lane.b32.xlu0 %v1853, 110
  %v1992 = vpop.permute.xlu0 %1991
  %1993 = vrot.lane.b32.xlu0 %v1854, 110
  %v1994 = vpop.permute.xlu0 %1993
  %1995 = vrot.lane.b32.xlu0 %v1855, 110
  %v1996 = vpop.permute.xlu0 %1995
  %1997 = vrot.lane.b32.xlu0 %v1856, 110
  %v1998 = vpop.permute.xlu0 %1997
  %1999 = vrot.lane.b32.xlu0 %v1857, 110
  %v2000 = vpop.permute.xlu0 %1999
  %2001 = vrot.lane.b32.xlu0 %v1879, 110
  %v2002 = vpop.permute.xlu0 %2001
  %2003 = vrot.lane.b32.xlu0 %v1878, 110
  %v2004 = vpop.permute.xlu0 %2003
  %2005 = vrot.lane.b32.xlu0 %v1858, 110
  %v2006 = vpop.permute.xlu0 %2005
  %2007 = vrot.lane.b32.xlu0 %v1859, 110
  %v2008 = vpop.permute.xlu0 %2007
  %2009 = vrot.lane.b32.xlu0 %v1860, 110
  %v2010 = vpop.permute.xlu0 %2009
  %2011 = vrot.lane.b32.xlu0 %v1861, 110
  %v2012 = vpop.permute.xlu0 %2011
  %2013 = vrot.lane.b32.xlu0 %v1862, 110
  %v2014 = vpop.permute.xlu0 %2013
  %2015 = vrot.lane.b32.xlu0 %v1880, 110
  %v2016 = vpop.permute.xlu0 %2015
  %v2017 = vsel %vm256, %v1990, %v1992
  %v2018 = vsel %vm256, %v1992, %v1994
  %v2019 = vsel %vm256, %v1994, %v1996
  %v2020 = vsel %vm256, %v1996, %v1998
  %v2021 = vsel %vm256, %v1998, %v2000
  %v2022 = vsel %vm256, %v2000, %v2002
  %v2023 = vsel %vm256, %v2004, %v2006
  %v2024 = vsel %vm256, %v2006, %v2008
  %v2025 = vsel %vm256, %v2008, %v2010
  %v2026 = vsel %vm256, %v2010, %v2012
  %v2027 = vsel %vm256, %v2012, %v2014
  %v2028 = vsel %vm256, %v2014, %v2016
  %2041 = vrot.lane.b32.xlu0 %v1877, 109
  %v2042 = vpop.permute.xlu0 %2041
  %2043 = vrot.lane.b32.xlu0 %v1853, 109
  %v2044 = vpop.permute.xlu0 %2043
  %2045 = vrot.lane.b32.xlu0 %v1854, 109
  %v2046 = vpop.permute.xlu0 %2045
  %2047 = vrot.lane.b32.xlu0 %v1855, 109
  %v2048 = vpop.permute.xlu0 %2047
  %2049 = vrot.lane.b32.xlu0 %v1856, 109
  %v2050 = vpop.permute.xlu0 %2049
  %2051 = vrot.lane.b32.xlu0 %v1857, 109
  %v2052 = vpop.permute.xlu0 %2051
  %2053 = vrot.lane.b32.xlu0 %v1879, 109
  %v2054 = vpop.permute.xlu0 %2053
  %2055 = vrot.lane.b32.xlu0 %v1878, 109
  %v2056 = vpop.permute.xlu0 %2055
  %2057 = vrot.lane.b32.xlu0 %v1858, 109
  %v2058 = vpop.permute.xlu0 %2057
  %2059 = vrot.lane.b32.xlu0 %v1859, 109
  %v2060 = vpop.permute.xlu0 %2059
  %2061 = vrot.lane.b32.xlu0 %v1860, 109
  %v2062 = vpop.permute.xlu0 %2061
  %2063 = vrot.lane.b32.xlu0 %v1861, 109
  %v2064 = vpop.permute.xlu0 %2063
  %2065 = vrot.lane.b32.xlu0 %v1862, 109
  %v2066 = vpop.permute.xlu0 %2065
  %2067 = vrot.lane.b32.xlu0 %v1880, 109
  %v2068 = vpop.permute.xlu0 %2067
  %v2069 = vsel %vm283, %v2042, %v2044
  %v2070 = vsel %vm283, %v2044, %v2046
  %v2071 = vsel %vm283, %v2046, %v2048
  %v2072 = vsel %vm283, %v2048, %v2050
  %v2073 = vsel %vm283, %v2050, %v2052
  %v2074 = vsel %vm283, %v2052, %v2054
  %v2075 = vsel %vm283, %v2056, %v2058
  %v2076 = vsel %vm283, %v2058, %v2060
  %v2077 = vsel %vm283, %v2060, %v2062
  %v2078 = vsel %vm283, %v2062, %v2064
  %v2079 = vsel %vm283, %v2064, %v2066
  %v2080 = vsel %vm283, %v2066, %v2068
  %2093 = vrot.lane.b32.xlu0 %v1877, 108
  %v2094 = vpop.permute.xlu0 %2093
  %2095 = vrot.lane.b32.xlu0 %v1853, 108
  %v2096 = vpop.permute.xlu0 %2095
  %2097 = vrot.lane.b32.xlu0 %v1854, 108
  %v2098 = vpop.permute.xlu0 %2097
  %2099 = vrot.lane.b32.xlu0 %v1855, 108
  %v2100 = vpop.permute.xlu0 %2099
  %2101 = vrot.lane.b32.xlu0 %v1856, 108
  %v2102 = vpop.permute.xlu0 %2101
  %2103 = vrot.lane.b32.xlu0 %v1857, 108
  %v2104 = vpop.permute.xlu0 %2103
  %2105 = vrot.lane.b32.xlu0 %v1879, 108
  %v2106 = vpop.permute.xlu0 %2105
  %2107 = vrot.lane.b32.xlu0 %v1878, 108
  %v2108 = vpop.permute.xlu0 %2107
  %2109 = vrot.lane.b32.xlu0 %v1858, 108
  %v2110 = vpop.permute.xlu0 %2109
  %2111 = vrot.lane.b32.xlu0 %v1859, 108
  %v2112 = vpop.permute.xlu0 %2111
  %2113 = vrot.lane.b32.xlu0 %v1860, 108
  %v2114 = vpop.permute.xlu0 %2113
  %2115 = vrot.lane.b32.xlu0 %v1861, 108
  %v2116 = vpop.permute.xlu0 %2115
  %2117 = vrot.lane.b32.xlu0 %v1862, 108
  %v2118 = vpop.permute.xlu0 %2117
  %2119 = vrot.lane.b32.xlu0 %v1880, 108
  %v2120 = vpop.permute.xlu0 %2119
  %v2121 = vsel %vm310, %v2094, %v2096
  %v2122 = vsel %vm310, %v2096, %v2098
  %v2123 = vsel %vm310, %v2098, %v2100
  %v2124 = vsel %vm310, %v2100, %v2102
  %v2125 = vsel %vm310, %v2102, %v2104
  %v2126 = vsel %vm310, %v2104, %v2106
  %v2127 = vsel %vm310, %v2108, %v2110
  %v2128 = vsel %vm310, %v2110, %v2112
  %v2129 = vsel %vm310, %v2112, %v2114
  %v2130 = vsel %vm310, %v2114, %v2116
  %v2131 = vsel %vm310, %v2116, %v2118
  %v2132 = vsel %vm310, %v2118, %v2120
  %2145 = vrot.lane.b32.xlu0 %v1877, 92
  %v2146 = vpop.permute.xlu0 %2145
  %2147 = vrot.lane.b32.xlu0 %v1853, 92
  %v2148 = vpop.permute.xlu0 %2147
  %2149 = vrot.lane.b32.xlu0 %v1854, 92
  %v2150 = vpop.permute.xlu0 %2149
  %2151 = vrot.lane.b32.xlu0 %v1855, 92
  %v2152 = vpop.permute.xlu0 %2151
  %2153 = vrot.lane.b32.xlu0 %v1856, 92
  %v2154 = vpop.permute.xlu0 %2153
  %2155 = vrot.lane.b32.xlu0 %v1857, 92
  %v2156 = vpop.permute.xlu0 %2155
  %2157 = vrot.lane.b32.xlu0 %v1879, 92
  %v2158 = vpop.permute.xlu0 %2157
  %2159 = vrot.lane.b32.xlu0 %v1878, 92
  %v2160 = vpop.permute.xlu0 %2159
  %2161 = vrot.lane.b32.xlu0 %v1858, 92
  %v2162 = vpop.permute.xlu0 %2161
  %2163 = vrot.lane.b32.xlu0 %v1859, 92
  %v2164 = vpop.permute.xlu0 %2163
  %2165 = vrot.lane.b32.xlu0 %v1860, 92
  %v2166 = vpop.permute.xlu0 %2165
  %2167 = vrot.lane.b32.xlu0 %v1861, 92
  %v2168 = vpop.permute.xlu0 %2167
  %2169 = vrot.lane.b32.xlu0 %v1862, 92
  %v2170 = vpop.permute.xlu0 %2169
  %2171 = vrot.lane.b32.xlu0 %v1880, 92
  %v2172 = vpop.permute.xlu0 %2171
  %v2173 = vsel %vm337, %v2146, %v2148
  %v2174 = vsel %vm337, %v2148, %v2150
  %v2175 = vsel %vm337, %v2150, %v2152
  %v2176 = vsel %vm337, %v2152, %v2154
  %v2177 = vsel %vm337, %v2154, %v2156
  %v2178 = vsel %vm337, %v2156, %v2158
  %v2179 = vsel %vm337, %v2160, %v2162
  %v2180 = vsel %vm337, %v2162, %v2164
  %v2181 = vsel %vm337, %v2164, %v2166
  %v2182 = vsel %vm337, %v2166, %v2168
  %v2183 = vsel %vm337, %v2168, %v2170
  %v2184 = vsel %vm337, %v2170, %v2172
  %2197 = vrot.lane.b32.xlu0 %v1877, 91
  %v2198 = vpop.permute.xlu0 %2197
  %2199 = vrot.lane.b32.xlu0 %v1853, 91
  %v2200 = vpop.permute.xlu0 %2199
  %2201 = vrot.lane.b32.xlu0 %v1854, 91
  %v2202 = vpop.permute.xlu0 %2201
  %2203 = vrot.lane.b32.xlu0 %v1855, 91
  %v2204 = vpop.permute.xlu0 %2203
  %2205 = vrot.lane.b32.xlu0 %v1856, 91
  %v2206 = vpop.permute.xlu0 %2205
  %2207 = vrot.lane.b32.xlu0 %v1857, 91
  %v2208 = vpop.permute.xlu0 %2207
  %2209 = vrot.lane.b32.xlu0 %v1879, 91
  %v2210 = vpop.permute.xlu0 %2209
  %2211 = vrot.lane.b32.xlu0 %v1878, 91
  %v2212 = vpop.permute.xlu0 %2211
  %2213 = vrot.lane.b32.xlu0 %v1858, 91
  %v2214 = vpop.permute.xlu0 %2213
  %2215 = vrot.lane.b32.xlu0 %v1859, 91
  %v2216 = vpop.permute.xlu0 %2215
  %2217 = vrot.lane.b32.xlu0 %v1860, 91
  %v2218 = vpop.permute.xlu0 %2217
  %2219 = vrot.lane.b32.xlu0 %v1861, 91
  %v2220 = vpop.permute.xlu0 %2219
  %2221 = vrot.lane.b32.xlu0 %v1862, 91
  %v2222 = vpop.permute.xlu0 %2221
  %2223 = vrot.lane.b32.xlu0 %v1880, 91
  %v2224 = vpop.permute.xlu0 %2223
  %v2225 = vsel %vm364, %v2198, %v2200
  %v2226 = vsel %vm364, %v2200, %v2202
  %v2227 = vsel %vm364, %v2202, %v2204
  %v2228 = vsel %vm364, %v2204, %v2206
  %v2229 = vsel %vm364, %v2206, %v2208
  %v2230 = vsel %vm364, %v2208, %v2210
  %v2231 = vsel %vm364, %v2212, %v2214
  %v2232 = vsel %vm364, %v2214, %v2216
  %v2233 = vsel %vm364, %v2216, %v2218
  %v2234 = vsel %vm364, %v2218, %v2220
  %v2235 = vsel %vm364, %v2220, %v2222
  %v2236 = vsel %vm364, %v2222, %v2224
  %2249 = vrot.lane.b32.xlu0 %v1877, 90
  %v2250 = vpop.permute.xlu0 %2249
  %2251 = vrot.lane.b32.xlu0 %v1853, 90
  %v2252 = vpop.permute.xlu0 %2251
  %2253 = vrot.lane.b32.xlu0 %v1854, 90
  %v2254 = vpop.permute.xlu0 %2253
  %2255 = vrot.lane.b32.xlu0 %v1855, 90
  %v2256 = vpop.permute.xlu0 %2255
  %2257 = vrot.lane.b32.xlu0 %v1856, 90
  %v2258 = vpop.permute.xlu0 %2257
  %2259 = vrot.lane.b32.xlu0 %v1857, 90
  %v2260 = vpop.permute.xlu0 %2259
  %2261 = vrot.lane.b32.xlu0 %v1879, 90
  %v2262 = vpop.permute.xlu0 %2261
  %2263 = vrot.lane.b32.xlu0 %v1878, 90
  %v2264 = vpop.permute.xlu0 %2263
  %2265 = vrot.lane.b32.xlu0 %v1858, 90
  %v2266 = vpop.permute.xlu0 %2265
  %2267 = vrot.lane.b32.xlu0 %v1859, 90
  %v2268 = vpop.permute.xlu0 %2267
  %2269 = vrot.lane.b32.xlu0 %v1860, 90
  %v2270 = vpop.permute.xlu0 %2269
  %2271 = vrot.lane.b32.xlu0 %v1861, 90
  %v2272 = vpop.permute.xlu0 %2271
  %2273 = vrot.lane.b32.xlu0 %v1862, 90
  %v2274 = vpop.permute.xlu0 %2273
  %2275 = vrot.lane.b32.xlu0 %v1880, 90
  %v2276 = vpop.permute.xlu0 %2275
  %v2277 = vsel %vm391, %v2250, %v2252
  %v2278 = vsel %vm391, %v2252, %v2254
  %v2279 = vsel %vm391, %v2254, %v2256
  %v2280 = vsel %vm391, %v2256, %v2258
  %v2281 = vsel %vm391, %v2258, %v2260
  %v2282 = vsel %vm391, %v2260, %v2262
  %v2283 = vsel %vm391, %v2264, %v2266
  %v2284 = vsel %vm391, %v2266, %v2268
  %v2285 = vsel %vm391, %v2268, %v2270
  %v2286 = vsel %vm391, %v2270, %v2272
  %v2287 = vsel %vm391, %v2272, %v2274
  %v2288 = vsel %vm391, %v2274, %v2276
  %v2301 = vld [vmem:[%s5] sm:$0xff]
  %v2302 = vld [vmem:[%s5 + $0x8] sm:$0xff]
  %v2303 = vld [vmem:[%s5 + $0x10] sm:$0xff]
  %v2304 = vld [vmem:[%s5 + $0x18] sm:$0xff]
  %v2305 = vld [vmem:[%s5 + $0x20] sm:$0xff]
  %v2306 = vld [vmem:[%s5 + $0x28] sm:$0xff]
  %v2307 = vld [vmem:[%s5 + $0x30] sm:$0xff]
  %v2308 = vld [vmem:[%s5 + $0x38] sm:$0xff]
  %vm2309 = vcmask 130048
  %v2311 = vsel %vm2309, %v2302, 0
  %v2314 = vsel %vm2309, %v2304, 0
  %v2317 = vsel %vm2309, %v2306, 0
  %v2320 = vsel %vm2309, %v2308, 0
  %2322 = vmatpush.msra.mxu0 %v2231
  %2323 = vmatpush.msra.mxu0 %v2225
  %2324 = vmatpush.msra.mxu0 %v2179
  %2325 = vmatpush.msra.mxu0 %v2173
  %2326 = vmatpush.msra.mxu0 %v2127
  %2327 = vmatpush.msra.mxu0 %v2121
  %2328 = vmatpush.msra.mxu0 %v2075
  %2329 = vmatpush.msra.mxu0 %v2069
  %2330 = vmatpush.msra.mxu0 %v2023
  %2331 = vmatpush.msra.mxu0 %v2017
  %2332 = vmatpush.msra.mxu0 %v1971
  %2333 = vmatpush.msra.mxu0 %v1965
  %2334 = vmatpush.msra.mxu0 %v1919
  %2335 = vmatpush.msra.mxu0 %v1913
  %2336 = vmatpush.msra.mxu0 %v1878
  %2337 = vmatpush.msra.mxu0 %v1877
  %2338 = vmatmul.f32.gmra.mxu0 %v2301
  %v2339 = vpop.f32.mrf.mxu0
  %v2340 = vadd.f32 0.0, %v2339
  %2341 = vmatmul.f32.gmra.mxu0 %v2303
  %v2342 = vpop.f32.mrf.mxu0
  %v2343 = vadd.f32 0.0, %v2342
  %2344 = vmatmul.f32.gmra.mxu0 %v2305
  %v2345 = vpop.f32.mrf.mxu0
  %v2346 = vadd.f32 0.0, %v2345
  %2347 = vmatmul.f32.gmra.mxu0 %v2307
  %v2348 = vpop.f32.mrf.mxu0
  %v2349 = vadd.f32 0.0, %v2348
  %2350 = vdwg.mxu0
  %2351 = vmatpush.msra.mxu0 0.0
  %2352 = vmatpush.msra.mxu0 0.0
  %2353 = vmatpush.msra.mxu0 0.0
  %2354 = vmatpush.msra.mxu0 0.0
  %2355 = vmatpush.msra.mxu0 0.0
  %2356 = vmatpush.msra.mxu0 0.0
  %2357 = vmatpush.msra.mxu0 0.0
  %2358 = vmatpush.msra.mxu0 0.0
  %2359 = vmatpush.msra.mxu0 0.0
  %2360 = vmatpush.msra.mxu0 0.0
  %2361 = vmatpush.msra.mxu0 0.0
  %2362 = vmatpush.msra.mxu0 0.0
  %2363 = vmatpush.msra.mxu0 0.0
  %2364 = vmatpush.msra.mxu0 0.0
  %2365 = vmatpush.msra.mxu0 %v2283
  %2366 = vmatpush.msra.mxu0 %v2277
  %2367 = vmatmul.f32.gmra.mxu0 %v2311
  %v2368 = vpop.f32.mrf.mxu0
  %v2369 = vadd.f32 %v2340, %v2368
  %2370 = vmatmul.f32.gmra.mxu0 %v2314
  %v2371 = vpop.f32.mrf.mxu0
  %v2372 = vadd.f32 %v2343, %v2371
  %2373 = vmatmul.f32.gmra.mxu0 %v2317
  %v2374 = vpop.f32.mrf.mxu0
  %v2375 = vadd.f32 %v2346, %v2374
  %2376 = vmatmul.f32.gmra.mxu0 %v2320
  %v2377 = vpop.f32.mrf.mxu0
  %v2378 = vadd.f32 %v2349, %v2377
  %2379 = vdwg.mxu0
  %2380 = vmatpush.msra.mxu0 %v2232
  %2381 = vmatpush.msra.mxu0 %v2226
  %2382 = vmatpush.msra.mxu0 %v2180
  %2383 = vmatpush.msra.mxu0 %v2174
  %2384 = vmatpush.msra.mxu0 %v2128
  %2385 = vmatpush.msra.mxu0 %v2122
  %2386 = vmatpush.msra.mxu0 %v2076
  %2387 = vmatpush.msra.mxu0 %v2070
  %2388 = vmatpush.msra.mxu0 %v2024
  %2389 = vmatpush.msra.mxu0 %v2018
  %2390 = vmatpush.msra.mxu0 %v1972
  %2391 = vmatpush.msra.mxu0 %v1966
  %2392 = vmatpush.msra.mxu0 %v1920
  %2393 = vmatpush.msra.mxu0 %v1914
  %2394 = vmatpush.msra.mxu0 %v1858
  %2395 = vmatpush.msra.mxu0 %v1853
  %2396 = vmatmul.f32.gmra.mxu0 %v2301
  %v2397 = vpop.f32.mrf.mxu0
  %v2398 = vadd.f32 0.0, %v2397
  %2399 = vmatmul.f32.gmra.mxu0 %v2303
  %v2400 = vpop.f32.mrf.mxu0
  %v2401 = vadd.f32 0.0, %v2400
  %2402 = vmatmul.f32.gmra.mxu0 %v2305
  %v2403 = vpop.f32.mrf.mxu0
  %v2404 = vadd.f32 0.0, %v2403
  %2405 = vmatmul.f32.gmra.mxu0 %v2307
  %v2406 = vpop.f32.mrf.mxu0
  %v2407 = vadd.f32 0.0, %v2406
  %2408 = vdwg.mxu0
  %2409 = vmatpush.msra.mxu0 0.0
  %2410 = vmatpush.msra.mxu0 0.0
  %2411 = vmatpush.msra.mxu0 0.0
  %2412 = vmatpush.msra.mxu0 0.0
  %2413 = vmatpush.msra.mxu0 0.0
  %2414 = vmatpush.msra.mxu0 0.0
  %2415 = vmatpush.msra.mxu0 0.0
  %2416 = vmatpush.msra.mxu0 0.0
  %2417 = vmatpush.msra.mxu0 0.0
  %2418 = vmatpush.msra.mxu0 0.0
  %2419 = vmatpush.msra.mxu0 0.0
  %2420 = vmatpush.msra.mxu0 0.0
  %2421 = vmatpush.msra.mxu0 0.0
  %2422 = vmatpush.msra.mxu0 0.0
  %2423 = vmatpush.msra.mxu0 %v2284
  %2424 = vmatpush.msra.mxu0 %v2278
  %2425 = vmatmul.f32.gmra.mxu0 %v2311
  %v2426 = vpop.f32.mrf.mxu0
  %v2427 = vadd.f32 %v2398, %v2426
  %2428 = vmatmul.f32.gmra.mxu0 %v2314
  %v2429 = vpop.f32.mrf.mxu0
  %v2430 = vadd.f32 %v2401, %v2429
  %2431 = vmatmul.f32.gmra.mxu0 %v2317
  %v2432 = vpop.f32.mrf.mxu0
  %v2433 = vadd.f32 %v2404, %v2432
  %2434 = vmatmul.f32.gmra.mxu0 %v2320
  %v2435 = vpop.f32.mrf.mxu0
  %v2436 = vadd.f32 %v2407, %v2435
  %2437 = vdwg.mxu0
  %2438 = vmatpush.msra.mxu0 %v2233
  %2439 = vmatpush.msra.mxu0 %v2227
  %2440 = vmatpush.msra.mxu0 %v2181
  %2441 = vmatpush.msra.mxu0 %v2175
  %2442 = vmatpush.msra.mxu0 %v2129
  %2443 = vmatpush.msra.mxu0 %v2123
  %2444 = vmatpush.msra.mxu0 %v2077
  %2445 = vmatpush.msra.mxu0 %v2071
  %2446 = vmatpush.msra.mxu0 %v2025
  %2447 = vmatpush.msra.mxu0 %v2019
  %2448 = vmatpush.msra.mxu0 %v1973
  %2449 = vmatpush.msra.mxu0 %v1967
  %2450 = vmatpush.msra.mxu0 %v1921
  %2451 = vmatpush.msra.mxu0 %v1915
  %2452 = vmatpush.msra.mxu0 %v1859
  %2453 = vmatpush.msra.mxu0 %v1854
  %2454 = vmatmul.f32.gmra.mxu0 %v2301
  %v2455 = vpop.f32.mrf.mxu0
  %v2456 = vadd.f32 0.0, %v2455
  %2457 = vmatmul.f32.gmra.mxu0 %v2303
  %v2458 = vpop.f32.mrf.mxu0
  %v2459 = vadd.f32 0.0, %v2458
  %2460 = vmatmul.f32.gmra.mxu0 %v2305
  %v2461 = vpop.f32.mrf.mxu0
  %v2462 = vadd.f32 0.0, %v2461
  %2463 = vmatmul.f32.gmra.mxu0 %v2307
  %v2464 = vpop.f32.mrf.mxu0
  %v2465 = vadd.f32 0.0, %v2464
  %2466 = vdwg.mxu0
  %2467 = vmatpush.msra.mxu0 0.0
  %2468 = vmatpush.msra.mxu0 0.0
  %2469 = vmatpush.msra.mxu0 0.0
  %2470 = vmatpush.msra.mxu0 0.0
  %2471 = vmatpush.msra.mxu0 0.0
  %2472 = vmatpush.msra.mxu0 0.0
  %2473 = vmatpush.msra.mxu0 0.0
  %2474 = vmatpush.msra.mxu0 0.0
  %2475 = vmatpush.msra.mxu0 0.0
  %2476 = vmatpush.msra.mxu0 0.0
  %2477 = vmatpush.msra.mxu0 0.0
  %2478 = vmatpush.msra.mxu0 0.0
  %2479 = vmatpush.msra.mxu0 0.0
  %2480 = vmatpush.msra.mxu0 0.0
  %2481 = vmatpush.msra.mxu0 %v2285
  %2482 = vmatpush.msra.mxu0 %v2279
  %2483 = vmatmul.f32.gmra.mxu0 %v2311
  %v2484 = vpop.f32.mrf.mxu0
  %v2485 = vadd.f32 %v2456, %v2484
  %2486 = vmatmul.f32.gmra.mxu0 %v2314
  %v2487 = vpop.f32.mrf.mxu0
  %v2488 = vadd.f32 %v2459, %v2487
  %2489 = vmatmul.f32.gmra.mxu0 %v2317
  %v2490 = vpop.f32.mrf.mxu0
  %v2491 = vadd.f32 %v2462, %v2490
  %2492 = vmatmul.f32.gmra.mxu0 %v2320
  %v2493 = vpop.f32.mrf.mxu0
  %v2494 = vadd.f32 %v2465, %v2493
  %2495 = vdwg.mxu0
  %2496 = vmatpush.msra.mxu0 %v2234
  %2497 = vmatpush.msra.mxu0 %v2228
  %2498 = vmatpush.msra.mxu0 %v2182
  %2499 = vmatpush.msra.mxu0 %v2176
  %2500 = vmatpush.msra.mxu0 %v2130
  %2501 = vmatpush.msra.mxu0 %v2124
  %2502 = vmatpush.msra.mxu0 %v2078
  %2503 = vmatpush.msra.mxu0 %v2072
  %2504 = vmatpush.msra.mxu0 %v2026
  %2505 = vmatpush.msra.mxu0 %v2020
  %2506 = vmatpush.msra.mxu0 %v1974
  %2507 = vmatpush.msra.mxu0 %v1968
  %2508 = vmatpush.msra.mxu0 %v1922
  %2509 = vmatpush.msra.mxu0 %v1916
  %2510 = vmatpush.msra.mxu0 %v1860
  %2511 = vmatpush.msra.mxu0 %v1855
  %2512 = vmatmul.f32.gmra.mxu0 %v2301
  %v2513 = vpop.f32.mrf.mxu0
  %v2514 = vadd.f32 0.0, %v2513
  %2515 = vmatmul.f32.gmra.mxu0 %v2303
  %v2516 = vpop.f32.mrf.mxu0
  %v2517 = vadd.f32 0.0, %v2516
  %2518 = vmatmul.f32.gmra.mxu0 %v2305
  %v2519 = vpop.f32.mrf.mxu0
  %v2520 = vadd.f32 0.0, %v2519
  %2521 = vmatmul.f32.gmra.mxu0 %v2307
  %v2522 = vpop.f32.mrf.mxu0
  %v2523 = vadd.f32 0.0, %v2522
  %2524 = vdwg.mxu0
  %2525 = vmatpush.msra.mxu0 0.0
  %2526 = vmatpush.msra.mxu0 0.0
  %2527 = vmatpush.msra.mxu0 0.0
  %2528 = vmatpush.msra.mxu0 0.0
  %2529 = vmatpush.msra.mxu0 0.0
  %2530 = vmatpush.msra.mxu0 0.0
  %2531 = vmatpush.msra.mxu0 0.0
  %2532 = vmatpush.msra.mxu0 0.0
  %2533 = vmatpush.msra.mxu0 0.0
  %2534 = vmatpush.msra.mxu0 0.0
  %2535 = vmatpush.msra.mxu0 0.0
  %2536 = vmatpush.msra.mxu0 0.0
  %2537 = vmatpush.msra.mxu0 0.0
  %2538 = vmatpush.msra.mxu0 0.0
  %2539 = vmatpush.msra.mxu0 %v2286
  %2540 = vmatpush.msra.mxu0 %v2280
  %2541 = vmatmul.f32.gmra.mxu0 %v2311
  %v2542 = vpop.f32.mrf.mxu0
  %v2543 = vadd.f32 %v2514, %v2542
  %2544 = vmatmul.f32.gmra.mxu0 %v2314
  %v2545 = vpop.f32.mrf.mxu0
  %v2546 = vadd.f32 %v2517, %v2545
  %2547 = vmatmul.f32.gmra.mxu0 %v2317
  %v2548 = vpop.f32.mrf.mxu0
  %v2549 = vadd.f32 %v2520, %v2548
  %2550 = vmatmul.f32.gmra.mxu0 %v2320
  %v2551 = vpop.f32.mrf.mxu0
  %v2552 = vadd.f32 %v2523, %v2551
  %2553 = vdwg.mxu0
  %2554 = vmatpush.msra.mxu0 %v2235
  %2555 = vmatpush.msra.mxu0 %v2229
  %2556 = vmatpush.msra.mxu0 %v2183
  %2557 = vmatpush.msra.mxu0 %v2177
  %2558 = vmatpush.msra.mxu0 %v2131
  %2559 = vmatpush.msra.mxu0 %v2125
  %2560 = vmatpush.msra.mxu0 %v2079
  %2561 = vmatpush.msra.mxu0 %v2073
  %2562 = vmatpush.msra.mxu0 %v2027
  %2563 = vmatpush.msra.mxu0 %v2021
  %2564 = vmatpush.msra.mxu0 %v1975
  %2565 = vmatpush.msra.mxu0 %v1969
  %2566 = vmatpush.msra.mxu0 %v1923
  %2567 = vmatpush.msra.mxu0 %v1917
  %2568 = vmatpush.msra.mxu0 %v1861
  %2569 = vmatpush.msra.mxu0 %v1856
  %2570 = vmatmul.f32.gmra.mxu0 %v2301
  %v2571 = vpop.f32.mrf.mxu0
  %v2572 = vadd.f32 0.0, %v2571
  %2573 = vmatmul.f32.gmra.mxu0 %v2303
  %v2574 = vpop.f32.mrf.mxu0
  %v2575 = vadd.f32 0.0, %v2574
  %2576 = vmatmul.f32.gmra.mxu0 %v2305
  %v2577 = vpop.f32.mrf.mxu0
  %v2578 = vadd.f32 0.0, %v2577
  %2579 = vmatmul.f32.gmra.mxu0 %v2307
  %v2580 = vpop.f32.mrf.mxu0
  %v2581 = vadd.f32 0.0, %v2580
  %2582 = vdwg.mxu0
  %2583 = vmatpush.msra.mxu0 0.0
  %2584 = vmatpush.msra.mxu0 0.0
  %2585 = vmatpush.msra.mxu0 0.0
  %2586 = vmatpush.msra.mxu0 0.0
  %2587 = vmatpush.msra.mxu0 0.0
  %2588 = vmatpush.msra.mxu0 0.0
  %2589 = vmatpush.msra.mxu0 0.0
  %2590 = vmatpush.msra.mxu0 0.0
  %2591 = vmatpush.msra.mxu0 0.0
  %2592 = vmatpush.msra.mxu0 0.0
  %2593 = vmatpush.msra.mxu0 0.0
  %2594 = vmatpush.msra.mxu0 0.0
  %2595 = vmatpush.msra.mxu0 0.0
  %2596 = vmatpush.msra.mxu0 0.0
  %2597 = vmatpush.msra.mxu0 %v2287
  %2598 = vmatpush.msra.mxu0 %v2281
  %2599 = vmatmul.f32.gmra.mxu0 %v2311
  %v2600 = vpop.f32.mrf.mxu0
  %v2601 = vadd.f32 %v2572, %v2600
  %2602 = vmatmul.f32.gmra.mxu0 %v2314
  %v2603 = vpop.f32.mrf.mxu0
  %v2604 = vadd.f32 %v2575, %v2603
  %2605 = vmatmul.f32.gmra.mxu0 %v2317
  %v2606 = vpop.f32.mrf.mxu0
  %v2607 = vadd.f32 %v2578, %v2606
  %2608 = vmatmul.f32.gmra.mxu0 %v2320
  %v2609 = vpop.f32.mrf.mxu0
  %v2610 = vadd.f32 %v2581, %v2609
  %2611 = vdwg.mxu0
  %2612 = vmatpush.msra.mxu0 %v2236
  %2613 = vmatpush.msra.mxu0 %v2230
  %2614 = vmatpush.msra.mxu0 %v2184
  %2615 = vmatpush.msra.mxu0 %v2178
  %2616 = vmatpush.msra.mxu0 %v2132
  %2617 = vmatpush.msra.mxu0 %v2126
  %2618 = vmatpush.msra.mxu0 %v2080
  %2619 = vmatpush.msra.mxu0 %v2074
  %2620 = vmatpush.msra.mxu0 %v2028
  %2621 = vmatpush.msra.mxu0 %v2022
  %2622 = vmatpush.msra.mxu0 %v1976
  %2623 = vmatpush.msra.mxu0 %v1970
  %2624 = vmatpush.msra.mxu0 %v1924
  %2625 = vmatpush.msra.mxu0 %v1918
  %2626 = vmatpush.msra.mxu0 %v1862
  %2627 = vmatpush.msra.mxu0 %v1857
  %2628 = vmatmul.f32.gmra.mxu0 %v2301
  %v2629 = vpop.f32.mrf.mxu0
  %v2630 = vadd.f32 0.0, %v2629
  %2631 = vmatmul.f32.gmra.mxu0 %v2303
  %v2632 = vpop.f32.mrf.mxu0
  %v2633 = vadd.f32 0.0, %v2632
  %2634 = vmatmul.f32.gmra.mxu0 %v2305
  %v2635 = vpop.f32.mrf.mxu0
  %v2636 = vadd.f32 0.0, %v2635
  %2637 = vmatmul.f32.gmra.mxu0 %v2307
  %v2638 = vpop.f32.mrf.mxu0
  %v2639 = vadd.f32 0.0, %v2638
  %2640 = vdwg.mxu0
  %2641 = vmatpush.msra.mxu0 0.0
  %2642 = vmatpush.msra.mxu0 0.0
  %2643 = vmatpush.msra.mxu0 0.0
  %2644 = vmatpush.msra.mxu0 0.0
  %2645 = vmatpush.msra.mxu0 0.0
  %2646 = vmatpush.msra.mxu0 0.0
  %2647 = vmatpush.msra.mxu0 0.0
  %2648 = vmatpush.msra.mxu0 0.0
  %2649 = vmatpush.msra.mxu0 0.0
  %2650 = vmatpush.msra.mxu0 0.0
  %2651 = vmatpush.msra.mxu0 0.0
  %2652 = vmatpush.msra.mxu0 0.0
  %2653 = vmatpush.msra.mxu0 0.0
  %2654 = vmatpush.msra.mxu0 0.0
  %2655 = vmatpush.msra.mxu0 %v2288
  %2656 = vmatpush.msra.mxu0 %v2282
  %2657 = vmatmul.f32.gmra.mxu0 %v2311
  %v2658 = vpop.f32.mrf.mxu0
  %v2659 = vadd.f32 %v2630, %v2658
  %2660 = vmatmul.f32.gmra.mxu0 %v2314
  %v2661 = vpop.f32.mrf.mxu0
  %v2662 = vadd.f32 %v2633, %v2661
  %2663 = vmatmul.f32.gmra.mxu0 %v2317
  %v2664 = vpop.f32.mrf.mxu0
  %v2665 = vadd.f32 %v2636, %v2664
  %2666 = vmatmul.f32.gmra.mxu0 %v2320
  %v2667 = vpop.f32.mrf.mxu0
  %v2668 = vadd.f32 %v2639, %v2667
  %2669 = vdwg.mxu0
  %2670 = vmatpush.msra.mxu0 %v66
  %2671 = vmatpush.msra.mxu0 %v65
  %2672 = vmatpush.msra.mxu0 %v64
  %2673 = vmatpush.msra.mxu0 %v63
  %2674 = vmatpush.msra.mxu0 %v62
  %2675 = vmatpush.msra.mxu0 %v61
  %2676 = vmatpush.msra.mxu0 %v60
  %2677 = vmatpush.msra.mxu0 %v59
  %2678 = vmatpush.msra.mxu0 %v58
  %2679 = vmatpush.msra.mxu0 %v57
  %2680 = vmatpush.msra.mxu0 %v56
  %2681 = vmatpush.msra.mxu0 %v55
  %2682 = vmatpush.msra.mxu0 %v54
  %2683 = vmatpush.msra.mxu0 %v53
  %2684 = vmatpush.msra.mxu0 %v52
  %2685 = vmatpush.msra.mxu0 %v51
  %2686 = vmatmul.f32.gmra.mxu0 %v2369
  %v2687 = vpop.f32.mrf.mxu0
  %v2688 = vadd.f32 0.0, %v2687
  %2689 = vmatmul.f32.gmra.mxu0 %v2372
  %v2690 = vpop.f32.mrf.mxu0
  %v2691 = vadd.f32 0.0, %v2690
  %2692 = vmatmul.f32.gmra.mxu0 %v2375
  %v2693 = vpop.f32.mrf.mxu0
  %v2694 = vadd.f32 0.0, %v2693
  %2695 = vmatmul.f32.gmra.mxu0 %v2378
  %v2696 = vpop.f32.mrf.mxu0
  %v2697 = vadd.f32 0.0, %v2696
  %2698 = vdwg.mxu0
  %2699 = vmatpush.msra.mxu0 %v82
  %2700 = vmatpush.msra.mxu0 %v81
  %2701 = vmatpush.msra.mxu0 %v80
  %2702 = vmatpush.msra.mxu0 %v79
  %2703 = vmatpush.msra.mxu0 %v78
  %2704 = vmatpush.msra.mxu0 %v77
  %2705 = vmatpush.msra.mxu0 %v76
  %2706 = vmatpush.msra.mxu0 %v75
  %2707 = vmatpush.msra.mxu0 %v74
  %2708 = vmatpush.msra.mxu0 %v73
  %2709 = vmatpush.msra.mxu0 %v72
  %2710 = vmatpush.msra.mxu0 %v71
  %2711 = vmatpush.msra.mxu0 %v70
  %2712 = vmatpush.msra.mxu0 %v69
  %2713 = vmatpush.msra.mxu0 %v68
  %2714 = vmatpush.msra.mxu0 %v67
  %2715 = vmatmul.f32.gmra.mxu0 %v2427
  %v2716 = vpop.f32.mrf.mxu0
  %v2717 = vadd.f32 %v2688, %v2716
  %2718 = vmatmul.f32.gmra.mxu0 %v2430
  %v2719 = vpop.f32.mrf.mxu0
  %v2720 = vadd.f32 %v2691, %v2719
  %2721 = vmatmul.f32.gmra.mxu0 %v2433
  %v2722 = vpop.f32.mrf.mxu0
  %v2723 = vadd.f32 %v2694, %v2722
  %2724 = vmatmul.f32.gmra.mxu0 %v2436
  %v2725 = vpop.f32.mrf.mxu0
  %v2726 = vadd.f32 %v2697, %v2725
  %2727 = vdwg.mxu0
  %2728 = vmatpush.msra.mxu0 %v98
  %2729 = vmatpush.msra.mxu0 %v97
  %2730 = vmatpush.msra.mxu0 %v96
  %2731 = vmatpush.msra.mxu0 %v95
  %2732 = vmatpush.msra.mxu0 %v94
  %2733 = vmatpush.msra.mxu0 %v93
  %2734 = vmatpush.msra.mxu0 %v92
  %2735 = vmatpush.msra.mxu0 %v91
  %2736 = vmatpush.msra.mxu0 %v90
  %2737 = vmatpush.msra.mxu0 %v89
  %2738 = vmatpush.msra.mxu0 %v88
  %2739 = vmatpush.msra.mxu0 %v87
  %2740 = vmatpush.msra.mxu0 %v86
  %2741 = vmatpush.msra.mxu0 %v85
  %2742 = vmatpush.msra.mxu0 %v84
  %2743 = vmatpush.msra.mxu0 %v83
  %2744 = vmatmul.f32.gmra.mxu0 %v2485
  %v2745 = vpop.f32.mrf.mxu0
  %v2746 = vadd.f32 %v2717, %v2745
  %2747 = vmatmul.f32.gmra.mxu0 %v2488
  %v2748 = vpop.f32.mrf.mxu0
  %v2749 = vadd.f32 %v2720, %v2748
  %2750 = vmatmul.f32.gmra.mxu0 %v2491
  %v2751 = vpop.f32.mrf.mxu0
  %v2752 = vadd.f32 %v2723, %v2751
  %2753 = vmatmul.f32.gmra.mxu0 %v2494
  %v2754 = vpop.f32.mrf.mxu0
  %v2755 = vadd.f32 %v2726, %v2754
  %2756 = vdwg.mxu0
  %2757 = vmatpush.msra.mxu0 %v114
  %2758 = vmatpush.msra.mxu0 %v113
  %2759 = vmatpush.msra.mxu0 %v112
  %2760 = vmatpush.msra.mxu0 %v111
  %2761 = vmatpush.msra.mxu0 %v110
  %2762 = vmatpush.msra.mxu0 %v109
  %2763 = vmatpush.msra.mxu0 %v108
  %2764 = vmatpush.msra.mxu0 %v107
  %2765 = vmatpush.msra.mxu0 %v106
  %2766 = vmatpush.msra.mxu0 %v105
  %2767 = vmatpush.msra.mxu0 %v104
  %2768 = vmatpush.msra.mxu0 %v103
  %2769 = vmatpush.msra.mxu0 %v102
  %2770 = vmatpush.msra.mxu0 %v101
  %2771 = vmatpush.msra.mxu0 %v100
  %2772 = vmatpush.msra.mxu0 %v99
  %2773 = vmatmul.f32.gmra.mxu0 %v2543
  %v2774 = vpop.f32.mrf.mxu0
  %v2775 = vadd.f32 %v2746, %v2774
  %2776 = vmatmul.f32.gmra.mxu0 %v2546
  %v2777 = vpop.f32.mrf.mxu0
  %v2778 = vadd.f32 %v2749, %v2777
  %2779 = vmatmul.f32.gmra.mxu0 %v2549
  %v2780 = vpop.f32.mrf.mxu0
  %v2781 = vadd.f32 %v2752, %v2780
  %2782 = vmatmul.f32.gmra.mxu0 %v2552
  %v2783 = vpop.f32.mrf.mxu0
  %v2784 = vadd.f32 %v2755, %v2783
  %2785 = vdwg.mxu0
  %2786 = vmatpush.msra.mxu0 %v130
  %2787 = vmatpush.msra.mxu0 %v129
  %2788 = vmatpush.msra.mxu0 %v128
  %2789 = vmatpush.msra.mxu0 %v127
  %2790 = vmatpush.msra.mxu0 %v126
  %2791 = vmatpush.msra.mxu0 %v125
  %2792 = vmatpush.msra.mxu0 %v124
  %2793 = vmatpush.msra.mxu0 %v123
  %2794 = vmatpush.msra.mxu0 %v122
  %2795 = vmatpush.msra.mxu0 %v121
  %2796 = vmatpush.msra.mxu0 %v120
  %2797 = vmatpush.msra.mxu0 %v119
  %2798 = vmatpush.msra.mxu0 %v118
  %2799 = vmatpush.msra.mxu0 %v117
  %2800 = vmatpush.msra.mxu0 %v116
  %2801 = vmatpush.msra.mxu0 %v115
  %2802 = vmatmul.f32.gmra.mxu0 %v2601
  %v2803 = vpop.f32.mrf.mxu0
  %v2804 = vadd.f32 %v2775, %v2803
  %2805 = vmatmul.f32.gmra.mxu0 %v2604
  %v2806 = vpop.f32.mrf.mxu0
  %v2807 = vadd.f32 %v2778, %v2806
  %2808 = vmatmul.f32.gmra.mxu0 %v2607
  %v2809 = vpop.f32.mrf.mxu0
  %v2810 = vadd.f32 %v2781, %v2809
  %2811 = vmatmul.f32.gmra.mxu0 %v2610
  %v2812 = vpop.f32.mrf.mxu0
  %v2813 = vadd.f32 %v2784, %v2812
  %2814 = vdwg.mxu0
  %2815 = vmatpush.msra.mxu0 %v146
  %2816 = vmatpush.msra.mxu0 %v145
  %2817 = vmatpush.msra.mxu0 %v144
  %2818 = vmatpush.msra.mxu0 %v143
  %2819 = vmatpush.msra.mxu0 %v142
  %2820 = vmatpush.msra.mxu0 %v141
  %2821 = vmatpush.msra.mxu0 %v140
  %2822 = vmatpush.msra.mxu0 %v139
  %2823 = vmatpush.msra.mxu0 %v138
  %2824 = vmatpush.msra.mxu0 %v137
  %2825 = vmatpush.msra.mxu0 %v136
  %2826 = vmatpush.msra.mxu0 %v135
  %2827 = vmatpush.msra.mxu0 %v134
  %2828 = vmatpush.msra.mxu0 %v133
  %2829 = vmatpush.msra.mxu0 %v132
  %2830 = vmatpush.msra.mxu0 %v131
  %2831 = vmatmul.f32.gmra.mxu0 %v2659
  %v2832 = vpop.f32.mrf.mxu0
  %v2833 = vadd.f32 %v2804, %v2832
  %2834 = vmatmul.f32.gmra.mxu0 %v2662
  %v2835 = vpop.f32.mrf.mxu0
  %v2836 = vadd.f32 %v2807, %v2835
  %2837 = vmatmul.f32.gmra.mxu0 %v2665
  %v2838 = vpop.f32.mrf.mxu0
  %v2839 = vadd.f32 %v2810, %v2838
  %2840 = vmatmul.f32.gmra.mxu0 %v2668
  %v2841 = vpop.f32.mrf.mxu0
  %v2842 = vadd.f32 %v2813, %v2841
  %2843 = vdwg.mxu0
  %v2844 = vmul.f32 %v2833, 0.001953125
  %v2845 = vmul.f32 %v2836, 0.001953125
  %v2846 = vmul.f32 %v2839, 0.001953125
  %v2847 = vmul.f32 %v2842, 0.001953125
  %2849 = vset.pattern.permute.xlu0 0
  %2850 = vperm.xlu0 %2849, %v2844
  %v2851 = vpop.permute.xlu0 %2850
  %2854 = vset.pattern.permute.xlu0 0
  %2855 = vperm.xlu0 %2854, %v2845
  %v2856 = vpop.permute.xlu0 %2855
  %2859 = vset.pattern.permute.xlu0 0
  %2860 = vperm.xlu0 %2859, %v2846
  %v2861 = vpop.permute.xlu0 %2860
  %2864 = vset.pattern.permute.xlu0 0
  %2865 = vperm.xlu0 %2864, %v2847
  %v2866 = vpop.permute.xlu0 %2865
  %v2868 = vsub.f32 %v2369, %v2851
  %v2869 = vsub.f32 %v2427, %v2851
  %v2870 = vsub.f32 %v2485, %v2851
  %v2871 = vsub.f32 %v2543, %v2851
  %v2872 = vsub.f32 %v2601, %v2851
  %v2873 = vsub.f32 %v2659, %v2851
  %v2874 = vsub.f32 %v2372, %v2856
  %v2875 = vsub.f32 %v2430, %v2856
  %v2876 = vsub.f32 %v2488, %v2856
  %v2877 = vsub.f32 %v2546, %v2856
  %v2878 = vsub.f32 %v2604, %v2856
  %v2879 = vsub.f32 %v2662, %v2856
  %v2880 = vsub.f32 %v2375, %v2861
  %v2881 = vsub.f32 %v2433, %v2861
  %v2882 = vsub.f32 %v2491, %v2861
  %v2883 = vsub.f32 %v2549, %v2861
  %v2884 = vsub.f32 %v2607, %v2861
  %v2885 = vsub.f32 %v2665, %v2861
  %v2886 = vsub.f32 %v2378, %v2866
  %v2887 = vsub.f32 %v2436, %v2866
  %v2888 = vsub.f32 %v2494, %v2866
  %v2889 = vsub.f32 %v2552, %v2866
  %v2890 = vsub.f32 %v2610, %v2866
  %v2891 = vsub.f32 %v2668, %v2866
  %v2892 = vmul.f32 %v2868, %v2868
  %v2893 = vmul.f32 %v2869, %v2869
  %v2894 = vmul.f32 %v2870, %v2870
  %v2895 = vmul.f32 %v2871, %v2871
  %v2896 = vmul.f32 %v2872, %v2872
  %v2897 = vmul.f32 %v2873, %v2873
  %v2898 = vmul.f32 %v2874, %v2874
  %v2899 = vmul.f32 %v2875, %v2875
  %v2900 = vmul.f32 %v2876, %v2876
  %v2901 = vmul.f32 %v2877, %v2877
  %v2902 = vmul.f32 %v2878, %v2878
  %v2903 = vmul.f32 %v2879, %v2879
  %v2904 = vmul.f32 %v2880, %v2880
  %v2905 = vmul.f32 %v2881, %v2881
  %v2906 = vmul.f32 %v2882, %v2882
  %v2907 = vmul.f32 %v2883, %v2883
  %v2908 = vmul.f32 %v2884, %v2884
  %v2909 = vmul.f32 %v2885, %v2885
  %v2910 = vmul.f32 %v2886, %v2886
  %v2911 = vmul.f32 %v2887, %v2887
  %v2912 = vmul.f32 %v2888, %v2888
  %v2913 = vmul.f32 %v2889, %v2889
  %v2914 = vmul.f32 %v2890, %v2890
  %v2915 = vmul.f32 %v2891, %v2891
  %2916 = vmatpush.msra.mxu0 %v66
  %2917 = vmatpush.msra.mxu0 %v65
  %2918 = vmatpush.msra.mxu0 %v64
  %2919 = vmatpush.msra.mxu0 %v63
  %2920 = vmatpush.msra.mxu0 %v62
  %2921 = vmatpush.msra.mxu0 %v61
  %2922 = vmatpush.msra.mxu0 %v60
  %2923 = vmatpush.msra.mxu0 %v59
  %2924 = vmatpush.msra.mxu0 %v58
  %2925 = vmatpush.msra.mxu0 %v57
  %2926 = vmatpush.msra.mxu0 %v56
  %2927 = vmatpush.msra.mxu0 %v55
  %2928 = vmatpush.msra.mxu0 %v54
  %2929 = vmatpush.msra.mxu0 %v53
  %2930 = vmatpush.msra.mxu0 %v52
  %2931 = vmatpush.msra.mxu0 %v51
  %2932 = vmatmul.f32.gmra.mxu0 %v2892
  %v2933 = vpop.f32.mrf.mxu0
  %v2934 = vadd.f32 0.0, %v2933
  %2935 = vmatmul.f32.gmra.mxu0 %v2898
  %v2936 = vpop.f32.mrf.mxu0
  %v2937 = vadd.f32 0.0, %v2936
  %2938 = vmatmul.f32.gmra.mxu0 %v2904
  %v2939 = vpop.f32.mrf.mxu0
  %v2940 = vadd.f32 0.0, %v2939
  %2941 = vmatmul.f32.gmra.mxu0 %v2910
  %v2942 = vpop.f32.mrf.mxu0
  %v2943 = vadd.f32 0.0, %v2942
  %2944 = vdwg.mxu0
  %2945 = vmatpush.msra.mxu0 %v82
  %2946 = vmatpush.msra.mxu0 %v81
  %2947 = vmatpush.msra.mxu0 %v80
  %2948 = vmatpush.msra.mxu0 %v79
  %2949 = vmatpush.msra.mxu0 %v78
  %2950 = vmatpush.msra.mxu0 %v77
  %2951 = vmatpush.msra.mxu0 %v76
  %2952 = vmatpush.msra.mxu0 %v75
  %2953 = vmatpush.msra.mxu0 %v74
  %2954 = vmatpush.msra.mxu0 %v73
  %2955 = vmatpush.msra.mxu0 %v72
  %2956 = vmatpush.msra.mxu0 %v71
  %2957 = vmatpush.msra.mxu0 %v70
  %2958 = vmatpush.msra.mxu0 %v69
  %2959 = vmatpush.msra.mxu0 %v68
  %2960 = vmatpush.msra.mxu0 %v67
  %2961 = vmatmul.f32.gmra.mxu0 %v2893
  %v2962 = vpop.f32.mrf.mxu0
  %v2963 = vadd.f32 %v2934, %v2962
  %2964 = vmatmul.f32.gmra.mxu0 %v2899
  %v2965 = vpop.f32.mrf.mxu0
  %v2966 = vadd.f32 %v2937, %v2965
  %2967 = vmatmul.f32.gmra.mxu0 %v2905
  %v2968 = vpop.f32.mrf.mxu0
  %v2969 = vadd.f32 %v2940, %v2968
  %2970 = vmatmul.f32.gmra.mxu0 %v2911
  %v2971 = vpop.f32.mrf.mxu0
  %v2972 = vadd.f32 %v2943, %v2971
  %2973 = vdwg.mxu0
  %2974 = vmatpush.msra.mxu0 %v98
  %2975 = vmatpush.msra.mxu0 %v97
  %2976 = vmatpush.msra.mxu0 %v96
  %2977 = vmatpush.msra.mxu0 %v95
  %2978 = vmatpush.msra.mxu0 %v94
  %2979 = vmatpush.msra.mxu0 %v93
  %2980 = vmatpush.msra.mxu0 %v92
  %2981 = vmatpush.msra.mxu0 %v91
  %2982 = vmatpush.msra.mxu0 %v90
  %2983 = vmatpush.msra.mxu0 %v89
  %2984 = vmatpush.msra.mxu0 %v88
  %2985 = vmatpush.msra.mxu0 %v87
  %2986 = vmatpush.msra.mxu0 %v86
  %2987 = vmatpush.msra.mxu0 %v85
  %2988 = vmatpush.msra.mxu0 %v84
  %2989 = vmatpush.msra.mxu0 %v83
  %2990 = vmatmul.f32.gmra.mxu0 %v2894
  %v2991 = vpop.f32.mrf.mxu0
  %v2992 = vadd.f32 %v2963, %v2991
  %2993 = vmatmul.f32.gmra.mxu0 %v2900
  %v2994 = vpop.f32.mrf.mxu0
  %v2995 = vadd.f32 %v2966, %v2994
  %2996 = vmatmul.f32.gmra.mxu0 %v2906
  %v2997 = vpop.f32.mrf.mxu0
  %v2998 = vadd.f32 %v2969, %v2997
  %2999 = vmatmul.f32.gmra.mxu0 %v2912
  %v3000 = vpop.f32.mrf.mxu0
  %v3001 = vadd.f32 %v2972, %v3000
  %3002 = vdwg.mxu0
  %3003 = vmatpush.msra.mxu0 %v114
  %3004 = vmatpush.msra.mxu0 %v113
  %3005 = vmatpush.msra.mxu0 %v112
  %3006 = vmatpush.msra.mxu0 %v111
  %3007 = vmatpush.msra.mxu0 %v110
  %3008 = vmatpush.msra.mxu0 %v109
  %3009 = vmatpush.msra.mxu0 %v108
  %3010 = vmatpush.msra.mxu0 %v107
  %3011 = vmatpush.msra.mxu0 %v106
  %3012 = vmatpush.msra.mxu0 %v105
  %3013 = vmatpush.msra.mxu0 %v104
  %3014 = vmatpush.msra.mxu0 %v103
  %3015 = vmatpush.msra.mxu0 %v102
  %3016 = vmatpush.msra.mxu0 %v101
  %3017 = vmatpush.msra.mxu0 %v100
  %3018 = vmatpush.msra.mxu0 %v99
  %3019 = vmatmul.f32.gmra.mxu0 %v2895
  %v3020 = vpop.f32.mrf.mxu0
  %v3021 = vadd.f32 %v2992, %v3020
  %3022 = vmatmul.f32.gmra.mxu0 %v2901
  %v3023 = vpop.f32.mrf.mxu0
  %v3024 = vadd.f32 %v2995, %v3023
  %3025 = vmatmul.f32.gmra.mxu0 %v2907
  %v3026 = vpop.f32.mrf.mxu0
  %v3027 = vadd.f32 %v2998, %v3026
  %3028 = vmatmul.f32.gmra.mxu0 %v2913
  %v3029 = vpop.f32.mrf.mxu0
  %v3030 = vadd.f32 %v3001, %v3029
  %3031 = vdwg.mxu0
  %3032 = vmatpush.msra.mxu0 %v130
  %3033 = vmatpush.msra.mxu0 %v129
  %3034 = vmatpush.msra.mxu0 %v128
  %3035 = vmatpush.msra.mxu0 %v127
  %3036 = vmatpush.msra.mxu0 %v126
  %3037 = vmatpush.msra.mxu0 %v125
  %3038 = vmatpush.msra.mxu0 %v124
  %3039 = vmatpush.msra.mxu0 %v123
  %3040 = vmatpush.msra.mxu0 %v122
  %3041 = vmatpush.msra.mxu0 %v121
  %3042 = vmatpush.msra.mxu0 %v120
  %3043 = vmatpush.msra.mxu0 %v119
  %3044 = vmatpush.msra.mxu0 %v118
  %3045 = vmatpush.msra.mxu0 %v117
  %3046 = vmatpush.msra.mxu0 %v116
  %3047 = vmatpush.msra.mxu0 %v115
  %3048 = vmatmul.f32.gmra.mxu0 %v2896
  %v3049 = vpop.f32.mrf.mxu0
  %v3050 = vadd.f32 %v3021, %v3049
  %3051 = vmatmul.f32.gmra.mxu0 %v2902
  %v3052 = vpop.f32.mrf.mxu0
  %v3053 = vadd.f32 %v3024, %v3052
  %3054 = vmatmul.f32.gmra.mxu0 %v2908
  %v3055 = vpop.f32.mrf.mxu0
  %v3056 = vadd.f32 %v3027, %v3055
  %3057 = vmatmul.f32.gmra.mxu0 %v2914
  %v3058 = vpop.f32.mrf.mxu0
  %v3059 = vadd.f32 %v3030, %v3058
  %3060 = vdwg.mxu0
  %3061 = vmatpush.msra.mxu0 %v146
  %3062 = vmatpush.msra.mxu0 %v145
  %3063 = vmatpush.msra.mxu0 %v144
  %3064 = vmatpush.msra.mxu0 %v143
  %3065 = vmatpush.msra.mxu0 %v142
  %3066 = vmatpush.msra.mxu0 %v141
  %3067 = vmatpush.msra.mxu0 %v140
  %3068 = vmatpush.msra.mxu0 %v139
  %3069 = vmatpush.msra.mxu0 %v138
  %3070 = vmatpush.msra.mxu0 %v137
  %3071 = vmatpush.msra.mxu0 %v136
  %3072 = vmatpush.msra.mxu0 %v135
  %3073 = vmatpush.msra.mxu0 %v134
  %3074 = vmatpush.msra.mxu0 %v133
  %3075 = vmatpush.msra.mxu0 %v132
  %3076 = vmatpush.msra.mxu0 %v131
  %3077 = vmatmul.f32.gmra.mxu0 %v2897
  %v3078 = vpop.f32.mrf.mxu0
  %v3079 = vadd.f32 %v3050, %v3078
  %3080 = vmatmul.f32.gmra.mxu0 %v2903
  %v3081 = vpop.f32.mrf.mxu0
  %v3082 = vadd.f32 %v3053, %v3081
  %3083 = vmatmul.f32.gmra.mxu0 %v2909
  %v3084 = vpop.f32.mrf.mxu0
  %v3085 = vadd.f32 %v3056, %v3084
  %3086 = vmatmul.f32.gmra.mxu0 %v2915
  %v3087 = vpop.f32.mrf.mxu0
  %v3088 = vadd.f32 %v3059, %v3087
  %3089 = vdwg.mxu0
  %v3090 = vmul.f32 %v3079, 0.001953125
  %v3091 = vmul.f32 %v3082, 0.001953125
  %v3092 = vmul.f32 %v3085, 0.001953125
  %v3093 = vmul.f32 %v3088, 0.001953125
  %v3094 = vadd.f32 %v3090, 1e-05
  %v3095 = vadd.f32 %v3091, 1e-05
  %v3096 = vadd.f32 %v3092, 1e-05
  %v3097 = vadd.f32 %v3093, 1e-05
  %v3098 = vrsqrt.pop %v3094
  %v3099 = vmul.f32 %v3098, %v3094
  %v3100 = vmul.f32 %v3099, %v3098
  %v3101 = vmul.f32 0.5, %v3100
  %v3102 = vsub.f32 1.5, %v3101
  %v3103 = vmul.f32 %v3098, %v3102
  %vm3104 = vweird.f32 %v3094
  %vm3105 = vweird.f32 %v3098
  %vm3106 = vmor %vm3104, %vm3105
  %v3107 = vsel %vm3106, %v3098, %v3103
  %v3108 = vrsqrt.pop %v3095
  %v3109 = vmul.f32 %v3108, %v3095
  %v3110 = vmul.f32 %v3109, %v3108
  %v3111 = vmul.f32 0.5, %v3110
  %v3112 = vsub.f32 1.5, %v3111
  %v3113 = vmul.f32 %v3108, %v3112
  %vm3114 = vweird.f32 %v3095
  %vm3115 = vweird.f32 %v3108
  %vm3116 = vmor %vm3114, %vm3115
  %v3117 = vsel %vm3116, %v3108, %v3113
  %v3118 = vrsqrt.pop %v3096
  %v3119 = vmul.f32 %v3118, %v3096
  %v3120 = vmul.f32 %v3119, %v3118
  %v3121 = vmul.f32 0.5, %v3120
  %v3122 = vsub.f32 1.5, %v3121
  %v3123 = vmul.f32 %v3118, %v3122
  %vm3124 = vweird.f32 %v3096
  %vm3125 = vweird.f32 %v3118
  %vm3126 = vmor %vm3124, %vm3125
  %v3127 = vsel %vm3126, %v3118, %v3123
  %v3128 = vrsqrt.pop %v3097
  %v3129 = vmul.f32 %v3128, %v3097
  %v3130 = vmul.f32 %v3129, %v3128
  %v3131 = vmul.f32 0.5, %v3130
  %v3132 = vsub.f32 1.5, %v3131
  %v3133 = vmul.f32 %v3128, %v3132
  %vm3134 = vweird.f32 %v3097
  %vm3135 = vweird.f32 %v3128
  %vm3136 = vmor %vm3134, %vm3135
  %v3137 = vsel %vm3136, %v3128, %v3133
  %3139 = vset.pattern.permute.xlu0 0
  %3140 = vperm.xlu0 %3139, %v3107
  %v3141 = vpop.permute.xlu0 %3140
  %3144 = vset.pattern.permute.xlu0 0
  %3145 = vperm.xlu0 %3144, %v3117
  %v3146 = vpop.permute.xlu0 %3145
  %3149 = vset.pattern.permute.xlu0 0
  %3150 = vperm.xlu0 %3149, %v3127
  %v3151 = vpop.permute.xlu0 %3150
  %3154 = vset.pattern.permute.xlu0 0
  %3155 = vperm.xlu0 %3154, %v3137
  %v3156 = vpop.permute.xlu0 %3155
  %v3158 = vmul.f32 %v2868, %v3141
  %v3159 = vmul.f32 %v2869, %v3141
  %v3160 = vmul.f32 %v2870, %v3141
  %v3161 = vmul.f32 %v2871, %v3141
  %v3162 = vmul.f32 %v2872, %v3141
  %v3163 = vmul.f32 %v2873, %v3141
  %v3164 = vmul.f32 %v2874, %v3146
  %v3165 = vmul.f32 %v2875, %v3146
  %v3166 = vmul.f32 %v2876, %v3146
  %v3167 = vmul.f32 %v2877, %v3146
  %v3168 = vmul.f32 %v2878, %v3146
  %v3169 = vmul.f32 %v2879, %v3146
  %v3170 = vmul.f32 %v2880, %v3151
  %v3171 = vmul.f32 %v2881, %v3151
  %v3172 = vmul.f32 %v2882, %v3151
  %v3173 = vmul.f32 %v2883, %v3151
  %v3174 = vmul.f32 %v2884, %v3151
  %v3175 = vmul.f32 %v2885, %v3151
  %v3176 = vmul.f32 %v2886, %v3156
  %v3177 = vmul.f32 %v2887, %v3156
  %v3178 = vmul.f32 %v2888, %v3156
  %v3179 = vmul.f32 %v2889, %v3156
  %v3180 = vmul.f32 %v2890, %v3156
  %v3181 = vmul.f32 %v2891, %v3156
  %v3182 = vld [vmem:[%s11] sm:$0xff]
  %v3183 = vld [vmem:[%s11 + $0x8] sm:$0xff]
  %v3184 = vld [vmem:[%s11 + $0x10] sm:$0xff]
  %v3185 = vld [vmem:[%s11 + $0x18] sm:$0xff]
  %3187 = vset.pattern.permute.xlu0 0
  %3188 = vperm.xlu0 %3187, %v3182
  %v3189 = vpop.permute.xlu0 %3188
  %3192 = vset.pattern.permute.xlu0 0
  %3193 = vperm.xlu0 %3192, %v3183
  %v3194 = vpop.permute.xlu0 %3193
  %3197 = vset.pattern.permute.xlu0 0
  %3198 = vperm.xlu0 %3197, %v3184
  %v3199 = vpop.permute.xlu0 %3198
  %3202 = vset.pattern.permute.xlu0 0
  %3203 = vperm.xlu0 %3202, %v3185
  %v3204 = vpop.permute.xlu0 %3203
  %v3206 = vmul.f32 %v3158, %v3189
  %v3207 = vmul.f32 %v3159, %v3189
  %v3208 = vmul.f32 %v3160, %v3189
  %v3209 = vmul.f32 %v3161, %v3189
  %v3210 = vmul.f32 %v3162, %v3189
  %v3211 = vmul.f32 %v3163, %v3189
  %v3212 = vmul.f32 %v3164, %v3194
  %v3213 = vmul.f32 %v3165, %v3194
  %v3214 = vmul.f32 %v3166, %v3194
  %v3215 = vmul.f32 %v3167, %v3194
  %v3216 = vmul.f32 %v3168, %v3194
  %v3217 = vmul.f32 %v3169, %v3194
  %v3218 = vmul.f32 %v3170, %v3199
  %v3219 = vmul.f32 %v3171, %v3199
  %v3220 = vmul.f32 %v3172, %v3199
  %v3221 = vmul.f32 %v3173, %v3199
  %v3222 = vmul.f32 %v3174, %v3199
  %v3223 = vmul.f32 %v3175, %v3199
  %v3224 = vmul.f32 %v3176, %v3204
  %v3225 = vmul.f32 %v3177, %v3204
  %v3226 = vmul.f32 %v3178, %v3204
  %v3227 = vmul.f32 %v3179, %v3204
  %v3228 = vmul.f32 %v3180, %v3204
  %v3229 = vmul.f32 %v3181, %v3204
  %v3230 = vld [vmem:[%s12] sm:$0xff]
  %v3231 = vld [vmem:[%s12 + $0x8] sm:$0xff]
  %v3232 = vld [vmem:[%s12 + $0x10] sm:$0xff]
  %v3233 = vld [vmem:[%s12 + $0x18] sm:$0xff]
  %3235 = vset.pattern.permute.xlu0 0
  %3236 = vperm.xlu0 %3235, %v3230
  %v3237 = vpop.permute.xlu0 %3236
  %3240 = vset.pattern.permute.xlu0 0
  %3241 = vperm.xlu0 %3240, %v3231
  %v3242 = vpop.permute.xlu0 %3241
  %3245 = vset.pattern.permute.xlu0 0
  %3246 = vperm.xlu0 %3245, %v3232
  %v3247 = vpop.permute.xlu0 %3246
  %3250 = vset.pattern.permute.xlu0 0
  %3251 = vperm.xlu0 %3250, %v3233
  %v3252 = vpop.permute.xlu0 %3251
  %v3254 = vadd.f32 %v3206, %v3237
  %v3255 = vadd.f32 %v3207, %v3237
  %v3256 = vadd.f32 %v3208, %v3237
  %v3257 = vadd.f32 %v3209, %v3237
  %v3258 = vadd.f32 %v3210, %v3237
  %v3259 = vadd.f32 %v3211, %v3237
  %v3260 = vadd.f32 %v3212, %v3242
  %v3261 = vadd.f32 %v3213, %v3242
  %v3262 = vadd.f32 %v3214, %v3242
  %v3263 = vadd.f32 %v3215, %v3242
  %v3264 = vadd.f32 %v3216, %v3242
  %v3265 = vadd.f32 %v3217, %v3242
  %v3266 = vadd.f32 %v3218, %v3247
  %v3267 = vadd.f32 %v3219, %v3247
  %v3268 = vadd.f32 %v3220, %v3247
  %v3269 = vadd.f32 %v3221, %v3247
  %v3270 = vadd.f32 %v3222, %v3247
  %v3271 = vadd.f32 %v3223, %v3247
  %v3272 = vadd.f32 %v3224, %v3252
  %v3273 = vadd.f32 %v3225, %v3252
  %v3274 = vadd.f32 %v3226, %v3252
  %v3275 = vadd.f32 %v3227, %v3252
  %v3276 = vadd.f32 %v3228, %v3252
  %v3277 = vadd.f32 %v3229, %v3252
  %v3278 = vmax.f32 %v3254, 0.0
  %v3279 = vmax.f32 %v3255, 0.0
  %v3280 = vmax.f32 %v3256, 0.0
  %v3281 = vmax.f32 %v3257, 0.0
  %v3282 = vmax.f32 %v3258, 0.0
  %v3283 = vmax.f32 %v3259, 0.0
  %v3284 = vmax.f32 %v3260, 0.0
  %v3285 = vmax.f32 %v3261, 0.0
  %v3286 = vmax.f32 %v3262, 0.0
  %v3287 = vmax.f32 %v3263, 0.0
  %v3288 = vmax.f32 %v3264, 0.0
  %v3289 = vmax.f32 %v3265, 0.0
  %v3290 = vmax.f32 %v3266, 0.0
  %v3291 = vmax.f32 %v3267, 0.0
  %v3292 = vmax.f32 %v3268, 0.0
  %v3293 = vmax.f32 %v3269, 0.0
  %v3294 = vmax.f32 %v3270, 0.0
  %v3295 = vmax.f32 %v3271, 0.0
  %v3296 = vmax.f32 %v3272, 0.0
  %v3297 = vmax.f32 %v3273, 0.0
  %v3298 = vmax.f32 %v3274, 0.0
  %v3299 = vmax.f32 %v3275, 0.0
  %v3300 = vmax.f32 %v3276, 0.0
  %v3301 = vmax.f32 %v3277, 0.0
  %v3302 = vld [vmem:[%s6] sm:$0xff]
  %v3303 = vld [vmem:[%s6 + $0x8] sm:$0xff]
  %v3305 = vsel %vm1229, %v3302, 0
  %v3308 = vsel %vm1229, %v3303, 0
  %3310 = vmatpush.msra.mxu0 0.0
  %3311 = vmatpush.msra.mxu0 0.0
  %3312 = vmatpush.msra.mxu0 0.0
  %3313 = vmatpush.msra.mxu0 0.0
  %3314 = vmatpush.msra.mxu0 0.0
  %3315 = vmatpush.msra.mxu0 0.0
  %3316 = vmatpush.msra.mxu0 0.0
  %3317 = vmatpush.msra.mxu0 0.0
  %3318 = vmatpush.msra.mxu0 0.0
  %3319 = vmatpush.msra.mxu0 0.0
  %3320 = vmatpush.msra.mxu0 0.0
  %3321 = vmatpush.msra.mxu0 0.0
  %3322 = vmatpush.msra.mxu0 %v3296
  %3323 = vmatpush.msra.mxu0 %v3290
  %3324 = vmatpush.msra.mxu0 %v3284
  %3325 = vmatpush.msra.mxu0 %v3278
  %3326 = vmatmul.f32.gmra.mxu0 %v3305
  %v3327 = vpop.f32.mrf.mxu0
  %v3328 = vadd.f32 0.0, %v3327
  %3329 = vmatmul.f32.gmra.mxu0 %v3308
  %v3330 = vpop.f32.mrf.mxu0
  %v3331 = vadd.f32 0.0, %v3330
  %3332 = vdwg.mxu0
  %3333 = vmatpush.msra.mxu0 0.0
  %3334 = vmatpush.msra.mxu0 0.0
  %3335 = vmatpush.msra.mxu0 0.0
  %3336 = vmatpush.msra.mxu0 0.0
  %3337 = vmatpush.msra.mxu0 0.0
  %3338 = vmatpush.msra.mxu0 0.0
  %3339 = vmatpush.msra.mxu0 0.0
  %3340 = vmatpush.msra.mxu0 0.0
  %3341 = vmatpush.msra.mxu0 0.0
  %3342 = vmatpush.msra.mxu0 0.0
  %3343 = vmatpush.msra.mxu0 0.0
  %3344 = vmatpush.msra.mxu0 0.0
  %3345 = vmatpush.msra.mxu0 %v3297
  %3346 = vmatpush.msra.mxu0 %v3291
  %3347 = vmatpush.msra.mxu0 %v3285
  %3348 = vmatpush.msra.mxu0 %v3279
  %3349 = vmatmul.f32.gmra.mxu0 %v3305
  %v3350 = vpop.f32.mrf.mxu0
  %v3351 = vadd.f32 0.0, %v3350
  %3352 = vmatmul.f32.gmra.mxu0 %v3308
  %v3353 = vpop.f32.mrf.mxu0
  %v3354 = vadd.f32 0.0, %v3353
  %3355 = vdwg.mxu0
  %3356 = vmatpush.msra.mxu0 0.0
  %3357 = vmatpush.msra.mxu0 0.0
  %3358 = vmatpush.msra.mxu0 0.0
  %3359 = vmatpush.msra.mxu0 0.0
  %3360 = vmatpush.msra.mxu0 0.0
  %3361 = vmatpush.msra.mxu0 0.0
  %3362 = vmatpush.msra.mxu0 0.0
  %3363 = vmatpush.msra.mxu0 0.0
  %3364 = vmatpush.msra.mxu0 0.0
  %3365 = vmatpush.msra.mxu0 0.0
  %3366 = vmatpush.msra.mxu0 0.0
  %3367 = vmatpush.msra.mxu0 0.0
  %3368 = vmatpush.msra.mxu0 %v3298
  %3369 = vmatpush.msra.mxu0 %v3292
  %3370 = vmatpush.msra.mxu0 %v3286
  %3371 = vmatpush.msra.mxu0 %v3280
  %3372 = vmatmul.f32.gmra.mxu0 %v3305
  %v3373 = vpop.f32.mrf.mxu0
  %v3374 = vadd.f32 0.0, %v3373
  %3375 = vmatmul.f32.gmra.mxu0 %v3308
  %v3376 = vpop.f32.mrf.mxu0
  %v3377 = vadd.f32 0.0, %v3376
  %3378 = vdwg.mxu0
  %3379 = vmatpush.msra.mxu0 0.0
  %3380 = vmatpush.msra.mxu0 0.0
  %3381 = vmatpush.msra.mxu0 0.0
  %3382 = vmatpush.msra.mxu0 0.0
  %3383 = vmatpush.msra.mxu0 0.0
  %3384 = vmatpush.msra.mxu0 0.0
  %3385 = vmatpush.msra.mxu0 0.0
  %3386 = vmatpush.msra.mxu0 0.0
  %3387 = vmatpush.msra.mxu0 0.0
  %3388 = vmatpush.msra.mxu0 0.0
  %3389 = vmatpush.msra.mxu0 0.0
  %3390 = vmatpush.msra.mxu0 0.0
  %3391 = vmatpush.msra.mxu0 %v3299
  %3392 = vmatpush.msra.mxu0 %v3293
  %3393 = vmatpush.msra.mxu0 %v3287
  %3394 = vmatpush.msra.mxu0 %v3281
  %3395 = vmatmul.f32.gmra.mxu0 %v3305
  %v3396 = vpop.f32.mrf.mxu0
  %v3397 = vadd.f32 0.0, %v3396
  %3398 = vmatmul.f32.gmra.mxu0 %v3308
  %v3399 = vpop.f32.mrf.mxu0
  %v3400 = vadd.f32 0.0, %v3399
  %3401 = vdwg.mxu0
  %3402 = vmatpush.msra.mxu0 0.0
  %3403 = vmatpush.msra.mxu0 0.0
  %3404 = vmatpush.msra.mxu0 0.0
  %3405 = vmatpush.msra.mxu0 0.0
  %3406 = vmatpush.msra.mxu0 0.0
  %3407 = vmatpush.msra.mxu0 0.0
  %3408 = vmatpush.msra.mxu0 0.0
  %3409 = vmatpush.msra.mxu0 0.0
  %3410 = vmatpush.msra.mxu0 0.0
  %3411 = vmatpush.msra.mxu0 0.0
  %3412 = vmatpush.msra.mxu0 0.0
  %3413 = vmatpush.msra.mxu0 0.0
  %3414 = vmatpush.msra.mxu0 %v3300
  %3415 = vmatpush.msra.mxu0 %v3294
  %3416 = vmatpush.msra.mxu0 %v3288
  %3417 = vmatpush.msra.mxu0 %v3282
  %3418 = vmatmul.f32.gmra.mxu0 %v3305
  %v3419 = vpop.f32.mrf.mxu0
  %v3420 = vadd.f32 0.0, %v3419
  %3421 = vmatmul.f32.gmra.mxu0 %v3308
  %v3422 = vpop.f32.mrf.mxu0
  %v3423 = vadd.f32 0.0, %v3422
  %3424 = vdwg.mxu0
  %3425 = vmatpush.msra.mxu0 0.0
  %3426 = vmatpush.msra.mxu0 0.0
  %3427 = vmatpush.msra.mxu0 0.0
  %3428 = vmatpush.msra.mxu0 0.0
  %3429 = vmatpush.msra.mxu0 0.0
  %3430 = vmatpush.msra.mxu0 0.0
  %3431 = vmatpush.msra.mxu0 0.0
  %3432 = vmatpush.msra.mxu0 0.0
  %3433 = vmatpush.msra.mxu0 0.0
  %3434 = vmatpush.msra.mxu0 0.0
  %3435 = vmatpush.msra.mxu0 0.0
  %3436 = vmatpush.msra.mxu0 0.0
  %3437 = vmatpush.msra.mxu0 %v3301
  %3438 = vmatpush.msra.mxu0 %v3295
  %3439 = vmatpush.msra.mxu0 %v3289
  %3440 = vmatpush.msra.mxu0 %v3283
  %3441 = vmatmul.f32.gmra.mxu0 %v3305
  %v3442 = vpop.f32.mrf.mxu0
  %v3443 = vadd.f32 0.0, %v3442
  %3444 = vmatmul.f32.gmra.mxu0 %v3308
  %v3445 = vpop.f32.mrf.mxu0
  %v3446 = vadd.f32 0.0, %v3445
  %3447 = vdwg.mxu0
  %3448 = vmatpush.msra.mxu0 %v66
  %3449 = vmatpush.msra.mxu0 %v65
  %3450 = vmatpush.msra.mxu0 %v64
  %3451 = vmatpush.msra.mxu0 %v63
  %3452 = vmatpush.msra.mxu0 %v62
  %3453 = vmatpush.msra.mxu0 %v61
  %3454 = vmatpush.msra.mxu0 %v60
  %3455 = vmatpush.msra.mxu0 %v59
  %3456 = vmatpush.msra.mxu0 %v58
  %3457 = vmatpush.msra.mxu0 %v57
  %3458 = vmatpush.msra.mxu0 %v56
  %3459 = vmatpush.msra.mxu0 %v55
  %3460 = vmatpush.msra.mxu0 %v54
  %3461 = vmatpush.msra.mxu0 %v53
  %3462 = vmatpush.msra.mxu0 %v52
  %3463 = vmatpush.msra.mxu0 %v51
  %3464 = vmatmul.f32.gmra.mxu0 %v3328
  %v3465 = vpop.f32.mrf.mxu0
  %v3466 = vadd.f32 0.0, %v3465
  %3467 = vmatmul.f32.gmra.mxu0 %v3331
  %v3468 = vpop.f32.mrf.mxu0
  %v3469 = vadd.f32 0.0, %v3468
  %3470 = vdwg.mxu0
  %3471 = vmatpush.msra.mxu0 %v82
  %3472 = vmatpush.msra.mxu0 %v81
  %3473 = vmatpush.msra.mxu0 %v80
  %3474 = vmatpush.msra.mxu0 %v79
  %3475 = vmatpush.msra.mxu0 %v78
  %3476 = vmatpush.msra.mxu0 %v77
  %3477 = vmatpush.msra.mxu0 %v76
  %3478 = vmatpush.msra.mxu0 %v75
  %3479 = vmatpush.msra.mxu0 %v74
  %3480 = vmatpush.msra.mxu0 %v73
  %3481 = vmatpush.msra.mxu0 %v72
  %3482 = vmatpush.msra.mxu0 %v71
  %3483 = vmatpush.msra.mxu0 %v70
  %3484 = vmatpush.msra.mxu0 %v69
  %3485 = vmatpush.msra.mxu0 %v68
  %3486 = vmatpush.msra.mxu0 %v67
  %3487 = vmatmul.f32.gmra.mxu0 %v3351
  %v3488 = vpop.f32.mrf.mxu0
  %v3489 = vadd.f32 %v3466, %v3488
  %3490 = vmatmul.f32.gmra.mxu0 %v3354
  %v3491 = vpop.f32.mrf.mxu0
  %v3492 = vadd.f32 %v3469, %v3491
  %3493 = vdwg.mxu0
  %3494 = vmatpush.msra.mxu0 %v98
  %3495 = vmatpush.msra.mxu0 %v97
  %3496 = vmatpush.msra.mxu0 %v96
  %3497 = vmatpush.msra.mxu0 %v95
  %3498 = vmatpush.msra.mxu0 %v94
  %3499 = vmatpush.msra.mxu0 %v93
  %3500 = vmatpush.msra.mxu0 %v92
  %3501 = vmatpush.msra.mxu0 %v91
  %3502 = vmatpush.msra.mxu0 %v90
  %3503 = vmatpush.msra.mxu0 %v89
  %3504 = vmatpush.msra.mxu0 %v88
  %3505 = vmatpush.msra.mxu0 %v87
  %3506 = vmatpush.msra.mxu0 %v86
  %3507 = vmatpush.msra.mxu0 %v85
  %3508 = vmatpush.msra.mxu0 %v84
  %3509 = vmatpush.msra.mxu0 %v83
  %3510 = vmatmul.f32.gmra.mxu0 %v3374
  %v3511 = vpop.f32.mrf.mxu0
  %v3512 = vadd.f32 %v3489, %v3511
  %3513 = vmatmul.f32.gmra.mxu0 %v3377
  %v3514 = vpop.f32.mrf.mxu0
  %v3515 = vadd.f32 %v3492, %v3514
  %3516 = vdwg.mxu0
  %3517 = vmatpush.msra.mxu0 %v114
  %3518 = vmatpush.msra.mxu0 %v113
  %3519 = vmatpush.msra.mxu0 %v112
  %3520 = vmatpush.msra.mxu0 %v111
  %3521 = vmatpush.msra.mxu0 %v110
  %3522 = vmatpush.msra.mxu0 %v109
  %3523 = vmatpush.msra.mxu0 %v108
  %3524 = vmatpush.msra.mxu0 %v107
  %3525 = vmatpush.msra.mxu0 %v106
  %3526 = vmatpush.msra.mxu0 %v105
  %3527 = vmatpush.msra.mxu0 %v104
  %3528 = vmatpush.msra.mxu0 %v103
  %3529 = vmatpush.msra.mxu0 %v102
  %3530 = vmatpush.msra.mxu0 %v101
  %3531 = vmatpush.msra.mxu0 %v100
  %3532 = vmatpush.msra.mxu0 %v99
  %3533 = vmatmul.f32.gmra.mxu0 %v3397
  %v3534 = vpop.f32.mrf.mxu0
  %v3535 = vadd.f32 %v3512, %v3534
  %3536 = vmatmul.f32.gmra.mxu0 %v3400
  %v3537 = vpop.f32.mrf.mxu0
  %v3538 = vadd.f32 %v3515, %v3537
  %3539 = vdwg.mxu0
  %3540 = vmatpush.msra.mxu0 %v130
  %3541 = vmatpush.msra.mxu0 %v129
  %3542 = vmatpush.msra.mxu0 %v128
  %3543 = vmatpush.msra.mxu0 %v127
  %3544 = vmatpush.msra.mxu0 %v126
  %3545 = vmatpush.msra.mxu0 %v125
  %3546 = vmatpush.msra.mxu0 %v124
  %3547 = vmatpush.msra.mxu0 %v123
  %3548 = vmatpush.msra.mxu0 %v122
  %3549 = vmatpush.msra.mxu0 %v121
  %3550 = vmatpush.msra.mxu0 %v120
  %3551 = vmatpush.msra.mxu0 %v119
  %3552 = vmatpush.msra.mxu0 %v118
  %3553 = vmatpush.msra.mxu0 %v117
  %3554 = vmatpush.msra.mxu0 %v116
  %3555 = vmatpush.msra.mxu0 %v115
  %3556 = vmatmul.f32.gmra.mxu0 %v3420
  %v3557 = vpop.f32.mrf.mxu0
  %v3558 = vadd.f32 %v3535, %v3557
  %3559 = vmatmul.f32.gmra.mxu0 %v3423
  %v3560 = vpop.f32.mrf.mxu0
  %v3561 = vadd.f32 %v3538, %v3560
  %3562 = vdwg.mxu0
  %3563 = vmatpush.msra.mxu0 %v146
  %3564 = vmatpush.msra.mxu0 %v145
  %3565 = vmatpush.msra.mxu0 %v144
  %3566 = vmatpush.msra.mxu0 %v143
  %3567 = vmatpush.msra.mxu0 %v142
  %3568 = vmatpush.msra.mxu0 %v141
  %3569 = vmatpush.msra.mxu0 %v140
  %3570 = vmatpush.msra.mxu0 %v139
  %3571 = vmatpush.msra.mxu0 %v138
  %3572 = vmatpush.msra.mxu0 %v137
  %3573 = vmatpush.msra.mxu0 %v136
  %3574 = vmatpush.msra.mxu0 %v135
  %3575 = vmatpush.msra.mxu0 %v134
  %3576 = vmatpush.msra.mxu0 %v133
  %3577 = vmatpush.msra.mxu0 %v132
  %3578 = vmatpush.msra.mxu0 %v131
  %3579 = vmatmul.f32.gmra.mxu0 %v3443
  %v3580 = vpop.f32.mrf.mxu0
  %v3581 = vadd.f32 %v3558, %v3580
  %3582 = vmatmul.f32.gmra.mxu0 %v3446
  %v3583 = vpop.f32.mrf.mxu0
  %v3584 = vadd.f32 %v3561, %v3583
  %3585 = vdwg.mxu0
  %v3586 = vmul.f32 %v3581, 0.001953125
  %v3587 = vmul.f32 %v3584, 0.001953125
  %3589 = vset.pattern.permute.xlu0 0
  %3590 = vperm.xlu0 %3589, %v3586
  %v3591 = vpop.permute.xlu0 %3590
  %3594 = vset.pattern.permute.xlu0 0
  %3595 = vperm.xlu0 %3594, %v3587
  %v3596 = vpop.permute.xlu0 %3595
  %v3598 = vsub.f32 %v3328, %v3591
  %v3599 = vsub.f32 %v3351, %v3591
  %v3600 = vsub.f32 %v3374, %v3591
  %v3601 = vsub.f32 %v3397, %v3591
  %v3602 = vsub.f32 %v3420, %v3591
  %v3603 = vsub.f32 %v3443, %v3591
  %v3604 = vsub.f32 %v3331, %v3596
  %v3605 = vsub.f32 %v3354, %v3596
  %v3606 = vsub.f32 %v3377, %v3596
  %v3607 = vsub.f32 %v3400, %v3596
  %v3608 = vsub.f32 %v3423, %v3596
  %v3609 = vsub.f32 %v3446, %v3596
  %v3610 = vmul.f32 %v3598, %v3598
  %v3611 = vmul.f32 %v3599, %v3599
  %v3612 = vmul.f32 %v3600, %v3600
  %v3613 = vmul.f32 %v3601, %v3601
  %v3614 = vmul.f32 %v3602, %v3602
  %v3615 = vmul.f32 %v3603, %v3603
  %v3616 = vmul.f32 %v3604, %v3604
  %v3617 = vmul.f32 %v3605, %v3605
  %v3618 = vmul.f32 %v3606, %v3606
  %v3619 = vmul.f32 %v3607, %v3607
  %v3620 = vmul.f32 %v3608, %v3608
  %v3621 = vmul.f32 %v3609, %v3609
  %3622 = vmatpush.msra.mxu0 %v66
  %3623 = vmatpush.msra.mxu0 %v65
  %3624 = vmatpush.msra.mxu0 %v64
  %3625 = vmatpush.msra.mxu0 %v63
  %3626 = vmatpush.msra.mxu0 %v62
  %3627 = vmatpush.msra.mxu0 %v61
  %3628 = vmatpush.msra.mxu0 %v60
  %3629 = vmatpush.msra.mxu0 %v59
  %3630 = vmatpush.msra.mxu0 %v58
  %3631 = vmatpush.msra.mxu0 %v57
  %3632 = vmatpush.msra.mxu0 %v56
  %3633 = vmatpush.msra.mxu0 %v55
  %3634 = vmatpush.msra.mxu0 %v54
  %3635 = vmatpush.msra.mxu0 %v53
  %3636 = vmatpush.msra.mxu0 %v52
  %3637 = vmatpush.msra.mxu0 %v51
  %3638 = vmatmul.f32.gmra.mxu0 %v3610
  %v3639 = vpop.f32.mrf.mxu0
  %v3640 = vadd.f32 0.0, %v3639
  %3641 = vmatmul.f32.gmra.mxu0 %v3616
  %v3642 = vpop.f32.mrf.mxu0
  %v3643 = vadd.f32 0.0, %v3642
  %3644 = vdwg.mxu0
  %3645 = vmatpush.msra.mxu0 %v82
  %3646 = vmatpush.msra.mxu0 %v81
  %3647 = vmatpush.msra.mxu0 %v80
  %3648 = vmatpush.msra.mxu0 %v79
  %3649 = vmatpush.msra.mxu0 %v78
  %3650 = vmatpush.msra.mxu0 %v77
  %3651 = vmatpush.msra.mxu0 %v76
  %3652 = vmatpush.msra.mxu0 %v75
  %3653 = vmatpush.msra.mxu0 %v74
  %3654 = vmatpush.msra.mxu0 %v73
  %3655 = vmatpush.msra.mxu0 %v72
  %3656 = vmatpush.msra.mxu0 %v71
  %3657 = vmatpush.msra.mxu0 %v70
  %3658 = vmatpush.msra.mxu0 %v69
  %3659 = vmatpush.msra.mxu0 %v68
  %3660 = vmatpush.msra.mxu0 %v67
  %3661 = vmatmul.f32.gmra.mxu0 %v3611
  %v3662 = vpop.f32.mrf.mxu0
  %v3663 = vadd.f32 %v3640, %v3662
  %3664 = vmatmul.f32.gmra.mxu0 %v3617
  %v3665 = vpop.f32.mrf.mxu0
  %v3666 = vadd.f32 %v3643, %v3665
  %3667 = vdwg.mxu0
  %3668 = vmatpush.msra.mxu0 %v98
  %3669 = vmatpush.msra.mxu0 %v97
  %3670 = vmatpush.msra.mxu0 %v96
  %3671 = vmatpush.msra.mxu0 %v95
  %3672 = vmatpush.msra.mxu0 %v94
  %3673 = vmatpush.msra.mxu0 %v93
  %3674 = vmatpush.msra.mxu0 %v92
  %3675 = vmatpush.msra.mxu0 %v91
  %3676 = vmatpush.msra.mxu0 %v90
  %3677 = vmatpush.msra.mxu0 %v89
  %3678 = vmatpush.msra.mxu0 %v88
  %3679 = vmatpush.msra.mxu0 %v87
  %3680 = vmatpush.msra.mxu0 %v86
  %3681 = vmatpush.msra.mxu0 %v85
  %3682 = vmatpush.msra.mxu0 %v84
  %3683 = vmatpush.msra.mxu0 %v83
  %3684 = vmatmul.f32.gmra.mxu0 %v3612
  %v3685 = vpop.f32.mrf.mxu0
  %v3686 = vadd.f32 %v3663, %v3685
  %3687 = vmatmul.f32.gmra.mxu0 %v3618
  %v3688 = vpop.f32.mrf.mxu0
  %v3689 = vadd.f32 %v3666, %v3688
  %3690 = vdwg.mxu0
  %3691 = vmatpush.msra.mxu0 %v114
  %3692 = vmatpush.msra.mxu0 %v113
  %3693 = vmatpush.msra.mxu0 %v112
  %3694 = vmatpush.msra.mxu0 %v111
  %3695 = vmatpush.msra.mxu0 %v110
  %3696 = vmatpush.msra.mxu0 %v109
  %3697 = vmatpush.msra.mxu0 %v108
  %3698 = vmatpush.msra.mxu0 %v107
  %3699 = vmatpush.msra.mxu0 %v106
  %3700 = vmatpush.msra.mxu0 %v105
  %3701 = vmatpush.msra.mxu0 %v104
  %3702 = vmatpush.msra.mxu0 %v103
  %3703 = vmatpush.msra.mxu0 %v102
  %3704 = vmatpush.msra.mxu0 %v101
  %3705 = vmatpush.msra.mxu0 %v100
  %3706 = vmatpush.msra.mxu0 %v99
  %3707 = vmatmul.f32.gmra.mxu0 %v3613
  %v3708 = vpop.f32.mrf.mxu0
  %v3709 = vadd.f32 %v3686, %v3708
  %3710 = vmatmul.f32.gmra.mxu0 %v3619
  %v3711 = vpop.f32.mrf.mxu0
  %v3712 = vadd.f32 %v3689, %v3711
  %3713 = vdwg.mxu0
  %3714 = vmatpush.msra.mxu0 %v130
  %3715 = vmatpush.msra.mxu0 %v129
  %3716 = vmatpush.msra.mxu0 %v128
  %3717 = vmatpush.msra.mxu0 %v127
  %3718 = vmatpush.msra.mxu0 %v126
  %3719 = vmatpush.msra.mxu0 %v125
  %3720 = vmatpush.msra.mxu0 %v124
  %3721 = vmatpush.msra.mxu0 %v123
  %3722 = vmatpush.msra.mxu0 %v122
  %3723 = vmatpush.msra.mxu0 %v121
  %3724 = vmatpush.msra.mxu0 %v120
  %3725 = vmatpush.msra.mxu0 %v119
  %3726 = vmatpush.msra.mxu0 %v118
  %3727 = vmatpush.msra.mxu0 %v117
  %3728 = vmatpush.msra.mxu0 %v116
  %3729 = vmatpush.msra.mxu0 %v115
  %3730 = vmatmul.f32.gmra.mxu0 %v3614
  %v3731 = vpop.f32.mrf.mxu0
  %v3732 = vadd.f32 %v3709, %v3731
  %3733 = vmatmul.f32.gmra.mxu0 %v3620
  %v3734 = vpop.f32.mrf.mxu0
  %v3735 = vadd.f32 %v3712, %v3734
  %3736 = vdwg.mxu0
  %3737 = vmatpush.msra.mxu0 %v146
  %3738 = vmatpush.msra.mxu0 %v145
  %3739 = vmatpush.msra.mxu0 %v144
  %3740 = vmatpush.msra.mxu0 %v143
  %3741 = vmatpush.msra.mxu0 %v142
  %3742 = vmatpush.msra.mxu0 %v141
  %3743 = vmatpush.msra.mxu0 %v140
  %3744 = vmatpush.msra.mxu0 %v139
  %3745 = vmatpush.msra.mxu0 %v138
  %3746 = vmatpush.msra.mxu0 %v137
  %3747 = vmatpush.msra.mxu0 %v136
  %3748 = vmatpush.msra.mxu0 %v135
  %3749 = vmatpush.msra.mxu0 %v134
  %3750 = vmatpush.msra.mxu0 %v133
  %3751 = vmatpush.msra.mxu0 %v132
  %3752 = vmatpush.msra.mxu0 %v131
  %3753 = vmatmul.f32.gmra.mxu0 %v3615
  %v3754 = vpop.f32.mrf.mxu0
  %v3755 = vadd.f32 %v3732, %v3754
  %3756 = vmatmul.f32.gmra.mxu0 %v3621
  %v3757 = vpop.f32.mrf.mxu0
  %v3758 = vadd.f32 %v3735, %v3757
  %3759 = vdwg.mxu0
  %v3760 = vmul.f32 %v3755, 0.001953125
  %v3761 = vmul.f32 %v3758, 0.001953125
  %v3762 = vadd.f32 %v3760, 1e-05
  %v3763 = vadd.f32 %v3761, 1e-05
  %v3764 = vrsqrt.pop %v3762
  %v3765 = vmul.f32 %v3764, %v3762
  %v3766 = vmul.f32 %v3765, %v3764
  %v3767 = vmul.f32 0.5, %v3766
  %v3768 = vsub.f32 1.5, %v3767
  %v3769 = vmul.f32 %v3764, %v3768
  %vm3770 = vweird.f32 %v3762
  %vm3771 = vweird.f32 %v3764
  %vm3772 = vmor %vm3770, %vm3771
  %v3773 = vsel %vm3772, %v3764, %v3769
  %v3774 = vrsqrt.pop %v3763
  %v3775 = vmul.f32 %v3774, %v3763
  %v3776 = vmul.f32 %v3775, %v3774
  %v3777 = vmul.f32 0.5, %v3776
  %v3778 = vsub.f32 1.5, %v3777
  %v3779 = vmul.f32 %v3774, %v3778
  %vm3780 = vweird.f32 %v3763
  %vm3781 = vweird.f32 %v3774
  %vm3782 = vmor %vm3780, %vm3781
  %v3783 = vsel %vm3782, %v3774, %v3779
  %3785 = vset.pattern.permute.xlu0 0
  %3786 = vperm.xlu0 %3785, %v3773
  %v3787 = vpop.permute.xlu0 %3786
  %3790 = vset.pattern.permute.xlu0 0
  %3791 = vperm.xlu0 %3790, %v3783
  %v3792 = vpop.permute.xlu0 %3791
  %v3794 = vmul.f32 %v3598, %v3787
  %v3795 = vmul.f32 %v3599, %v3787
  %v3796 = vmul.f32 %v3600, %v3787
  %v3797 = vmul.f32 %v3601, %v3787
  %v3798 = vmul.f32 %v3602, %v3787
  %v3799 = vmul.f32 %v3603, %v3787
  %v3800 = vmul.f32 %v3604, %v3792
  %v3801 = vmul.f32 %v3605, %v3792
  %v3802 = vmul.f32 %v3606, %v3792
  %v3803 = vmul.f32 %v3607, %v3792
  %v3804 = vmul.f32 %v3608, %v3792
  %v3805 = vmul.f32 %v3609, %v3792
  %v3806 = vld [vmem:[%s13] sm:$0xff]
  %v3807 = vld [vmem:[%s13 + $0x8] sm:$0xff]
  %3809 = vset.pattern.permute.xlu0 0
  %3810 = vperm.xlu0 %3809, %v3806
  %v3811 = vpop.permute.xlu0 %3810
  %3814 = vset.pattern.permute.xlu0 0
  %3815 = vperm.xlu0 %3814, %v3807
  %v3816 = vpop.permute.xlu0 %3815
  %v3818 = vmul.f32 %v3794, %v3811
  %v3819 = vmul.f32 %v3795, %v3811
  %v3820 = vmul.f32 %v3796, %v3811
  %v3821 = vmul.f32 %v3797, %v3811
  %v3822 = vmul.f32 %v3798, %v3811
  %v3823 = vmul.f32 %v3799, %v3811
  %v3824 = vmul.f32 %v3800, %v3816
  %v3825 = vmul.f32 %v3801, %v3816
  %v3826 = vmul.f32 %v3802, %v3816
  %v3827 = vmul.f32 %v3803, %v3816
  %v3828 = vmul.f32 %v3804, %v3816
  %v3829 = vmul.f32 %v3805, %v3816
  %v3830 = vld [vmem:[%s14] sm:$0xff]
  %v3831 = vld [vmem:[%s14 + $0x8] sm:$0xff]
  %3833 = vset.pattern.permute.xlu0 0
  %3834 = vperm.xlu0 %3833, %v3830
  %v3835 = vpop.permute.xlu0 %3834
  %3838 = vset.pattern.permute.xlu0 0
  %3839 = vperm.xlu0 %3838, %v3831
  %v3840 = vpop.permute.xlu0 %3839
  %v3842 = vadd.f32 %v3818, %v3835
  %v3843 = vadd.f32 %v3819, %v3835
  %v3844 = vadd.f32 %v3820, %v3835
  %v3845 = vadd.f32 %v3821, %v3835
  %v3846 = vadd.f32 %v3822, %v3835
  %v3847 = vadd.f32 %v3823, %v3835
  %v3848 = vadd.f32 %v3824, %v3840
  %v3849 = vadd.f32 %v3825, %v3840
  %v3850 = vadd.f32 %v3826, %v3840
  %v3851 = vadd.f32 %v3827, %v3840
  %v3852 = vadd.f32 %v3828, %v3840
  %v3853 = vadd.f32 %v3829, %v3840
  %3854 = vst [vmem:[%s15] sm:$0xff] %v3842
  %3855 = vst [vmem:[%s15 + $0x8] sm:$0xff] %v3843
  %3856 = vst [vmem:[%s15 + $0x10] sm:$0xff] %v3844
  %3857 = vst [vmem:[%s15 + $0x18] sm:$0xff] %v3845
  %3858 = vst [vmem:[%s15 + $0x20] sm:$0xff] %v3846
  %3859 = vst [vmem:[%s15 + $0x28] sm:$0xff] %v3847
  %3860 = vst [vmem:[%s15 + $0x30] sm:$0xff] %v3848
  %3861 = vst [vmem:[%s15 + $0x38] sm:$0xff] %v3849
  %3862 = vst [vmem:[%s15 + $0x40] sm:$0xff] %v3850
  %3863 = vst [vmem:[%s15 + $0x48] sm:$0xff] %v3851
  %3864 = vst [vmem:[%s15 + $0x50] sm:$0xff] %v3852
  %3865 = vst [vmem:[%s15 + $0x58] sm:$0xff] %v3853
  // Predicated region
  $region62: #{mynet_forward.1} parent=0 // pred_check
    _
  $region63: #{mynet_forward.1} parent=0 // pred_check_branch
    %3867 = sbr.rel (0) target = $region65
  $region64: #{mynet_forward.1} parent=0 // pred_region
    _
  $region65: #{mynet_forward.1} parent=0 // pred_fallthru
    _
  // Predicated region
  $region66: #{mynet_forward.1} parent=0 // pred_check
    _
  $region67: #{mynet_forward.1} parent=0 // pred_check_branch
    %3869 = sbr.rel (0) target = $region69
  $region68: #{mynet_forward.1} parent=0 // pred_region
    _
  $region69: #{mynet_forward.1} parent=0 // pred_fallthru
    _

</llo_original>
